<compile_context>
chip_gen: v6e
topology: v6e:2x2x1
jax: 0.10.0
libtpu: 0.0.40
codegen_flags: <defaults>
</compile_context>

<pallas_src>
import functools

import numpy as np
import jax
import jax.numpy as jnp
from jax.experimental import pallas as pl
from jax.experimental.pallas import tpu as pltpu

NUM_CLASSES = 8
FEATURE_H = 6
FEATURE_W = 20
C_IN = 1280
C_OUT = NUM_CLASSES + 4
RATIO = 0.3


def _round_up(x, m):
    return (x + m - 1) // m * m


# ----------------------------- Pallas kernel ------------------------------- #
def densebox_loss_kernel(feat_ref, w_ref, b_ref, clst_ref, regt_ref, mask_ref,
                         cls_out_ref, reg_out_ref, *, wp, num_classes):
    """Per-image 3x3 conv + CE / squared-error partial sums.

    feat_ref : (1, R_pad, Cin)        bf16  zero-padded NHWC rows, row = py*wp+px
    w_ref    : (Cin, 9*Cout)          bf16  w[c, t*Cout + o] = conv_w[o, c, dy, dx]
    b_ref    : (1, Cout)              f32
    clst_ref : (1, M, num_classes)    f32   zeros on junk (x >= W) columns
    regt_ref : (1, M, 4)              f32   zeros on junk columns
    mask_ref : (M, 1)                 f32   1.0 valid / 0.0 junk column
    cls_out_ref, reg_out_ref : (1, 8, 128) f32  broadcast partial sums
    """
    m = clst_ref.shape[1]          # H * (W + 2): output rows incl. junk columns
    cout = b_ref.shape[1]

    # All 9 tap products with a single bf16 MXU matmul (f32 accumulation).
    p_all = jnp.dot(feat_ref[0], w_ref[...],
                    preferred_element_type=jnp.float32)       # (R_pad, 9*Cout)

    # 3x3 window = sum of 9 shifted tap slices (cheap f32 relayout adds).
    acc = jnp.zeros((m, cout), jnp.float32)
    for t in range(9):
        dy, dx = divmod(t, 3)
        shift = dy * wp + dx
        acc = acc + p_all[shift:shift + m, t * cout:(t + 1) * cout]
    out = acc + b_ref[...]                                     # (M, Cout)

    logits = out[:, :num_classes]                              # (M, num_classes)
    reg_pred = out[:, num_classes:]                            # (M, 4)

    # Cross-entropy with probability-style (dense float) targets.
    mx = jnp.max(logits, axis=-1, keepdims=True)
    lse = mx + jnp.log(jnp.sum(jnp.exp(logits - mx), axis=-1, keepdims=True))
    log_sm = logits - lse
    per_loc = -jnp.sum(clst_ref[0] * log_sm, axis=-1, keepdims=True)   # (M, 1)
    # Junk columns have all-zero targets -> contribute exactly 0.
    cls_sum = jnp.sum(per_loc, keepdims=True)                          # (1, 1)

    # Squared-error sum; junk columns masked out.
    diff = (reg_pred - regt_ref[0]) * mask_ref[...]                    # (M, 4)
    reg_sum = jnp.sum(diff * diff, keepdims=True)                      # (1, 1)

    cls_out_ref[0] = jnp.broadcast_to(cls_sum, (8, 128))
    reg_out_ref[0] = jnp.broadcast_to(reg_sum, (8, 128))


# ------------------------------ glue (host) -------------------------------- #
def make_targets(boxes, classes, n, h, w):
    """Replicates the PyTorch host-side target rasterization loop exactly."""
    ys, xs = np.meshgrid(np.arange(h, dtype=np.float32),
                         np.arange(w, dtype=np.float32), indexing="ij")
    centers = np.stack([xs, ys, xs, ys], axis=0) + 0.5     # (4, h, w)

    cls_target = np.zeros((n, NUM_CLASSES, h, w), np.float32)
    reg_target = np.zeros((n, 4, h, w), np.float32)
    for i in range(n):
        for box, cls in zip(boxes[i], classes[i]):
            box = np.asarray(box, np.float64) * np.array([w, h, w, h], np.float64)
            cx = (box[0] + box[2]) * 0.5
            cy = (box[1] + box[3]) * 0.5
            bw = box[2] - box[0]
            bh = box[3] - box[1]
            org_x = int(cx - float(RATIO * bw * 0.5) + 0.5)
            org_y = int(cy - float(RATIO * bh * 0.5) + 0.5)
            end_x = int(float(org_x) + float(RATIO * bw) + 0.5)
            end_y = int(float(org_y) + float(RATIO * bh) + 0.5)
            cls_target[i, :, org_y:end_y + 1, org_x:end_x + 1] = float(cls) + 1.0
            reg_target[i, :, org_y:end_y + 1, org_x:end_x + 1] = (
                centers[:, org_y:end_y + 1, org_x:end_x + 1]
                - np.asarray(box, np.float32)[:, None, None])
    return cls_target, reg_target


def densebox_forward(features_nchw, targets, conv_w, conv_b):
    n, c, h, w = features_nchw.shape
    hp, wp = h + 2, w + 2
    m_tile = h * wp                       # output rows incl. 2 junk columns/row
    r_pad = _round_up(hp * wp + 2, 8)     # >= m_tile + max tap shift (2*wp + 2)

    cls_t, reg_t = make_targets(targets["boxes"], targets["classes"], n, h, w)

    # Zero-padded NHWC feature rows (row = py*wp + px), bf16 for the MXU.
    x = jnp.transpose(features_nchw, (0, 2, 3, 1))          # (n, h, w, c)
    x = jnp.pad(x, ((0, 0), (1, 1), (1, 1), (0, 0)))        # (n, hp, wp, c)
    x = x.reshape(n, hp * wp, c)
    x = jnp.pad(x, ((0, 0), (0, r_pad - hp * wp), (0, 0)))  # (n, r_pad, c)
    feat = x.astype(jnp.bfloat16)

    # Conv weights: (Cout, Cin, 3, 3) -> (Cin, 9*Cout) with column t*Cout + o,
    # t = dy*3 + dx, matching the kernel's tap ordering.
    w_t = jnp.transpose(conv_w, (2, 3, 1, 0)).reshape(9, c, C_OUT)   # [t, c, o]
    w_all = jnp.transpose(w_t, (1, 0, 2)).reshape(c, 9 * C_OUT)      # [c, t*O+o]
    w_all = w_all.astype(jnp.bfloat16)
    b_mat = conv_b.reshape(1, C_OUT).astype(jnp.float32)

    # Targets on the (h, wp) grid with zeros in the 2 junk columns, flattened.
    cls_pad = np.zeros((n, h, wp, NUM_CLASSES), np.float32)
    reg_pad = np.zeros((n, h, wp, 4), np.float32)
    cls_pad[:, :, :w, :] = cls_t.transpose(0, 2, 3, 1)
    reg_pad[:, :, :w, :] = reg_t.transpose(0, 2, 3, 1)
    cls_k = jnp.asarray(cls_pad.reshape(n, m_tile, NUM_CLASSES))
    reg_k = jnp.asarray(reg_pad.reshape(n, m_tile, 4))

    mask = np.zeros((h, wp), np.float32)
    mask[:, :w] = 1.0
    mask = jnp.asarray(mask.reshape(m_tile, 1))

    kernel = functools.partial(densebox_loss_kernel, wp=wp,
                               num_classes=NUM_CLASSES)

    cls_parts, reg_parts = pl.pallas_call(
        kernel,
        grid=(n,),
        in_specs=[
            pl.BlockSpec((1, r_pad, c), lambda i: (i, 0, 0)),          # feat
            pl.BlockSpec((c, 9 * C_OUT), lambda i: (0, 0)),            # weights
            pl.BlockSpec((1, C_OUT), lambda i: (0, 0)),                # bias
            pl.BlockSpec((1, m_tile, NUM_CLASSES), lambda i: (i, 0, 0)),
            pl.BlockSpec((1, m_tile, 4), lambda i: (i, 0, 0)),
            pl.BlockSpec((m_tile, 1), lambda i: (0, 0)),               # mask
        ],
        out_specs=(
            pl.BlockSpec((1, 8, 128), lambda i: (i, 0, 0)),
            pl.BlockSpec((1, 8, 128), lambda i: (i, 0, 0)),
        ),
        out_shape=(
            jax.ShapeDtypeStruct((n, 8, 128), jnp.float32),
            jax.ShapeDtypeStruct((n, 8, 128), jnp.float32),
        ),
        compiler_params=pltpu.CompilerParams(
            dimension_semantics=("parallel",),
            vmem_limit_bytes=16 * 1024 * 1024,
        ),
    )(feat, w_all, b_mat, cls_k, reg_k, mask)

    m_valid = n * h * w
    cls_loss = jnp.sum(cls_parts[:, 0, 0]) / m_valid
    reg_loss = jnp.sum(reg_parts[:, 0, 0]) / (m_valid * 4)
    return {"cls": cls_loss, "reg": reg_loss}


# --------------------------- pure-JAX reference ----------------------------- #
def densebox_reference(features_nchw, targets, conv_w, conv_b):
    n, c, h, w = features_nchw.shape
    cls_t, reg_t = make_targets(targets["boxes"], targets["classes"], n, h, w)
    out = jax.lax.conv_general_dilated(
        features_nchw, conv_w, window_strides=(1, 1), padding="SAME",
        dimension_numbers=("NCHW", "OIHW", "NCHW"))
    out = out + conv_b[None, :, None, None]
    logits = out[:, :NUM_CLASSES]
    log_sm = jax.nn.log_softmax(logits, axis=1)
    cls = jnp.mean(jnp.sum(-jnp.asarray(cls_t) * log_sm, axis=1))
    reg = jnp.mean((out[:, NUM_CLASSES:] - jnp.asarray(reg_t)) ** 2)
    return {"cls": cls, "reg": reg}


if __name__ == "__main__":
    key = jax.random.PRNGKey(0)
    k_feat, k_w, k_b = jax.random.split(key, 3)

    n = 2
    # backbone output stand-in: (N, 1280, 6, 20)
    features = jax.random.normal(
        k_feat, (n, C_IN, FEATURE_H, FEATURE_W), jnp.float32)

    # Deterministic conv parameter init (PyTorch-style uniform fan-in bound).
    bound = 1.0 / np.sqrt(C_IN * 9)
    conv_w = jax.random.uniform(
        k_w, (C_OUT, C_IN, 3, 3), jnp.float32, -bound, bound)
    conv_b = jax.random.uniform(k_b, (C_OUT,), jnp.float32, -bound, bound)

    targets = {
        "boxes": [
            np.array([[0.10, 0.20, 0.45, 0.70],
                      [0.55, 0.10, 0.90, 0.60]], np.float32),
            np.array([[0.30, 0.30, 0.80, 0.85]], np.float32),
        ],
        "classes": [np.array([2.0, 5.0], np.float32),
                    np.array([0.0], np.float32)],
    }

    losses = densebox_forward(features, targets, conv_w, conv_b)
    losses = jax.block_until_ready(losses)

    ref = densebox_reference(features, targets, conv_w, conv_b)
    np.testing.assert_allclose(np.asarray(losses["cls"]),
                               np.asarray(ref["cls"]), rtol=5e-2, atol=1e-3)
    np.testing.assert_allclose(np.asarray(losses["reg"]),
                               np.asarray(ref["reg"]), rtol=5e-2, atol=1e-3)

    print("KERNEL_OK")
</pallas_src>

<mosaic_0001>
module attributes {stable_mosaic.version = 11 : i64} {
  func.func @densebox_loss_kernel(%arg0: i32, %arg1: memref<1x184x1280xbf16, #tpu.memory_space<vmem>>, %arg2: memref<1280x108xbf16, #tpu.memory_space<vmem>>, %arg3: memref<1x12xf32, #tpu.memory_space<vmem>>, %arg4: memref<1x132x8xf32, #tpu.memory_space<vmem>>, %arg5: memref<1x132x4xf32, #tpu.memory_space<vmem>>, %arg6: memref<132x1xf32, #tpu.memory_space<vmem>>, %arg7: memref<1x8x128xf32, #tpu.memory_space<vmem>>, %arg8: memref<1x8x128xf32, #tpu.memory_space<vmem>>) attributes {dimension_semantics = [#tpu.dimension_semantics<parallel>], iteration_bounds = array<i64: 2>, scalar_prefetch = 0 : i64, scratch_operands = 0 : i64, tpu.core_type = #tpu.core_type<tc>, window_params = [{transform_indices = @transform_0, window_bounds = array<i64: 1, 184, 1280>}, {pipeline_mode = #tpu.pipeline_mode<synchronous>, transform_indices = @transform_1, window_bounds = array<i64: 1280, 108>}, {pipeline_mode = #tpu.pipeline_mode<synchronous>, transform_indices = @transform_2, window_bounds = array<i64: 1, 12>}, {transform_indices = @transform_3, window_bounds = array<i64: 1, 132, 8>}, {transform_indices = @transform_4, window_bounds = array<i64: 1, 132, 4>}, {pipeline_mode = #tpu.pipeline_mode<synchronous>, transform_indices = @transform_5, window_bounds = array<i64: 132, 1>}, {transform_indices = @transform_6, window_bounds = array<i64: 1, 8, 128>}, {transform_indices = @transform_7, window_bounds = array<i64: 1, 8, 128>}]} {
    %c0 = arith.constant 0 : index
    %c0_0 = arith.constant 0 : index
    %c0_1 = arith.constant 0 : index
    %0 = vector.load %arg1[%c0, %c0_0, %c0_1] : memref<1x184x1280xbf16, #tpu.memory_space<vmem>>, vector<1x184x1280xbf16>
    %1 = vector.shape_cast %0 : vector<1x184x1280xbf16> to vector<184x1280xbf16>
    %c0_2 = arith.constant 0 : index
    %c0_3 = arith.constant 0 : index
    %2 = vector.load %arg2[%c0_2, %c0_3] : memref<1280x108xbf16, #tpu.memory_space<vmem>>, vector<1280x108xbf16>
    %cst = arith.constant dense<0.000000e+00> : vector<184x108xf32>
    %3 = tpu.matmul %1, %2, %cst {dimension_numbers = #tpu.dot_dimension_numbers<[1], [0], [0], [1], [0, 0, 1, 1], [], []>} : vector<184x1280xbf16>, vector<1280x108xbf16>, vector<184x108xf32> -> vector<184x108xf32>
    %cst_4 = arith.constant 0.000000e+00 : f32
    %4 = vector.broadcast %cst_4 : f32 to vector<132x12xf32>
    %5 = vector.extract_strided_slice %3 {offsets = [0, 0], sizes = [132, 12], strides = [1, 1]} : vector<184x108xf32> to vector<132x12xf32>
    %6 = arith.addf %4, %5 : vector<132x12xf32>
    %7 = vector.extract_strided_slice %3 {offsets = [1, 12], sizes = [132, 12], strides = [1, 1]} : vector<184x108xf32> to vector<132x12xf32>
    %8 = arith.addf %6, %7 : vector<132x12xf32>
    %9 = vector.extract_strided_slice %3 {offsets = [2, 24], sizes = [132, 12], strides = [1, 1]} : vector<184x108xf32> to vector<132x12xf32>
    %10 = arith.addf %8, %9 : vector<132x12xf32>
    %11 = vector.extract_strided_slice %3 {offsets = [22, 36], sizes = [132, 12], strides = [1, 1]} : vector<184x108xf32> to vector<132x12xf32>
    %12 = arith.addf %10, %11 : vector<132x12xf32>
    %13 = vector.extract_strided_slice %3 {offsets = [23, 48], sizes = [132, 12], strides = [1, 1]} : vector<184x108xf32> to vector<132x12xf32>
    %14 = arith.addf %12, %13 : vector<132x12xf32>
    %15 = vector.extract_strided_slice %3 {offsets = [24, 60], sizes = [132, 12], strides = [1, 1]} : vector<184x108xf32> to vector<132x12xf32>
    %16 = arith.addf %14, %15 : vector<132x12xf32>
    %17 = vector.extract_strided_slice %3 {offsets = [44, 72], sizes = [132, 12], strides = [1, 1]} : vector<184x108xf32> to vector<132x12xf32>
    %18 = arith.addf %16, %17 : vector<132x12xf32>
    %19 = vector.extract_strided_slice %3 {offsets = [45, 84], sizes = [132, 12], strides = [1, 1]} : vector<184x108xf32> to vector<132x12xf32>
    %20 = arith.addf %18, %19 : vector<132x12xf32>
    %21 = vector.extract_strided_slice %3 {offsets = [46, 96], sizes = [132, 12], strides = [1, 1]} : vector<184x108xf32> to vector<132x12xf32>
    %22 = arith.addf %20, %21 : vector<132x12xf32>
    %c0_5 = arith.constant 0 : index
    %c0_6 = arith.constant 0 : index
    %23 = vector.load %arg3[%c0_5, %c0_6] : memref<1x12xf32, #tpu.memory_space<vmem>>, vector<1x12xf32>
    %24 = vector.broadcast %23 : vector<1x12xf32> to vector<132x12xf32>
    %25 = arith.addf %22, %24 : vector<132x12xf32>
    %26 = vector.extract_strided_slice %25 {offsets = [0, 0], sizes = [132, 8], strides = [1, 1]} : vector<132x12xf32> to vector<132x8xf32>
    %27 = vector.extract_strided_slice %25 {offsets = [0, 8], sizes = [132, 4], strides = [1, 1]} : vector<132x12xf32> to vector<132x4xf32>
    %cst_7 = arith.constant dense<0xFF800000> : vector<132xf32>
    %28 = vector.multi_reduction <maximumf>, %26, %cst_7 [1] : vector<132x8xf32> to vector<132xf32>
    %29 = vector.shape_cast %28 : vector<132xf32> to vector<132x1xf32>
    %30 = vector.broadcast %29 : vector<132x1xf32> to vector<132x8xf32>
    %31 = arith.subf %26, %30 : vector<132x8xf32>
    %32 = math.exp %31 : vector<132x8xf32>
    %cst_8 = arith.constant dense<0.000000e+00> : vector<132xf32>
    %33 = vector.multi_reduction <add>, %32, %cst_8 [1] : vector<132x8xf32> to vector<132xf32>
    %34 = vector.shape_cast %33 : vector<132xf32> to vector<132x1xf32>
    %35 = math.log %34 : vector<132x1xf32>
    %36 = arith.addf %29, %35 : vector<132x1xf32>
    %37 = vector.broadcast %36 : vector<132x1xf32> to vector<132x8xf32>
    %38 = arith.subf %26, %37 : vector<132x8xf32>
    %c0_9 = arith.constant 0 : index
    %c0_10 = arith.constant 0 : index
    %c0_11 = arith.constant 0 : index
    %39 = vector.load %arg4[%c0_9, %c0_10, %c0_11] : memref<1x132x8xf32, #tpu.memory_space<vmem>>, vector<1x132x8xf32>
    %40 = vector.shape_cast %39 : vector<1x132x8xf32> to vector<132x8xf32>
    %41 = arith.mulf %40, %38 : vector<132x8xf32>
    %cst_12 = arith.constant dense<0.000000e+00> : vector<132xf32>
    %42 = vector.multi_reduction <add>, %41, %cst_12 [1] : vector<132x8xf32> to vector<132xf32>
    %43 = vector.shape_cast %42 : vector<132xf32> to vector<132x1xf32>
    %cst_13 = arith.constant 0.000000e+00 : f32
    %44 = vector.broadcast %cst_13 : f32 to vector<132x1xf32>
    %45 = arith.subf %44, %43 : vector<132x1xf32>
    %46 = vector.shape_cast %45 : vector<132x1xf32> to vector<1x132x1xf32>
    %cst_14 = arith.constant dense<0.000000e+00> : vector<1xf32>
    %47 = vector.multi_reduction <add>, %46, %cst_14 [1, 2] : vector<1x132x1xf32> to vector<1xf32>
    %48 = vector.shape_cast %47 : vector<1xf32> to vector<1x1x1xf32>
    %49 = vector.extract %48[0, 0, 0] : f32 from vector<1x1x1xf32>
    %50 = vector.broadcast %49 : f32 to vector<1x1xf32>
    %c0_15 = arith.constant 0 : index
    %c0_16 = arith.constant 0 : index
    %c0_17 = arith.constant 0 : index
    %51 = vector.load %arg5[%c0_15, %c0_16, %c0_17] : memref<1x132x4xf32, #tpu.memory_space<vmem>>, vector<1x132x4xf32>
    %52 = vector.shape_cast %51 : vector<1x132x4xf32> to vector<132x4xf32>
    %53 = arith.subf %27, %52 : vector<132x4xf32>
    %c0_18 = arith.constant 0 : index
    %c0_19 = arith.constant 0 : index
    %54 = vector.load %arg6[%c0_18, %c0_19] : memref<132x1xf32, #tpu.memory_space<vmem>>, vector<132x1xf32>
    %55 = vector.broadcast %54 : vector<132x1xf32> to vector<132x4xf32>
    %56 = arith.mulf %53, %55 : vector<132x4xf32>
    %57 = arith.mulf %56, %56 : vector<132x4xf32>
    %58 = vector.shape_cast %57 : vector<132x4xf32> to vector<1x132x4xf32>
    %cst_20 = arith.constant dense<0.000000e+00> : vector<1xf32>
    %59 = vector.multi_reduction <add>, %58, %cst_20 [1, 2] : vector<1x132x4xf32> to vector<1xf32>
    %60 = vector.shape_cast %59 : vector<1xf32> to vector<1x1x1xf32>
    %61 = vector.extract %60[0, 0, 0] : f32 from vector<1x1x1xf32>
    %62 = vector.broadcast %61 : f32 to vector<1x1xf32>
    %63 = vector.shape_cast %50 : vector<1x1xf32> to vector<1x1xf32>
    %64 = vector.broadcast %63 : vector<1x1xf32> to vector<8x128xf32>
    %c0_21 = arith.constant 0 : index
    %c0_22 = arith.constant 0 : index
    %c0_23 = arith.constant 0 : index
    %65 = vector.load %arg7[%c0_21, %c0_22, %c0_23] : memref<1x8x128xf32, #tpu.memory_space<vmem>>, vector<1x8x128xf32>
    %66 = vector.shape_cast %65 : vector<1x8x128xf32> to vector<8x128xf32>
    %67 = vector.shape_cast %64 : vector<8x128xf32> to vector<1x8x128xf32>
    tpu.vector_store %arg7[%c0_21, %c0_22, %c0_23], %67 {strides = array<i32>} : memref<1x8x128xf32, #tpu.memory_space<vmem>>, vector<1x8x128xf32>,
    %68 = vector.shape_cast %62 : vector<1x1xf32> to vector<1x1xf32>
    %69 = vector.broadcast %68 : vector<1x1xf32> to vector<8x128xf32>
    %c0_24 = arith.constant 0 : index
    %c0_25 = arith.constant 0 : index
    %c0_26 = arith.constant 0 : index
    %70 = vector.load %arg8[%c0_24, %c0_25, %c0_26] : memref<1x8x128xf32, #tpu.memory_space<vmem>>, vector<1x8x128xf32>
    %71 = vector.shape_cast %70 : vector<1x8x128xf32> to vector<8x128xf32>
    %72 = vector.shape_cast %69 : vector<8x128xf32> to vector<1x8x128xf32>
    tpu.vector_store %arg8[%c0_24, %c0_25, %c0_26], %72 {strides = array<i32>} : memref<1x8x128xf32, #tpu.memory_space<vmem>>, vector<1x8x128xf32>,
    return
  }
  func.func @transform_0(%arg0: i32) -> (i32, i32, i32) {
    %c0_i32 = arith.constant 0 : i32
    %c0_i32_0 = arith.constant 0 : i32
    %c0_i32_1 = arith.constant 0 : i32
    return %arg0, %c0_i32, %c0_i32_0 : i32, i32, i32
  }
  func.func @transform_1(%arg0: i32) -> (i32, i32) {
    %c0_i32 = arith.constant 0 : i32
    %c0_i32_0 = arith.constant 0 : i32
    %c0_i32_1 = arith.constant 0 : i32
    return %c0_i32, %c0_i32_0 : i32, i32
  }
  func.func @transform_2(%arg0: i32) -> (i32, i32) {
    %c0_i32 = arith.constant 0 : i32
    %c0_i32_0 = arith.constant 0 : i32
    %c0_i32_1 = arith.constant 0 : i32
    return %c0_i32, %c0_i32_0 : i32, i32
  }
  func.func @transform_3(%arg0: i32) -> (i32, i32, i32) {
    %c0_i32 = arith.constant 0 : i32
    %c0_i32_0 = arith.constant 0 : i32
    %c0_i32_1 = arith.constant 0 : i32
    return %arg0, %c0_i32, %c0_i32_0 : i32, i32, i32
  }
  func.func @transform_4(%arg0: i32) -> (i32, i32, i32) {
    %c0_i32 = arith.constant 0 : i32
    %c0_i32_0 = arith.constant 0 : i32
    %c0_i32_1 = arith.constant 0 : i32
    return %arg0, %c0_i32, %c0_i32_0 : i32, i32, i32
  }
  func.func @transform_5(%arg0: i32) -> (i32, i32) {
    %c0_i32 = arith.constant 0 : i32
    %c0_i32_0 = arith.constant 0 : i32
    %c0_i32_1 = arith.constant 0 : i32
    return %c0_i32, %c0_i32_0 : i32, i32
  }
  func.func @transform_6(%arg0: i32) -> (i32, i32, i32) {
    %c0_i32 = arith.constant 0 : i32
    %c0_i32_0 = arith.constant 0 : i32
    %c0_i32_1 = arith.constant 0 : i32
    return %arg0, %c0_i32, %c0_i32_0 : i32, i32, i32
  }
  func.func @transform_7(%arg0: i32) -> (i32, i32, i32) {
    %c0_i32 = arith.constant 0 : i32
    %c0_i32_0 = arith.constant 0 : i32
    %c0_i32_1 = arith.constant 0 : i32
    return %arg0, %c0_i32, %c0_i32_0 : i32, i32, i32
  }
}

</mosaic_0001>

<llo_original>
// kernel: tpu_custom_call.1
$region0: #{tpu_custom_call.1}
  #allocation0 [shape = 'u32[]', space=smem, size = 0x4, offset = 0x4, fixed_abs, tag = 'smem constant byte address 0x4 - core index']
  #allocation1 [shape = 'u32[144,128]{1,0:T(1,128)}', space=vmem, size = 0x12000, scoped, tag = 'internal scratch']
  %s0 = inlined_call_operand.vmem [shape: bf16[2,184,1280], index: 0, kind: input, shape index: {}]
  %s1 = inlined_call_operand.vmem [shape: bf16[1280,108], index: 1, kind: input, shape index: {}]
  %s2 = inlined_call_operand.vmem [shape: f32[1,12], index: 2, kind: input, shape index: {}]
  %s3 = inlined_call_operand.vmem [shape: f32[2,132,8], index: 3, kind: input, shape index: {}]
  %s4 = inlined_call_operand.vmem [shape: f32[2,132,4], index: 4, kind: input, shape index: {}]
  %s5 = inlined_call_operand.vmem [shape: f32[132,1], index: 5, kind: input, shape index: {}]
  %s6 = inlined_call_operand.hbm [shape: f32[2,8,128], index: 6, kind: output, shape index: {0}]
  %s7 = inlined_call_operand.hbm [shape: f32[2,8,128], index: 7, kind: output, shape index: {1}]
  %8 = xla_tuple %s6, %s7
  %s9 = sld [smem:[#allocation0]]
  $region65: #{tpu_custom_call.1} parent=0
    _
  %s11 = ssub.s32 1, %s9
  %s12 = scalar_select 0, %s11, %s9
  $region1: #{tpu_custom_call.1} parent=0
    #allocation2 [shape = 'u8[8192]{0}', space=vmem, size = 0x2000, scoped, tag = 'output window, operand 0']
    #allocation3 [shape = 's32[2]{0}', space=sflag, size = 0x8, scoped, tag = 'scoped memory for tpu_custom_call.1']
    #allocation4 [shape = 'u8[8192]{0}', space=vmem, size = 0x2000, scoped, tag = 'output window, operand 1']
    #allocation5 [shape = 's32[2]{0}', space=sflag, size = 0x8, scoped, tag = 'scoped memory for tpu_custom_call.1']
    %13 = vsyncpa [#allocation3], 0
    %s14 = scalar_lea.sflag [#allocation3], 1
    %15 = vsyncpa %s14, 0
    %16 = vsyncpa [#allocation5], 0
    %s17 = scalar_lea.sflag [#allocation5], 1
    %18 = vsyncpa %s17, 0
    loop: start=0, step=1, limit=4
    $region2: #{tpu_custom_call.1} parent=1 // loop_pre_header
      _
    $region3: #{tpu_custom_call.1} parent=1 // loop_header
      %s20 = sphi 0, %s24
      %p21 = scmp.ge.s32.totalorder %s20, 4
      %s30 = sphi 0, %s32
      %s33 = sphi 0, %s30
      %s34 = sphi 0, %s33
      %s50 = sphi 0, %s34
      %s54 = sphi 0, %s54
      %s56 = sphi 0, %s54
      %s57 = sphi 0, %s56
      %s71 = sphi 0, %s57
      %s75 = sphi 0, %s75
      %s77 = sphi 0, %s75
      %s78 = sphi 0, %s77
      %s92 = sphi 0, %s78
      %s98 = sphi 0, %s100
      %s101 = sphi 0, %s98
      %s102 = sphi 0, %s101
      %s118 = sphi 0, %s102
      %s124 = sphi 0, %s126
      %s127 = sphi 0, %s124
      %s128 = sphi 0, %s127
      %s144 = sphi 0, %s128
      %s148 = sphi 0, %s148
      %s150 = sphi 0, %s148
      %s151 = sphi 0, %s150
      %s165 = sphi 0, %s151
      %s171 = sphi 0, %s173
      %s174 = sphi 0, %s171
      %s175 = sphi 0, %s174
      %s191 = sphi 0, %s175
      %s197 = sphi 0, %s199
      %s200 = sphi 0, %s197
      %s201 = sphi 0, %s200
      %s217 = sphi 0, %s201
    $region4: #{tpu_custom_call.1} parent=1 // loop_header_branch
      %23 = sbr.rel (%p21) target = $region8
    $region5: #{tpu_custom_call.1} parent=1 // loop_body
      %s25 = ssub.s32 %s20, 1
      %s26 = ssub.s32 %s20, 2
      %s27 = sadd.s32 %s20, 1
      %s28 = ssub.s32 %s20, %s27
      %p29 = scmp.eq.s32.totalorder %s28, 0
      %s31 = sadd.s32 %s30, 1
      %s32 = scalar_select %p29, %s30, %s31
      %p35 = pneg %p29
      %p36 = scmp.eq.s32.totalorder %s20, 1
      %p37 = por %p35, %p36
      %p38 = scmp.ne.s32.totalorder %s30, %s33
      %p39 = scmp.eq.s32.totalorder %s20, 0
      %p40 = por %p38, %p39
      %p41 = scmp.ne.s32.totalorder %s30, %s33
      %p42 = scmp.eq.s32.totalorder %s25, 1
      %p43 = por %p41, %p42
      %p44 = scmp.ne.s32.totalorder %s33, %s34
      %p45 = scmp.eq.s32.totalorder %s25, 0
      %p46 = por %p44, %p45
      %p47 = scmp.ne.s32.totalorder %s33, %s34
      %p48 = scmp.eq.s32.totalorder %s26, 1
      %p49 = por %p47, %p48
      %p51 = scmp.ne.s32.totalorder %s34, %s50
      %p52 = scmp.eq.s32.totalorder %s26, 0
      %p53 = por %p51, %p52
      %s55 = sadd.s32 %s54, 1
      %p58 = scmp.eq.s32.totalorder %s20, 1
      %p59 = scmp.ne.s32.totalorder %s54, %s56
      %p60 = scmp.eq.s32.totalorder %s20, 0
      %p61 = por %p59, %p60
      %p62 = scmp.ne.s32.totalorder %s54, %s56
      %p63 = scmp.eq.s32.totalorder %s25, 1
      %p64 = por %p62, %p63
      %p65 = scmp.ne.s32.totalorder %s56, %s57
      %p66 = scmp.eq.s32.totalorder %s25, 0
      %p67 = por %p65, %p66
      %p68 = scmp.ne.s32.totalorder %s56, %s57
      %p69 = scmp.eq.s32.totalorder %s26, 1
      %p70 = por %p68, %p69
      %p72 = scmp.ne.s32.totalorder %s57, %s71
      %p73 = scmp.eq.s32.totalorder %s26, 0
      %p74 = por %p72, %p73
      %s76 = sadd.s32 %s75, 1
      %p79 = scmp.eq.s32.totalorder %s20, 1
      %p80 = scmp.ne.s32.totalorder %s75, %s77
      %p81 = scmp.eq.s32.totalorder %s20, 0
      %p82 = por %p80, %p81
      %p83 = scmp.ne.s32.totalorder %s75, %s77
      %p84 = scmp.eq.s32.totalorder %s25, 1
      %p85 = por %p83, %p84
      %p86 = scmp.ne.s32.totalorder %s77, %s78
      %p87 = scmp.eq.s32.totalorder %s25, 0
      %p88 = por %p86, %p87
      %p89 = scmp.ne.s32.totalorder %s77, %s78
      %p90 = scmp.eq.s32.totalorder %s26, 1
      %p91 = por %p89, %p90
      %p93 = scmp.ne.s32.totalorder %s78, %s92
      %p94 = scmp.eq.s32.totalorder %s26, 0
      %p95 = por %p93, %p94
      %s96 = ssub.s32 %s20, %s27
      %p97 = scmp.eq.s32.totalorder %s96, 0
      %s99 = sadd.s32 %s98, 1
      %s100 = scalar_select %p97, %s98, %s99
      %p103 = pneg %p97
      %p104 = scmp.eq.s32.totalorder %s20, 1
      %p105 = por %p103, %p104
      %p106 = scmp.ne.s32.totalorder %s98, %s101
      %p107 = scmp.eq.s32.totalorder %s20, 0
      %p108 = por %p106, %p107
      %p109 = scmp.ne.s32.totalorder %s98, %s101
      %p110 = scmp.eq.s32.totalorder %s25, 1
      %p111 = por %p109, %p110
      %p112 = scmp.ne.s32.totalorder %s101, %s102
      %p113 = scmp.eq.s32.totalorder %s25, 0
      %p114 = por %p112, %p113
      %p115 = scmp.ne.s32.totalorder %s101, %s102
      %p116 = scmp.eq.s32.totalorder %s26, 1
      %p117 = por %p115, %p116
      %p119 = scmp.ne.s32.totalorder %s102, %s118
      %p120 = scmp.eq.s32.totalorder %s26, 0
      %p121 = por %p119, %p120
      %s122 = ssub.s32 %s20, %s27
      %p123 = scmp.eq.s32.totalorder %s122, 0
      %s125 = sadd.s32 %s124, 1
      %s126 = scalar_select %p123, %s124, %s125
      %p129 = pneg %p123
      %p130 = scmp.eq.s32.totalorder %s20, 1
      %p131 = por %p129, %p130
      %p132 = scmp.ne.s32.totalorder %s124, %s127
      %p133 = scmp.eq.s32.totalorder %s20, 0
      %p134 = por %p132, %p133
      %p135 = scmp.ne.s32.totalorder %s124, %s127
      %p136 = scmp.eq.s32.totalorder %s25, 1
      %p137 = por %p135, %p136
      %p138 = scmp.ne.s32.totalorder %s127, %s128
      %p139 = scmp.eq.s32.totalorder %s25, 0
      %p140 = por %p138, %p139
      %p141 = scmp.ne.s32.totalorder %s127, %s128
      %p142 = scmp.eq.s32.totalorder %s26, 1
      %p143 = por %p141, %p142
      %p145 = scmp.ne.s32.totalorder %s128, %s144
      %p146 = scmp.eq.s32.totalorder %s26, 0
      %p147 = por %p145, %p146
      %s149 = sadd.s32 %s148, 1
      %p152 = scmp.eq.s32.totalorder %s20, 1
      %p153 = scmp.ne.s32.totalorder %s148, %s150
      %p154 = scmp.eq.s32.totalorder %s20, 0
      %p155 = por %p153, %p154
      %p156 = scmp.ne.s32.totalorder %s148, %s150
      %p157 = scmp.eq.s32.totalorder %s25, 1
      %p158 = por %p156, %p157
      %p159 = scmp.ne.s32.totalorder %s150, %s151
      %p160 = scmp.eq.s32.totalorder %s25, 0
      %p161 = por %p159, %p160
      %p162 = scmp.ne.s32.totalorder %s150, %s151
      %p163 = scmp.eq.s32.totalorder %s26, 1
      %p164 = por %p162, %p163
      %p166 = scmp.ne.s32.totalorder %s151, %s165
      %p167 = scmp.eq.s32.totalorder %s26, 0
      %p168 = por %p166, %p167
      %s169 = ssub.s32 %s20, %s27
      %p170 = scmp.eq.s32.totalorder %s169, 0
      %s172 = sadd.s32 %s171, 1
      %s173 = scalar_select %p170, %s171, %s172
      %p176 = pneg %p170
      %p177 = scmp.eq.s32.totalorder %s20, 1
      %p178 = por %p176, %p177
      %p179 = scmp.ne.s32.totalorder %s171, %s174
      %p180 = scmp.eq.s32.totalorder %s20, 0
      %p181 = por %p179, %p180
      %p182 = scmp.ne.s32.totalorder %s171, %s174
      %p183 = scmp.eq.s32.totalorder %s25, 1
      %p184 = por %p182, %p183
      %p185 = scmp.ne.s32.totalorder %s174, %s175
      %p186 = scmp.eq.s32.totalorder %s25, 0
      %p187 = por %p185, %p186
      %p188 = scmp.ne.s32.totalorder %s174, %s175
      %p189 = scmp.eq.s32.totalorder %s26, 1
      %p190 = por %p188, %p189
      %p192 = scmp.ne.s32.totalorder %s175, %s191
      %p193 = scmp.eq.s32.totalorder %s26, 0
      %p194 = por %p192, %p193
      %s195 = ssub.s32 %s20, %s27
      %p196 = scmp.eq.s32.totalorder %s195, 0
      %s198 = sadd.s32 %s197, 1
      %s199 = scalar_select %p196, %s197, %s198
      %p202 = pneg %p196
      %p203 = scmp.eq.s32.totalorder %s20, 1
      %p204 = por %p202, %p203
      %p205 = scmp.ne.s32.totalorder %s197, %s200
      %p206 = scmp.eq.s32.totalorder %s20, 0
      %p207 = por %p205, %p206
      %p208 = scmp.ne.s32.totalorder %s197, %s200
      %p209 = scmp.eq.s32.totalorder %s25, 1
      %p210 = por %p208, %p209
      %p211 = scmp.ne.s32.totalorder %s200, %s201
      %p212 = scmp.eq.s32.totalorder %s25, 0
      %p213 = por %p211, %p212
      %p214 = scmp.ne.s32.totalorder %s200, %s201
      %p215 = scmp.eq.s32.totalorder %s26, 1
      %p216 = por %p214, %p215
      %p218 = scmp.ne.s32.totalorder %s201, %s217
      %p219 = scmp.eq.s32.totalorder %s26, 0
      %p220 = por %p218, %p219
      %p221 = scmp.le.s32.totalorder 1, %s20
      %p222 = scmp.lt.s32.totalorder %s20, 3
      %p223 = pnand %p221, %p222
      %p224 = pneg %p223
      // Predicated region
      $region9: #{tpu_custom_call.1} parent=5 // pred_check
        _
      $region10: #{tpu_custom_call.1} parent=5 // pred_check_branch
        %226 = sbr.rel (%p223) target = $region12
      $region11: #{tpu_custom_call.1} parent=5 // pred_region
        %s227 = ssub.s32 %s20, 1
        // Predicated region
        $region13: #{tpu_custom_call.1} parent=11 // pred_check
          %p228 = pneg %p67
        $region14: #{tpu_custom_call.1} parent=11 // pred_check_branch
          %230 = sbr.rel (%p228) target = $region16
        $region15: #{tpu_custom_call.1} parent=11 // pred_region
          _
        $region16: #{tpu_custom_call.1} parent=11 // pred_fallthru
          _
        // Predicated region
        $region17: #{tpu_custom_call.1} parent=11 // pred_check
          %p231 = pneg %p88
        $region18: #{tpu_custom_call.1} parent=11 // pred_check_branch
          %233 = sbr.rel (%p231) target = $region20
        $region19: #{tpu_custom_call.1} parent=11 // pred_region
          _
        $region20: #{tpu_custom_call.1} parent=11 // pred_fallthru
          _
        // Predicated region
        $region21: #{tpu_custom_call.1} parent=11 // pred_check
          %p234 = pneg %p161
        $region22: #{tpu_custom_call.1} parent=11 // pred_check_branch
          %236 = sbr.rel (%p234) target = $region24
        $region23: #{tpu_custom_call.1} parent=11 // pred_region
          _
        $region24: #{tpu_custom_call.1} parent=11 // pred_fallthru
          _
      $region12: #{tpu_custom_call.1} parent=5 // pred_fallthru
        _
      %p237 = scmp.lt.s32.totalorder %s20, 2
      // Predicated region
      $region25: #{tpu_custom_call.1} parent=5 // pred_check
        %p238 = pneg %p237
      $region26: #{tpu_custom_call.1} parent=5 // pred_check_branch
        %240 = sbr.rel (%p238) target = $region28
      $region27: #{tpu_custom_call.1} parent=5 // pred_region
        // Predicated region
        $region29: #{tpu_custom_call.1} parent=27 // pred_check
          %p241 = pneg %p40
        $region30: #{tpu_custom_call.1} parent=27 // pred_check_branch
          %243 = sbr.rel (%p241) target = $region32
        $region31: #{tpu_custom_call.1} parent=27 // pred_region
          %p244 = scmp.lt.s32.totalorder %s20, 1
          %s245 = scalar_select %p244, %s20, 1
          %s246 = smul.addr %s245, 230
          %s247 = smul.addr %s246, 4
          %s248 = scalar_lea.vmem %s0, %s247
        $region32: #{tpu_custom_call.1} parent=27 // pred_fallthru
          _
        // Predicated region
        $region33: #{tpu_custom_call.1} parent=27 // pred_check
          %p249 = pneg %p108
        $region34: #{tpu_custom_call.1} parent=27 // pred_check_branch
          %251 = sbr.rel (%p249) target = $region36
        $region35: #{tpu_custom_call.1} parent=27 // pred_region
          %p252 = scmp.lt.s32.totalorder %s20, 1
          %s253 = scalar_select %p252, %s20, 1
          %s254 = smul.addr %s253, 17
          %s255 = smul.addr %s254, 8
          %s256 = scalar_lea.vmem %s3, %s255
        $region36: #{tpu_custom_call.1} parent=27 // pred_fallthru
          _
        // Predicated region
        $region37: #{tpu_custom_call.1} parent=27 // pred_check
          %p257 = pneg %p134
        $region38: #{tpu_custom_call.1} parent=27 // pred_check_branch
          %259 = sbr.rel (%p257) target = $region40
        $region39: #{tpu_custom_call.1} parent=27 // pred_region
          %p260 = scmp.lt.s32.totalorder %s20, 1
          %s261 = scalar_select %p260, %s20, 1
          %s262 = smul.addr %s261, 17
          %s263 = smul.addr %s262, 8
          %s264 = scalar_lea.vmem %s4, %s263
        $region40: #{tpu_custom_call.1} parent=27 // pred_fallthru
          _
      $region28: #{tpu_custom_call.1} parent=5 // pred_fallthru
        _
      %p265 = scmp.le.s32.totalorder 1, %s20
      %p266 = scmp.lt.s32.totalorder %s20, 3
      %p267 = pnand %p265, %p266
      %p268 = pneg %p267
      // Predicated region
      $region41: #{tpu_custom_call.1} parent=5 // pred_check
        _
      $region42: #{tpu_custom_call.1} parent=5 // pred_check_branch
        %270 = sbr.rel (%p267) target = $region44
      $region43: #{tpu_custom_call.1} parent=5 // pred_region
        %s271 = ssub.s32 %s20, 1
        %p272 = scmp.lt.s32.totalorder %s25, 1
        %s273 = scalar_select %p272, %s25, 1
        %s274 = smul.addr %s273, 230
        %s275 = smul.addr %s274, 4
        %s276 = scalar_lea.vmem %s0, %s275
        %p277 = pneg %p46
        %p278 = pneg %p43
        %p279 = pneg %p67
        %p280 = pneg %p64
        %p281 = pneg %p88
        %p282 = pneg %p85
        %p283 = scmp.lt.s32.totalorder %s25, 1
        %s284 = scalar_select %p283, %s25, 1
        %s285 = smul.addr %s284, 17
        %s286 = smul.addr %s285, 8
        %s287 = scalar_lea.vmem %s3, %s286
        %p288 = pneg %p114
        %p289 = pneg %p111
        %p290 = scmp.lt.s32.totalorder %s25, 1
        %s291 = scalar_select %p290, %s25, 1
        %s292 = smul.addr %s291, 17
        %s293 = smul.addr %s292, 8
        %s294 = scalar_lea.vmem %s4, %s293
        %p295 = pneg %p140
        %p296 = pneg %p137
        %p297 = pneg %p161
        %p298 = pneg %p158
        %p299 = pneg %p187
        %p300 = pneg %p184
        %s301 = sand.u32 %s174, 1
        %s302 = scalar_lea.sflag [#allocation3], %s301
        %s303 = sand.u32 %s174, 1
        %s304 = smul.addr %s303, 8
        %s305 = scalar_lea.vmem [#allocation2], %s304
        %p306 = pneg %p213
        %p307 = pneg %p210
        %s308 = sand.u32 %s200, 1
        %s309 = scalar_lea.sflag [#allocation5], %s308
        %s310 = sand.u32 %s200, 1
        %s311 = smul.addr %s310, 8
        %s312 = scalar_lea.vmem [#allocation4], %s311
        %p313 = scmp.lt.s32.totalorder %s25, 1
        %s314 = scalar_select %p313, %s25, 1
        %s315 = smul.addr %s314, 230
        %s316 = smul.addr %s315, 4
        %s317 = scalar_lea.vmem %s0, %s316
        %p318 = scmp.lt.s32.totalorder %s25, 1
        %s319 = scalar_select %p318, %s25, 1
        %s320 = smul.addr %s319, 17
        %s321 = smul.addr %s320, 8
        %s322 = scalar_lea.vmem %s3, %s321
        %p323 = scmp.lt.s32.totalorder %s25, 1
        %s324 = scalar_select %p323, %s25, 1
        %s325 = smul.addr %s324, 17
        %s326 = smul.addr %s325, 8
        %s327 = scalar_lea.vmem %s4, %s326
        %v329 = vld [vmem:[%s317] sm:$0xff]
        %v330 = vld [vmem:[%s317 + $0x8] sm:$0xff]
        %v331 = vld [vmem:[%s317 + $0x10] sm:$0xff]
        %v332 = vld [vmem:[%s317 + $0x18] sm:$0xff]
        %v333 = vld [vmem:[%s317 + $0x20] sm:$0xff]
        %v334 = vld [vmem:[%s317 + $0x28] sm:$0xff]
        %v335 = vld [vmem:[%s317 + $0x30] sm:$0xff]
        %v336 = vld [vmem:[%s317 + $0x38] sm:$0xff]
        %v337 = vld [vmem:[%s317 + $0x40] sm:$0xff]
        %v338 = vld [vmem:[%s317 + $0x48] sm:$0xff]
        %v339 = vld [vmem:[%s317 + $0x50] sm:$0xff]
        %v340 = vld [vmem:[%s317 + $0x58] sm:$0xff]
        %v341 = vld [vmem:[%s317 + $0x60] sm:$0xff]
        %v342 = vld [vmem:[%s317 + $0x68] sm:$0xff]
        %v343 = vld [vmem:[%s317 + $0x70] sm:$0xff]
        %v344 = vld [vmem:[%s317 + $0x78] sm:$0xff]
        %v345 = vld [vmem:[%s317 + $0x80] sm:$0xff]
        %v346 = vld [vmem:[%s317 + $0x88] sm:$0xff]
        %v347 = vld [vmem:[%s317 + $0x90] sm:$0xff]
        %v348 = vld [vmem:[%s317 + $0x98] sm:$0xff]
        %v349 = vld [vmem:[%s317 + $0xa0] sm:$0xff]
        %v350 = vld [vmem:[%s317 + $0xa8] sm:$0xff]
        %v351 = vld [vmem:[%s317 + $0xb0] sm:$0xff]
        %v352 = vld [vmem:[%s317 + $0xb8] sm:$0xff]
        %v353 = vld [vmem:[%s317 + $0xc0] sm:$0xff]
        %v354 = vld [vmem:[%s317 + $0xc8] sm:$0xff]
        %v355 = vld [vmem:[%s317 + $0xd0] sm:$0xff]
        %v356 = vld [vmem:[%s317 + $0xd8] sm:$0xff]
        %v357 = vld [vmem:[%s317 + $0xe0] sm:$0xff]
        %v358 = vld [vmem:[%s317 + $0xe8] sm:$0xff]
        %v359 = vld [vmem:[%s317 + $0xf0] sm:$0xff]
        %v360 = vld [vmem:[%s317 + $0xf8] sm:$0xff]
        %v361 = vld [vmem:[%s317 + $0x100] sm:$0xff]
        %v362 = vld [vmem:[%s317 + $0x108] sm:$0xff]
        %v363 = vld [vmem:[%s317 + $0x110] sm:$0xff]
        %v364 = vld [vmem:[%s317 + $0x118] sm:$0xff]
        %v365 = vld [vmem:[%s317 + $0x120] sm:$0xff]
        %v366 = vld [vmem:[%s317 + $0x128] sm:$0xff]
        %v367 = vld [vmem:[%s317 + $0x130] sm:$0xff]
        %v368 = vld [vmem:[%s317 + $0x138] sm:$0xff]
        %v369 = vld [vmem:[%s317 + $0x140] sm:$0xff]
        %v370 = vld [vmem:[%s317 + $0x148] sm:$0xff]
        %v371 = vld [vmem:[%s317 + $0x150] sm:$0xff]
        %v372 = vld [vmem:[%s317 + $0x158] sm:$0xff]
        %v373 = vld [vmem:[%s317 + $0x160] sm:$0xff]
        %v374 = vld [vmem:[%s317 + $0x168] sm:$0xff]
        %v375 = vld [vmem:[%s317 + $0x170] sm:$0xff]
        %v376 = vld [vmem:[%s317 + $0x178] sm:$0xff]
        %v377 = vld [vmem:[%s317 + $0x180] sm:$0xff]
        %v378 = vld [vmem:[%s317 + $0x188] sm:$0xff]
        %v379 = vld [vmem:[%s317 + $0x190] sm:$0xff]
        %v380 = vld [vmem:[%s317 + $0x198] sm:$0xff]
        %v381 = vld [vmem:[%s317 + $0x1a0] sm:$0xff]
        %v382 = vld [vmem:[%s317 + $0x1a8] sm:$0xff]
        %v383 = vld [vmem:[%s317 + $0x1b0] sm:$0xff]
        %v384 = vld [vmem:[%s317 + $0x1b8] sm:$0xff]
        %v385 = vld [vmem:[%s317 + $0x1c0] sm:$0xff]
        %v386 = vld [vmem:[%s317 + $0x1c8] sm:$0xff]
        %v387 = vld [vmem:[%s317 + $0x1d0] sm:$0xff]
        %v388 = vld [vmem:[%s317 + $0x1d8] sm:$0xff]
        %v389 = vld [vmem:[%s317 + $0x1e0] sm:$0xff]
        %v390 = vld [vmem:[%s317 + $0x1e8] sm:$0xff]
        %v391 = vld [vmem:[%s317 + $0x1f0] sm:$0xff]
        %v392 = vld [vmem:[%s317 + $0x1f8] sm:$0xff]
        %v393 = vld [vmem:[%s317 + $0x200] sm:$0xff]
        %v394 = vld [vmem:[%s317 + $0x208] sm:$0xff]
        %v395 = vld [vmem:[%s317 + $0x210] sm:$0xff]
        %v396 = vld [vmem:[%s317 + $0x218] sm:$0xff]
        %v397 = vld [vmem:[%s317 + $0x220] sm:$0xff]
        %v398 = vld [vmem:[%s317 + $0x228] sm:$0xff]
        %v399 = vld [vmem:[%s317 + $0x230] sm:$0xff]
        %v400 = vld [vmem:[%s317 + $0x238] sm:$0xff]
        %v401 = vld [vmem:[%s317 + $0x240] sm:$0xff]
        %v402 = vld [vmem:[%s317 + $0x248] sm:$0xff]
        %v403 = vld [vmem:[%s317 + $0x250] sm:$0xff]
        %v404 = vld [vmem:[%s317 + $0x258] sm:$0xff]
        %v405 = vld [vmem:[%s317 + $0x260] sm:$0xff]
        %v406 = vld [vmem:[%s317 + $0x268] sm:$0xff]
        %v407 = vld [vmem:[%s317 + $0x270] sm:$0xff]
        %v408 = vld [vmem:[%s317 + $0x278] sm:$0xff]
        %v409 = vld [vmem:[%s317 + $0x280] sm:$0xff]
        %v410 = vld [vmem:[%s317 + $0x288] sm:$0xff]
        %v411 = vld [vmem:[%s317 + $0x290] sm:$0xff]
        %v412 = vld [vmem:[%s317 + $0x298] sm:$0xff]
        %v413 = vld [vmem:[%s317 + $0x2a0] sm:$0xff]
        %v414 = vld [vmem:[%s317 + $0x2a8] sm:$0xff]
        %v415 = vld [vmem:[%s317 + $0x2b0] sm:$0xff]
        %v416 = vld [vmem:[%s317 + $0x2b8] sm:$0xff]
        %v417 = vld [vmem:[%s317 + $0x2c0] sm:$0xff]
        %v418 = vld [vmem:[%s317 + $0x2c8] sm:$0xff]
        %v419 = vld [vmem:[%s317 + $0x2d0] sm:$0xff]
        %v420 = vld [vmem:[%s317 + $0x2d8] sm:$0xff]
        %v421 = vld [vmem:[%s317 + $0x2e0] sm:$0xff]
        %v422 = vld [vmem:[%s317 + $0x2e8] sm:$0xff]
        %v423 = vld [vmem:[%s317 + $0x2f0] sm:$0xff]
        %v424 = vld [vmem:[%s317 + $0x2f8] sm:$0xff]
        %v425 = vld [vmem:[%s317 + $0x300] sm:$0xff]
        %v426 = vld [vmem:[%s317 + $0x308] sm:$0xff]
        %v427 = vld [vmem:[%s317 + $0x310] sm:$0xff]
        %v428 = vld [vmem:[%s317 + $0x318] sm:$0xff]
        %v429 = vld [vmem:[%s317 + $0x320] sm:$0xff]
        %v430 = vld [vmem:[%s317 + $0x328] sm:$0xff]
        %v431 = vld [vmem:[%s317 + $0x330] sm:$0xff]
        %v432 = vld [vmem:[%s317 + $0x338] sm:$0xff]
        %v433 = vld [vmem:[%s317 + $0x340] sm:$0xff]
        %v434 = vld [vmem:[%s317 + $0x348] sm:$0xff]
        %v435 = vld [vmem:[%s317 + $0x350] sm:$0xff]
        %v436 = vld [vmem:[%s317 + $0x358] sm:$0xff]
        %v437 = vld [vmem:[%s317 + $0x360] sm:$0xff]
        %v438 = vld [vmem:[%s317 + $0x368] sm:$0xff]
        %v439 = vld [vmem:[%s317 + $0x370] sm:$0xff]
        %v440 = vld [vmem:[%s317 + $0x378] sm:$0xff]
        %v441 = vld [vmem:[%s317 + $0x380] sm:$0xff]
        %v442 = vld [vmem:[%s317 + $0x388] sm:$0xff]
        %v443 = vld [vmem:[%s317 + $0x390] sm:$0xff]
        %v444 = vld [vmem:[%s1] sm:$0xf]
        %v445 = vld [vmem:[%s1 + $0x4] sm:$0xf]
        %v446 = vld [vmem:[%s1 + $0x8] sm:$0xf]
        %v447 = vld [vmem:[%s1 + $0xc] sm:$0xf]
        %v448 = vld [vmem:[%s1 + $0x10] sm:$0xf]
        %v449 = vld [vmem:[%s1 + $0x14] sm:$0xf]
        %v450 = vld [vmem:[%s1 + $0x18] sm:$0xf]
        %v451 = vld [vmem:[%s1 + $0x1c] sm:$0xf]
        %v452 = vld [vmem:[%s1 + $0x20] sm:$0xf]
        %v453 = vld [vmem:[%s1 + $0x24] sm:$0xf]
        %v454 = vld [vmem:[%s1 + $0x28] sm:$0xf]
        %v455 = vld [vmem:[%s1 + $0x2c] sm:$0xf]
        %v456 = vld [vmem:[%s1 + $0x30] sm:$0xf]
        %v457 = vld [vmem:[%s1 + $0x34] sm:$0xf]
        %v458 = vld [vmem:[%s1 + $0x38] sm:$0xf]
        %v459 = vld [vmem:[%s1 + $0x3c] sm:$0xf]
        %v460 = vld [vmem:[%s1 + $0x40] sm:$0xf]
        %v461 = vld [vmem:[%s1 + $0x44] sm:$0xf]
        %v462 = vld [vmem:[%s1 + $0x48] sm:$0xf]
        %v463 = vld [vmem:[%s1 + $0x4c] sm:$0xf]
        %v464 = vld [vmem:[%s1 + $0x50] sm:$0xf]
        %v465 = vld [vmem:[%s1 + $0x54] sm:$0xf]
        %v466 = vld [vmem:[%s1 + $0x58] sm:$0xf]
        %v467 = vld [vmem:[%s1 + $0x5c] sm:$0xf]
        %v468 = vld [vmem:[%s1 + $0x60] sm:$0xf]
        %v469 = vld [vmem:[%s1 + $0x64] sm:$0xf]
        %v470 = vld [vmem:[%s1 + $0x68] sm:$0xf]
        %v471 = vld [vmem:[%s1 + $0x6c] sm:$0xf]
        %v472 = vld [vmem:[%s1 + $0x70] sm:$0xf]
        %v473 = vld [vmem:[%s1 + $0x74] sm:$0xf]
        %v474 = vld [vmem:[%s1 + $0x78] sm:$0xf]
        %v475 = vld [vmem:[%s1 + $0x7c] sm:$0xf]
        %v476 = vld [vmem:[%s1 + $0x80] sm:$0xf]
        %v477 = vld [vmem:[%s1 + $0x84] sm:$0xf]
        %v478 = vld [vmem:[%s1 + $0x88] sm:$0xf]
        %v479 = vld [vmem:[%s1 + $0x8c] sm:$0xf]
        %v480 = vld [vmem:[%s1 + $0x90] sm:$0xf]
        %v481 = vld [vmem:[%s1 + $0x94] sm:$0xf]
        %v482 = vld [vmem:[%s1 + $0x98] sm:$0xf]
        %v483 = vld [vmem:[%s1 + $0x9c] sm:$0xf]
        %v484 = vld [vmem:[%s1 + $0xa0] sm:$0xf]
        %v485 = vld [vmem:[%s1 + $0xa4] sm:$0xf]
        %v486 = vld [vmem:[%s1 + $0xa8] sm:$0xf]
        %v487 = vld [vmem:[%s1 + $0xac] sm:$0xf]
        %v488 = vld [vmem:[%s1 + $0xb0] sm:$0xf]
        %v489 = vld [vmem:[%s1 + $0xb4] sm:$0xf]
        %v490 = vld [vmem:[%s1 + $0xb8] sm:$0xf]
        %v491 = vld [vmem:[%s1 + $0xbc] sm:$0xf]
        %v492 = vld [vmem:[%s1 + $0xc0] sm:$0xf]
        %v493 = vld [vmem:[%s1 + $0xc4] sm:$0xf]
        %v494 = vld [vmem:[%s1 + $0xc8] sm:$0xf]
        %v495 = vld [vmem:[%s1 + $0xcc] sm:$0xf]
        %v496 = vld [vmem:[%s1 + $0xd0] sm:$0xf]
        %v497 = vld [vmem:[%s1 + $0xd4] sm:$0xf]
        %v498 = vld [vmem:[%s1 + $0xd8] sm:$0xf]
        %v499 = vld [vmem:[%s1 + $0xdc] sm:$0xf]
        %v500 = vld [vmem:[%s1 + $0xe0] sm:$0xf]
        %v501 = vld [vmem:[%s1 + $0xe4] sm:$0xf]
        %v502 = vld [vmem:[%s1 + $0xe8] sm:$0xf]
        %v503 = vld [vmem:[%s1 + $0xec] sm:$0xf]
        %v504 = vld [vmem:[%s1 + $0xf0] sm:$0xf]
        %v505 = vld [vmem:[%s1 + $0xf4] sm:$0xf]
        %v506 = vld [vmem:[%s1 + $0xf8] sm:$0xf]
        %v507 = vld [vmem:[%s1 + $0xfc] sm:$0xf]
        %v508 = vld [vmem:[%s1 + $0x100] sm:$0xf]
        %v509 = vld [vmem:[%s1 + $0x104] sm:$0xf]
        %v510 = vld [vmem:[%s1 + $0x108] sm:$0xf]
        %v511 = vld [vmem:[%s1 + $0x10c] sm:$0xf]
        %v512 = vld [vmem:[%s1 + $0x110] sm:$0xf]
        %v513 = vld [vmem:[%s1 + $0x114] sm:$0xf]
        %v514 = vld [vmem:[%s1 + $0x118] sm:$0xf]
        %v515 = vld [vmem:[%s1 + $0x11c] sm:$0xf]
        %v516 = vld [vmem:[%s1 + $0x120] sm:$0xf]
        %v517 = vld [vmem:[%s1 + $0x124] sm:$0xf]
        %v518 = vld [vmem:[%s1 + $0x128] sm:$0xf]
        %v519 = vld [vmem:[%s1 + $0x12c] sm:$0xf]
        %v520 = vld [vmem:[%s1 + $0x130] sm:$0xf]
        %v521 = vld [vmem:[%s1 + $0x134] sm:$0xf]
        %v522 = vld [vmem:[%s1 + $0x138] sm:$0xf]
        %v523 = vld [vmem:[%s1 + $0x13c] sm:$0xf]
        %v524 = vld [vmem:[%s1 + $0x140] sm:$0xf]
        %v525 = vld [vmem:[%s1 + $0x144] sm:$0xf]
        %v526 = vld [vmem:[%s1 + $0x148] sm:$0xf]
        %v527 = vld [vmem:[%s1 + $0x14c] sm:$0xf]
        %v528 = vld [vmem:[%s1 + $0x150] sm:$0xf]
        %v529 = vld [vmem:[%s1 + $0x154] sm:$0xf]
        %v530 = vld [vmem:[%s1 + $0x158] sm:$0xf]
        %v531 = vld [vmem:[%s1 + $0x15c] sm:$0xf]
        %v532 = vld [vmem:[%s1 + $0x160] sm:$0xf]
        %v533 = vld [vmem:[%s1 + $0x164] sm:$0xf]
        %v534 = vld [vmem:[%s1 + $0x168] sm:$0xf]
        %v535 = vld [vmem:[%s1 + $0x16c] sm:$0xf]
        %v536 = vld [vmem:[%s1 + $0x170] sm:$0xf]
        %v537 = vld [vmem:[%s1 + $0x174] sm:$0xf]
        %v538 = vld [vmem:[%s1 + $0x178] sm:$0xf]
        %v539 = vld [vmem:[%s1 + $0x17c] sm:$0xf]
        %v540 = vld [vmem:[%s1 + $0x180] sm:$0xf]
        %v541 = vld [vmem:[%s1 + $0x184] sm:$0xf]
        %v542 = vld [vmem:[%s1 + $0x188] sm:$0xf]
        %v543 = vld [vmem:[%s1 + $0x18c] sm:$0xf]
        %v544 = vld [vmem:[%s1 + $0x190] sm:$0xf]
        %v545 = vld [vmem:[%s1 + $0x194] sm:$0xf]
        %v546 = vld [vmem:[%s1 + $0x198] sm:$0xf]
        %v547 = vld [vmem:[%s1 + $0x19c] sm:$0xf]
        %v548 = vld [vmem:[%s1 + $0x1a0] sm:$0xf]
        %v549 = vld [vmem:[%s1 + $0x1a4] sm:$0xf]
        %v550 = vld [vmem:[%s1 + $0x1a8] sm:$0xf]
        %v551 = vld [vmem:[%s1 + $0x1ac] sm:$0xf]
        %v552 = vld [vmem:[%s1 + $0x1b0] sm:$0xf]
        %v553 = vld [vmem:[%s1 + $0x1b4] sm:$0xf]
        %v554 = vld [vmem:[%s1 + $0x1b8] sm:$0xf]
        %v555 = vld [vmem:[%s1 + $0x1bc] sm:$0xf]
        %v556 = vld [vmem:[%s1 + $0x1c0] sm:$0xf]
        %v557 = vld [vmem:[%s1 + $0x1c4] sm:$0xf]
        %v558 = vld [vmem:[%s1 + $0x1c8] sm:$0xf]
        %v559 = vld [vmem:[%s1 + $0x1cc] sm:$0xf]
        %v560 = vld [vmem:[%s1 + $0x1d0] sm:$0xf]
        %v561 = vld [vmem:[%s1 + $0x1d4] sm:$0xf]
        %v562 = vld [vmem:[%s1 + $0x1d8] sm:$0xf]
        %v563 = vld [vmem:[%s1 + $0x1dc] sm:$0xf]
        %v564 = vld [vmem:[%s1 + $0x1e0] sm:$0xf]
        %v565 = vld [vmem:[%s1 + $0x1e4] sm:$0xf]
        %v566 = vld [vmem:[%s1 + $0x1e8] sm:$0xf]
        %v567 = vld [vmem:[%s1 + $0x1ec] sm:$0xf]
        %v568 = vld [vmem:[%s1 + $0x1f0] sm:$0xf]
        %v569 = vld [vmem:[%s1 + $0x1f4] sm:$0xf]
        %v570 = vld [vmem:[%s1 + $0x1f8] sm:$0xf]
        %v571 = vld [vmem:[%s1 + $0x1fc] sm:$0xf]
        %v572 = vld [vmem:[%s1 + $0x200] sm:$0xf]
        %v573 = vld [vmem:[%s1 + $0x204] sm:$0xf]
        %v574 = vld [vmem:[%s1 + $0x208] sm:$0xf]
        %v575 = vld [vmem:[%s1 + $0x20c] sm:$0xf]
        %v576 = vld [vmem:[%s1 + $0x210] sm:$0xf]
        %v577 = vld [vmem:[%s1 + $0x214] sm:$0xf]
        %v578 = vld [vmem:[%s1 + $0x218] sm:$0xf]
        %v579 = vld [vmem:[%s1 + $0x21c] sm:$0xf]
        %v580 = vld [vmem:[%s1 + $0x220] sm:$0xf]
        %v581 = vld [vmem:[%s1 + $0x224] sm:$0xf]
        %v582 = vld [vmem:[%s1 + $0x228] sm:$0xf]
        %v583 = vld [vmem:[%s1 + $0x22c] sm:$0xf]
        %v584 = vld [vmem:[%s1 + $0x230] sm:$0xf]
        %v585 = vld [vmem:[%s1 + $0x234] sm:$0xf]
        %v586 = vld [vmem:[%s1 + $0x238] sm:$0xf]
        %v587 = vld [vmem:[%s1 + $0x23c] sm:$0xf]
        %v588 = vld [vmem:[%s1 + $0x240] sm:$0xf]
        %v589 = vld [vmem:[%s1 + $0x244] sm:$0xf]
        %v590 = vld [vmem:[%s1 + $0x248] sm:$0xf]
        %v591 = vld [vmem:[%s1 + $0x24c] sm:$0xf]
        %v592 = vld [vmem:[%s1 + $0x250] sm:$0xf]
        %v593 = vld [vmem:[%s1 + $0x254] sm:$0xf]
        %v594 = vld [vmem:[%s1 + $0x258] sm:$0xf]
        %v595 = vld [vmem:[%s1 + $0x25c] sm:$0xf]
        %v596 = vld [vmem:[%s1 + $0x260] sm:$0xf]
        %v597 = vld [vmem:[%s1 + $0x264] sm:$0xf]
        %v598 = vld [vmem:[%s1 + $0x268] sm:$0xf]
        %v599 = vld [vmem:[%s1 + $0x26c] sm:$0xf]
        %v600 = vld [vmem:[%s1 + $0x270] sm:$0xf]
        %v601 = vld [vmem:[%s1 + $0x274] sm:$0xf]
        %v602 = vld [vmem:[%s1 + $0x278] sm:$0xf]
        %v603 = vld [vmem:[%s1 + $0x27c] sm:$0xf]
        %v719 = vunpack.c.l.b16 %v329
        %v720 = vunpack.c.h.b16 %v329
        %v721 = vunpack.c.l.b16 %v330
        %v722 = vunpack.c.h.b16 %v330
        %v723 = vunpack.c.l.b16 %v331
        %v724 = vunpack.c.h.b16 %v331
        %v725 = vunpack.c.l.b16 %v332
        %v726 = vunpack.c.h.b16 %v332
        %v727 = vunpack.c.l.b16 %v333
        %v728 = vunpack.c.h.b16 %v333
        %v729 = vunpack.c.l.b16 %v334
        %v730 = vunpack.c.h.b16 %v334
        %v731 = vunpack.c.l.b16 %v335
        %v732 = vunpack.c.h.b16 %v335
        %v733 = vunpack.c.l.b16 %v336
        %v734 = vunpack.c.h.b16 %v336
        %v735 = vunpack.c.l.b16 %v337
        %v736 = vunpack.c.h.b16 %v337
        %v737 = vunpack.c.l.b16 %v338
        %v738 = vunpack.c.h.b16 %v338
        %v739 = vunpack.c.l.b16 %v339
        %v740 = vunpack.c.h.b16 %v339
        %v741 = vunpack.c.l.b16 %v340
        %v742 = vunpack.c.h.b16 %v340
        %v743 = vunpack.c.l.b16 %v341
        %v744 = vunpack.c.h.b16 %v341
        %v745 = vunpack.c.l.b16 %v342
        %v746 = vunpack.c.h.b16 %v342
        %v747 = vunpack.c.l.b16 %v343
        %v748 = vunpack.c.h.b16 %v343
        %v749 = vunpack.c.l.b16 %v344
        %v750 = vunpack.c.h.b16 %v344
        %v751 = vunpack.c.l.b16 %v345
        %v752 = vunpack.c.h.b16 %v345
        %v753 = vunpack.c.l.b16 %v346
        %v754 = vunpack.c.h.b16 %v346
        %v755 = vunpack.c.l.b16 %v347
        %v756 = vunpack.c.h.b16 %v347
        %v757 = vunpack.c.l.b16 %v348
        %v758 = vunpack.c.h.b16 %v348
        %v759 = vunpack.c.l.b16 %v349
        %v760 = vunpack.c.h.b16 %v349
        %v761 = vunpack.c.l.b16 %v350
        %v762 = vunpack.c.h.b16 %v350
        %v763 = vunpack.c.l.b16 %v351
        %v764 = vunpack.c.h.b16 %v351
        %v765 = vunpack.c.l.b16 %v352
        %v766 = vunpack.c.h.b16 %v352
        %v767 = vunpack.c.l.b16 %v353
        %v768 = vunpack.c.h.b16 %v353
        %v769 = vunpack.c.l.b16 %v354
        %v770 = vunpack.c.h.b16 %v354
        %v771 = vunpack.c.l.b16 %v355
        %v772 = vunpack.c.h.b16 %v355
        %v773 = vunpack.c.l.b16 %v356
        %v774 = vunpack.c.h.b16 %v356
        %v775 = vunpack.c.l.b16 %v357
        %v776 = vunpack.c.h.b16 %v357
        %v777 = vunpack.c.l.b16 %v358
        %v778 = vunpack.c.h.b16 %v358
        %v779 = vunpack.c.l.b16 %v359
        %v780 = vunpack.c.h.b16 %v359
        %v781 = vunpack.c.l.b16 %v360
        %v782 = vunpack.c.h.b16 %v360
        %v783 = vunpack.c.l.b16 %v361
        %v784 = vunpack.c.h.b16 %v361
        %v785 = vunpack.c.l.b16 %v362
        %v786 = vunpack.c.h.b16 %v362
        %v787 = vunpack.c.l.b16 %v363
        %v788 = vunpack.c.h.b16 %v363
        %v789 = vunpack.c.l.b16 %v364
        %v790 = vunpack.c.h.b16 %v364
        %v791 = vunpack.c.l.b16 %v365
        %v792 = vunpack.c.h.b16 %v365
        %v793 = vunpack.c.l.b16 %v366
        %v794 = vunpack.c.h.b16 %v366
        %v795 = vunpack.c.l.b16 %v367
        %v796 = vunpack.c.h.b16 %v367
        %v797 = vunpack.c.l.b16 %v368
        %v798 = vunpack.c.h.b16 %v368
        %v799 = vunpack.c.l.b16 %v369
        %v800 = vunpack.c.h.b16 %v369
        %v801 = vunpack.c.l.b16 %v370
        %v802 = vunpack.c.h.b16 %v370
        %v803 = vunpack.c.l.b16 %v371
        %v804 = vunpack.c.h.b16 %v371
        %v805 = vunpack.c.l.b16 %v372
        %v806 = vunpack.c.h.b16 %v372
        %v807 = vunpack.c.l.b16 %v373
        %v808 = vunpack.c.h.b16 %v373
        %v809 = vunpack.c.l.b16 %v374
        %v810 = vunpack.c.h.b16 %v374
        %v811 = vunpack.c.l.b16 %v375
        %v812 = vunpack.c.h.b16 %v375
        %v813 = vunpack.c.l.b16 %v376
        %v814 = vunpack.c.h.b16 %v376
        %v815 = vunpack.c.l.b16 %v377
        %v816 = vunpack.c.h.b16 %v377
        %v817 = vunpack.c.l.b16 %v378
        %v818 = vunpack.c.h.b16 %v378
        %v819 = vunpack.c.l.b16 %v379
        %v820 = vunpack.c.h.b16 %v379
        %v821 = vunpack.c.l.b16 %v380
        %v822 = vunpack.c.h.b16 %v380
        %v823 = vunpack.c.l.b16 %v381
        %v824 = vunpack.c.h.b16 %v381
        %v825 = vunpack.c.l.b16 %v382
        %v826 = vunpack.c.h.b16 %v382
        %v827 = vunpack.c.l.b16 %v383
        %v828 = vunpack.c.h.b16 %v383
        %v829 = vunpack.c.l.b16 %v384
        %v830 = vunpack.c.h.b16 %v384
        %v831 = vunpack.c.l.b16 %v385
        %v832 = vunpack.c.h.b16 %v385
        %v833 = vunpack.c.l.b16 %v386
        %v834 = vunpack.c.h.b16 %v386
        %v835 = vunpack.c.l.b16 %v387
        %v836 = vunpack.c.h.b16 %v387
        %v837 = vunpack.c.l.b16 %v388
        %v838 = vunpack.c.h.b16 %v388
        %v839 = vunpack.c.l.b16 %v389
        %v840 = vunpack.c.h.b16 %v389
        %v841 = vunpack.c.l.b16 %v390
        %v842 = vunpack.c.h.b16 %v390
        %v843 = vunpack.c.l.b16 %v391
        %v844 = vunpack.c.h.b16 %v391
        %v845 = vunpack.c.l.b16 %v392
        %v846 = vunpack.c.h.b16 %v392
        %v847 = vunpack.c.l.b16 %v393
        %v848 = vunpack.c.h.b16 %v393
        %v849 = vunpack.c.l.b16 %v394
        %v850 = vunpack.c.h.b16 %v394
        %v851 = vunpack.c.l.b16 %v395
        %v852 = vunpack.c.h.b16 %v395
        %v853 = vunpack.c.l.b16 %v396
        %v854 = vunpack.c.h.b16 %v396
        %v855 = vunpack.c.l.b16 %v397
        %v856 = vunpack.c.h.b16 %v397
        %v857 = vunpack.c.l.b16 %v398
        %v858 = vunpack.c.h.b16 %v398
        %v859 = vunpack.c.l.b16 %v399
        %v860 = vunpack.c.h.b16 %v399
        %v861 = vunpack.c.l.b16 %v400
        %v862 = vunpack.c.h.b16 %v400
        %v863 = vunpack.c.l.b16 %v401
        %v864 = vunpack.c.h.b16 %v401
        %v865 = vunpack.c.l.b16 %v402
        %v866 = vunpack.c.h.b16 %v402
        %v867 = vunpack.c.l.b16 %v403
        %v868 = vunpack.c.h.b16 %v403
        %v869 = vunpack.c.l.b16 %v404
        %v870 = vunpack.c.h.b16 %v404
        %v871 = vunpack.c.l.b16 %v405
        %v872 = vunpack.c.h.b16 %v405
        %v873 = vunpack.c.l.b16 %v406
        %v874 = vunpack.c.h.b16 %v406
        %v875 = vunpack.c.l.b16 %v407
        %v876 = vunpack.c.h.b16 %v407
        %v877 = vunpack.c.l.b16 %v408
        %v878 = vunpack.c.h.b16 %v408
        %v879 = vunpack.c.l.b16 %v409
        %v880 = vunpack.c.h.b16 %v409
        %v881 = vunpack.c.l.b16 %v410
        %v882 = vunpack.c.h.b16 %v410
        %v883 = vunpack.c.l.b16 %v411
        %v884 = vunpack.c.h.b16 %v411
        %v885 = vunpack.c.l.b16 %v412
        %v886 = vunpack.c.h.b16 %v412
        %v887 = vunpack.c.l.b16 %v413
        %v888 = vunpack.c.h.b16 %v413
        %v889 = vunpack.c.l.b16 %v414
        %v890 = vunpack.c.h.b16 %v414
        %v891 = vunpack.c.l.b16 %v415
        %v892 = vunpack.c.h.b16 %v415
        %v893 = vunpack.c.l.b16 %v416
        %v894 = vunpack.c.h.b16 %v416
        %v895 = vunpack.c.l.b16 %v417
        %v896 = vunpack.c.h.b16 %v417
        %v897 = vunpack.c.l.b16 %v418
        %v898 = vunpack.c.h.b16 %v418
        %v899 = vunpack.c.l.b16 %v419
        %v900 = vunpack.c.h.b16 %v419
        %v901 = vunpack.c.l.b16 %v420
        %v902 = vunpack.c.h.b16 %v420
        %v903 = vunpack.c.l.b16 %v421
        %v904 = vunpack.c.h.b16 %v421
        %v905 = vunpack.c.l.b16 %v422
        %v906 = vunpack.c.h.b16 %v422
        %v907 = vunpack.c.l.b16 %v423
        %v908 = vunpack.c.h.b16 %v423
        %v909 = vunpack.c.l.b16 %v424
        %v910 = vunpack.c.h.b16 %v424
        %v911 = vunpack.c.l.b16 %v425
        %v912 = vunpack.c.h.b16 %v425
        %v913 = vunpack.c.l.b16 %v426
        %v914 = vunpack.c.h.b16 %v426
        %v915 = vunpack.c.l.b16 %v427
        %v916 = vunpack.c.h.b16 %v427
        %v917 = vunpack.c.l.b16 %v428
        %v918 = vunpack.c.h.b16 %v428
        %v919 = vunpack.c.l.b16 %v429
        %v920 = vunpack.c.h.b16 %v429
        %v921 = vunpack.c.l.b16 %v430
        %v922 = vunpack.c.h.b16 %v430
        %v923 = vunpack.c.l.b16 %v431
        %v924 = vunpack.c.h.b16 %v431
        %v925 = vunpack.c.l.b16 %v432
        %v926 = vunpack.c.h.b16 %v432
        %v927 = vunpack.c.l.b16 %v433
        %v928 = vunpack.c.h.b16 %v433
        %v929 = vunpack.c.l.b16 %v434
        %v930 = vunpack.c.h.b16 %v434
        %v931 = vunpack.c.l.b16 %v435
        %v932 = vunpack.c.h.b16 %v435
        %v933 = vunpack.c.l.b16 %v436
        %v934 = vunpack.c.h.b16 %v436
        %v935 = vunpack.c.l.b16 %v437
        %v936 = vunpack.c.h.b16 %v437
        %v937 = vunpack.c.l.b16 %v438
        %v938 = vunpack.c.h.b16 %v438
        %v939 = vunpack.c.l.b16 %v439
        %v940 = vunpack.c.h.b16 %v439
        %v941 = vunpack.c.l.b16 %v440
        %v942 = vunpack.c.h.b16 %v440
        %v943 = vunpack.c.l.b16 %v441
        %v944 = vunpack.c.h.b16 %v441
        %v945 = vunpack.c.l.b16 %v442
        %v946 = vunpack.c.h.b16 %v442
        %v947 = vunpack.c.l.b16 %v443
        %v948 = vunpack.c.h.b16 %v443
        %v949 = vpack.c.b16 %v729, %v719
        %v950 = vpack.c.b16 %v730, %v720
        %v951 = vpack.c.b16 %v731, %v721
        %v952 = vpack.c.b16 %v732, %v722
        %v953 = vpack.c.b16 %v733, %v723
        %v954 = vpack.c.b16 %v734, %v724
        %v955 = vpack.c.b16 %v735, %v725
        %v956 = vpack.c.b16 %v736, %v726
        %v957 = vpack.c.b16 %v737, %v727
        %v958 = vpack.c.b16 %v738, %v728
        %v959 = vpack.c.b16 %v749, %v739
        %v960 = vpack.c.b16 %v750, %v740
        %v961 = vpack.c.b16 %v751, %v741
        %v962 = vpack.c.b16 %v752, %v742
        %v963 = vpack.c.b16 %v753, %v743
        %v964 = vpack.c.b16 %v754, %v744
        %v965 = vpack.c.b16 %v755, %v745
        %v966 = vpack.c.b16 %v756, %v746
        %v967 = vpack.c.b16 %v757, %v747
        %v968 = vpack.c.b16 %v758, %v748
        %v969 = vpack.c.b16 %v769, %v759
        %v970 = vpack.c.b16 %v770, %v760
        %v971 = vpack.c.b16 %v771, %v761
        %v972 = vpack.c.b16 %v772, %v762
        %v973 = vpack.c.b16 %v773, %v763
        %v974 = vpack.c.b16 %v774, %v764
        %v975 = vpack.c.b16 %v775, %v765
        %v976 = vpack.c.b16 %v776, %v766
        %v977 = vpack.c.b16 %v777, %v767
        %v978 = vpack.c.b16 %v778, %v768
        %v979 = vpack.c.b16 %v789, %v779
        %v980 = vpack.c.b16 %v790, %v780
        %v981 = vpack.c.b16 %v791, %v781
        %v982 = vpack.c.b16 %v792, %v782
        %v983 = vpack.c.b16 %v793, %v783
        %v984 = vpack.c.b16 %v794, %v784
        %v985 = vpack.c.b16 %v795, %v785
        %v986 = vpack.c.b16 %v796, %v786
        %v987 = vpack.c.b16 %v797, %v787
        %v988 = vpack.c.b16 %v798, %v788
        %v989 = vpack.c.b16 %v809, %v799
        %v990 = vpack.c.b16 %v810, %v800
        %v991 = vpack.c.b16 %v811, %v801
        %v992 = vpack.c.b16 %v812, %v802
        %v993 = vpack.c.b16 %v813, %v803
        %v994 = vpack.c.b16 %v814, %v804
        %v995 = vpack.c.b16 %v815, %v805
        %v996 = vpack.c.b16 %v816, %v806
        %v997 = vpack.c.b16 %v817, %v807
        %v998 = vpack.c.b16 %v818, %v808
        %v999 = vpack.c.b16 %v829, %v819
        %v1000 = vpack.c.b16 %v830, %v820
        %v1001 = vpack.c.b16 %v831, %v821
        %v1002 = vpack.c.b16 %v832, %v822
        %v1003 = vpack.c.b16 %v833, %v823
        %v1004 = vpack.c.b16 %v834, %v824
        %v1005 = vpack.c.b16 %v835, %v825
        %v1006 = vpack.c.b16 %v836, %v826
        %v1007 = vpack.c.b16 %v837, %v827
        %v1008 = vpack.c.b16 %v838, %v828
        %v1009 = vpack.c.b16 %v849, %v839
        %v1010 = vpack.c.b16 %v850, %v840
        %v1011 = vpack.c.b16 %v851, %v841
        %v1012 = vpack.c.b16 %v852, %v842
        %v1013 = vpack.c.b16 %v853, %v843
        %v1014 = vpack.c.b16 %v854, %v844
        %v1015 = vpack.c.b16 %v855, %v845
        %v1016 = vpack.c.b16 %v856, %v846
        %v1017 = vpack.c.b16 %v857, %v847
        %v1018 = vpack.c.b16 %v858, %v848
        %v1019 = vpack.c.b16 %v869, %v859
        %v1020 = vpack.c.b16 %v870, %v860
        %v1021 = vpack.c.b16 %v871, %v861
        %v1022 = vpack.c.b16 %v872, %v862
        %v1023 = vpack.c.b16 %v873, %v863
        %v1024 = vpack.c.b16 %v874, %v864
        %v1025 = vpack.c.b16 %v875, %v865
        %v1026 = vpack.c.b16 %v876, %v866
        %v1027 = vpack.c.b16 %v877, %v867
        %v1028 = vpack.c.b16 %v878, %v868
        %v1029 = vpack.c.b16 %v889, %v879
        %v1030 = vpack.c.b16 %v890, %v880
        %v1031 = vpack.c.b16 %v891, %v881
        %v1032 = vpack.c.b16 %v892, %v882
        %v1033 = vpack.c.b16 %v893, %v883
        %v1034 = vpack.c.b16 %v894, %v884
        %v1035 = vpack.c.b16 %v895, %v885
        %v1036 = vpack.c.b16 %v896, %v886
        %v1037 = vpack.c.b16 %v897, %v887
        %v1038 = vpack.c.b16 %v898, %v888
        %v1039 = vpack.c.b16 %v909, %v899
        %v1040 = vpack.c.b16 %v910, %v900
        %v1041 = vpack.c.b16 %v911, %v901
        %v1042 = vpack.c.b16 %v912, %v902
        %v1043 = vpack.c.b16 %v913, %v903
        %v1044 = vpack.c.b16 %v914, %v904
        %v1045 = vpack.c.b16 %v915, %v905
        %v1046 = vpack.c.b16 %v916, %v906
        %v1047 = vpack.c.b16 %v917, %v907
        %v1048 = vpack.c.b16 %v918, %v908
        %v1049 = vpack.c.b16 %v929, %v919
        %v1050 = vpack.c.b16 %v930, %v920
        %v1051 = vpack.c.b16 %v931, %v921
        %v1052 = vpack.c.b16 %v932, %v922
        %v1053 = vpack.c.b16 %v933, %v923
        %v1054 = vpack.c.b16 %v934, %v924
        %v1055 = vpack.c.b16 %v935, %v925
        %v1056 = vpack.c.b16 %v936, %v926
        %v1057 = vpack.c.b16 %v937, %v927
        %v1058 = vpack.c.b16 %v938, %v928
        %v1059 = vpack.c.b16 %v939, %v939
        %v1060 = vpack.c.b16 %v940, %v940
        %v1061 = vpack.c.b16 %v941, %v941
        %v1062 = vpack.c.b16 %v942, %v942
        %v1063 = vpack.c.b16 %v943, %v943
        %v1064 = vpack.c.b16 %v944, %v944
        %v1065 = vpack.c.b16 %v945, %v945
        %v1066 = vpack.c.b16 %v946, %v946
        %v1067 = vpack.c.b16 %v947, %v947
        %v1068 = vpack.c.b16 %v948, %v948
        %v1349 = vunpack.c.l.b16 %v444
        %v1350 = vunpack.c.l.b16 %v445
        %v1351 = vunpack.c.l.b16 %v446
        %v1352 = vunpack.c.l.b16 %v447
        %v1353 = vunpack.c.l.b16 %v448
        %v1354 = vunpack.c.l.b16 %v449
        %v1355 = vunpack.c.l.b16 %v450
        %v1356 = vunpack.c.l.b16 %v451
        %v1357 = vunpack.c.l.b16 %v452
        %v1358 = vunpack.c.l.b16 %v453
        %v1359 = vunpack.c.l.b16 %v454
        %v1360 = vunpack.c.l.b16 %v455
        %v1361 = vunpack.c.l.b16 %v456
        %v1362 = vunpack.c.l.b16 %v457
        %v1363 = vunpack.c.l.b16 %v458
        %v1364 = vunpack.c.l.b16 %v459
        %v1365 = vunpack.c.l.b16 %v460
        %v1366 = vunpack.c.l.b16 %v461
        %v1367 = vunpack.c.l.b16 %v462
        %v1368 = vunpack.c.l.b16 %v463
        %v1369 = vunpack.c.l.b16 %v464
        %v1370 = vunpack.c.l.b16 %v465
        %v1371 = vunpack.c.l.b16 %v466
        %v1372 = vunpack.c.l.b16 %v467
        %v1373 = vunpack.c.l.b16 %v468
        %v1374 = vunpack.c.l.b16 %v469
        %v1375 = vunpack.c.l.b16 %v470
        %v1376 = vunpack.c.l.b16 %v471
        %v1377 = vunpack.c.l.b16 %v472
        %v1378 = vunpack.c.l.b16 %v473
        %v1379 = vunpack.c.l.b16 %v474
        %v1380 = vunpack.c.l.b16 %v475
        %v1381 = vunpack.c.l.b16 %v476
        %v1382 = vunpack.c.l.b16 %v477
        %v1383 = vunpack.c.l.b16 %v478
        %v1384 = vunpack.c.l.b16 %v479
        %v1385 = vunpack.c.l.b16 %v480
        %v1386 = vunpack.c.l.b16 %v481
        %v1387 = vunpack.c.l.b16 %v482
        %v1388 = vunpack.c.l.b16 %v483
        %v1389 = vunpack.c.l.b16 %v484
        %v1390 = vunpack.c.l.b16 %v485
        %v1391 = vunpack.c.l.b16 %v486
        %v1392 = vunpack.c.l.b16 %v487
        %v1393 = vunpack.c.l.b16 %v488
        %v1394 = vunpack.c.l.b16 %v489
        %v1395 = vunpack.c.l.b16 %v490
        %v1396 = vunpack.c.l.b16 %v491
        %v1397 = vunpack.c.l.b16 %v492
        %v1398 = vunpack.c.l.b16 %v493
        %v1399 = vunpack.c.l.b16 %v494
        %v1400 = vunpack.c.l.b16 %v495
        %v1401 = vunpack.c.l.b16 %v496
        %v1402 = vunpack.c.l.b16 %v497
        %v1403 = vunpack.c.l.b16 %v498
        %v1404 = vunpack.c.l.b16 %v499
        %v1405 = vunpack.c.l.b16 %v500
        %v1406 = vunpack.c.l.b16 %v501
        %v1407 = vunpack.c.l.b16 %v502
        %v1408 = vunpack.c.l.b16 %v503
        %v1409 = vunpack.c.l.b16 %v504
        %v1410 = vunpack.c.l.b16 %v505
        %v1411 = vunpack.c.l.b16 %v506
        %v1412 = vunpack.c.l.b16 %v507
        %v1413 = vunpack.c.l.b16 %v508
        %v1414 = vunpack.c.l.b16 %v509
        %v1415 = vunpack.c.l.b16 %v510
        %v1416 = vunpack.c.l.b16 %v511
        %v1417 = vunpack.c.l.b16 %v512
        %v1418 = vunpack.c.l.b16 %v513
        %v1419 = vunpack.c.l.b16 %v514
        %v1420 = vunpack.c.l.b16 %v515
        %v1421 = vunpack.c.l.b16 %v516
        %v1422 = vunpack.c.l.b16 %v517
        %v1423 = vunpack.c.l.b16 %v518
        %v1424 = vunpack.c.l.b16 %v519
        %v1425 = vunpack.c.l.b16 %v520
        %v1426 = vunpack.c.l.b16 %v521
        %v1427 = vunpack.c.l.b16 %v522
        %v1428 = vunpack.c.l.b16 %v523
        %v1429 = vunpack.c.l.b16 %v524
        %v1430 = vunpack.c.l.b16 %v525
        %v1431 = vunpack.c.l.b16 %v526
        %v1432 = vunpack.c.l.b16 %v527
        %v1433 = vunpack.c.l.b16 %v528
        %v1434 = vunpack.c.l.b16 %v529
        %v1435 = vunpack.c.l.b16 %v530
        %v1436 = vunpack.c.l.b16 %v531
        %v1437 = vunpack.c.l.b16 %v532
        %v1438 = vunpack.c.l.b16 %v533
        %v1439 = vunpack.c.l.b16 %v534
        %v1440 = vunpack.c.l.b16 %v535
        %v1441 = vunpack.c.l.b16 %v536
        %v1442 = vunpack.c.l.b16 %v537
        %v1443 = vunpack.c.l.b16 %v538
        %v1444 = vunpack.c.l.b16 %v539
        %v1445 = vunpack.c.l.b16 %v540
        %v1446 = vunpack.c.l.b16 %v541
        %v1447 = vunpack.c.l.b16 %v542
        %v1448 = vunpack.c.l.b16 %v543
        %v1449 = vunpack.c.l.b16 %v544
        %v1450 = vunpack.c.l.b16 %v545
        %v1451 = vunpack.c.l.b16 %v546
        %v1452 = vunpack.c.l.b16 %v547
        %v1453 = vunpack.c.l.b16 %v548
        %v1454 = vunpack.c.l.b16 %v549
        %v1455 = vunpack.c.l.b16 %v550
        %v1456 = vunpack.c.l.b16 %v551
        %v1457 = vunpack.c.l.b16 %v552
        %v1458 = vunpack.c.l.b16 %v553
        %v1459 = vunpack.c.l.b16 %v554
        %v1460 = vunpack.c.l.b16 %v555
        %v1461 = vunpack.c.l.b16 %v556
        %v1462 = vunpack.c.l.b16 %v557
        %v1463 = vunpack.c.l.b16 %v558
        %v1464 = vunpack.c.l.b16 %v559
        %v1465 = vunpack.c.l.b16 %v560
        %v1466 = vunpack.c.l.b16 %v561
        %v1467 = vunpack.c.l.b16 %v562
        %v1468 = vunpack.c.l.b16 %v563
        %v1469 = vunpack.c.l.b16 %v564
        %v1470 = vunpack.c.l.b16 %v565
        %v1471 = vunpack.c.l.b16 %v566
        %v1472 = vunpack.c.l.b16 %v567
        %v1473 = vunpack.c.l.b16 %v568
        %v1474 = vunpack.c.l.b16 %v569
        %v1475 = vunpack.c.l.b16 %v570
        %v1476 = vunpack.c.l.b16 %v571
        %v1477 = vunpack.c.l.b16 %v572
        %v1478 = vunpack.c.l.b16 %v573
        %v1479 = vunpack.c.l.b16 %v574
        %v1480 = vunpack.c.l.b16 %v575
        %v1481 = vunpack.c.l.b16 %v576
        %v1482 = vunpack.c.l.b16 %v577
        %v1483 = vunpack.c.l.b16 %v578
        %v1484 = vunpack.c.l.b16 %v579
        %v1485 = vunpack.c.l.b16 %v580
        %v1486 = vunpack.c.l.b16 %v581
        %v1487 = vunpack.c.l.b16 %v582
        %v1488 = vunpack.c.l.b16 %v583
        %v1489 = vunpack.c.l.b16 %v584
        %v1490 = vunpack.c.l.b16 %v585
        %v1491 = vunpack.c.l.b16 %v586
        %v1492 = vunpack.c.l.b16 %v587
        %v1493 = vunpack.c.l.b16 %v588
        %v1494 = vunpack.c.l.b16 %v589
        %v1495 = vunpack.c.l.b16 %v590
        %v1496 = vunpack.c.l.b16 %v591
        %v1497 = vunpack.c.l.b16 %v592
        %v1498 = vunpack.c.l.b16 %v593
        %v1499 = vunpack.c.l.b16 %v594
        %v1500 = vunpack.c.l.b16 %v595
        %v1501 = vunpack.c.l.b16 %v596
        %v1502 = vunpack.c.l.b16 %v597
        %v1503 = vunpack.c.l.b16 %v598
        %v1504 = vunpack.c.l.b16 %v599
        %v1505 = vunpack.c.l.b16 %v600
        %v1506 = vunpack.c.l.b16 %v601
        %v1507 = vunpack.c.l.b16 %v602
        %v1508 = vunpack.c.l.b16 %v603
        %v1509 = vpack.c.b16 %v1350, %v1349
        %v1510 = vpack.c.b16 %v1352, %v1351
        %v1511 = vpack.c.b16 %v1354, %v1353
        %v1512 = vpack.c.b16 %v1356, %v1355
        %v1513 = vpack.c.b16 %v1358, %v1357
        %v1514 = vpack.c.b16 %v1360, %v1359
        %v1515 = vpack.c.b16 %v1362, %v1361
        %v1516 = vpack.c.b16 %v1364, %v1363
        %v1517 = vpack.c.b16 %v1366, %v1365
        %v1518 = vpack.c.b16 %v1368, %v1367
        %v1519 = vpack.c.b16 %v1370, %v1369
        %v1520 = vpack.c.b16 %v1372, %v1371
        %v1521 = vpack.c.b16 %v1374, %v1373
        %v1522 = vpack.c.b16 %v1376, %v1375
        %v1523 = vpack.c.b16 %v1378, %v1377
        %v1524 = vpack.c.b16 %v1380, %v1379
        %v1525 = vpack.c.b16 %v1382, %v1381
        %v1526 = vpack.c.b16 %v1384, %v1383
        %v1527 = vpack.c.b16 %v1386, %v1385
        %v1528 = vpack.c.b16 %v1388, %v1387
        %v1529 = vpack.c.b16 %v1390, %v1389
        %v1530 = vpack.c.b16 %v1392, %v1391
        %v1531 = vpack.c.b16 %v1394, %v1393
        %v1532 = vpack.c.b16 %v1396, %v1395
        %v1533 = vpack.c.b16 %v1398, %v1397
        %v1534 = vpack.c.b16 %v1400, %v1399
        %v1535 = vpack.c.b16 %v1402, %v1401
        %v1536 = vpack.c.b16 %v1404, %v1403
        %v1537 = vpack.c.b16 %v1406, %v1405
        %v1538 = vpack.c.b16 %v1408, %v1407
        %v1539 = vpack.c.b16 %v1410, %v1409
        %v1540 = vpack.c.b16 %v1412, %v1411
        %v1541 = vpack.c.b16 %v1414, %v1413
        %v1542 = vpack.c.b16 %v1416, %v1415
        %v1543 = vpack.c.b16 %v1418, %v1417
        %v1544 = vpack.c.b16 %v1420, %v1419
        %v1545 = vpack.c.b16 %v1422, %v1421
        %v1546 = vpack.c.b16 %v1424, %v1423
        %v1547 = vpack.c.b16 %v1426, %v1425
        %v1548 = vpack.c.b16 %v1428, %v1427
        %v1549 = vpack.c.b16 %v1430, %v1429
        %v1550 = vpack.c.b16 %v1432, %v1431
        %v1551 = vpack.c.b16 %v1434, %v1433
        %v1552 = vpack.c.b16 %v1436, %v1435
        %v1553 = vpack.c.b16 %v1438, %v1437
        %v1554 = vpack.c.b16 %v1440, %v1439
        %v1555 = vpack.c.b16 %v1442, %v1441
        %v1556 = vpack.c.b16 %v1444, %v1443
        %v1557 = vpack.c.b16 %v1446, %v1445
        %v1558 = vpack.c.b16 %v1448, %v1447
        %v1559 = vpack.c.b16 %v1450, %v1449
        %v1560 = vpack.c.b16 %v1452, %v1451
        %v1561 = vpack.c.b16 %v1454, %v1453
        %v1562 = vpack.c.b16 %v1456, %v1455
        %v1563 = vpack.c.b16 %v1458, %v1457
        %v1564 = vpack.c.b16 %v1460, %v1459
        %v1565 = vpack.c.b16 %v1462, %v1461
        %v1566 = vpack.c.b16 %v1464, %v1463
        %v1567 = vpack.c.b16 %v1466, %v1465
        %v1568 = vpack.c.b16 %v1468, %v1467
        %v1569 = vpack.c.b16 %v1470, %v1469
        %v1570 = vpack.c.b16 %v1472, %v1471
        %v1571 = vpack.c.b16 %v1474, %v1473
        %v1572 = vpack.c.b16 %v1476, %v1475
        %v1573 = vpack.c.b16 %v1478, %v1477
        %v1574 = vpack.c.b16 %v1480, %v1479
        %v1575 = vpack.c.b16 %v1482, %v1481
        %v1576 = vpack.c.b16 %v1484, %v1483
        %v1577 = vpack.c.b16 %v1486, %v1485
        %v1578 = vpack.c.b16 %v1488, %v1487
        %v1579 = vpack.c.b16 %v1490, %v1489
        %v1580 = vpack.c.b16 %v1492, %v1491
        %v1581 = vpack.c.b16 %v1494, %v1493
        %v1582 = vpack.c.b16 %v1496, %v1495
        %v1583 = vpack.c.b16 %v1498, %v1497
        %v1584 = vpack.c.b16 %v1500, %v1499
        %v1585 = vpack.c.b16 %v1502, %v1501
        %v1586 = vpack.c.b16 %v1504, %v1503
        %v1587 = vpack.c.b16 %v1506, %v1505
        %v1588 = vpack.c.b16 %v1508, %v1507
        %1669 = vmatprep.subr.bf16.mxu0 0
        %1670 = vmatpush1.bf16.msra.mxu0 %v1516
        %1671 = vmatprep.subr.bf16.mxu0 0
        %1672 = vmatpush1.bf16.msra.mxu0 %v1515
        %1673 = vmatprep.subr.bf16.mxu0 0
        %1674 = vmatpush1.bf16.msra.mxu0 %v1514
        %1675 = vmatprep.subr.bf16.mxu0 0
        %1676 = vmatpush1.bf16.msra.mxu0 %v1513
        %1677 = vmatprep.subr.bf16.mxu0 0
        %1678 = vmatpush1.bf16.msra.mxu0 %v1512
        %1679 = vmatprep.subr.bf16.mxu0 0
        %1680 = vmatpush1.bf16.msra.mxu0 %v1511
        %1681 = vmatprep.subr.bf16.mxu0 0
        %1682 = vmatpush1.bf16.msra.mxu0 %v1510
        %1683 = vmatprep.subr.bf16.mxu0 0
        %1684 = vmatpush1.bf16.msra.mxu0 %v1509
        %1685 = vmatprep.subr.bf16.mxu0 0
        %1686 = vmatpush2.bf16.msra.mxu0 %v1524
        %1687 = vmatprep.subr.bf16.mxu0 0
        %1688 = vmatpush2.bf16.msra.mxu0 %v1523
        %1689 = vmatprep.subr.bf16.mxu0 0
        %1690 = vmatpush2.bf16.msra.mxu0 %v1522
        %1691 = vmatprep.subr.bf16.mxu0 0
        %1692 = vmatpush2.bf16.msra.mxu0 %v1521
        %1693 = vmatprep.subr.bf16.mxu0 0
        %1694 = vmatpush2.bf16.msra.mxu0 %v1520
        %1695 = vmatprep.subr.bf16.mxu0 0
        %1696 = vmatpush2.bf16.msra.mxu0 %v1519
        %1697 = vmatprep.subr.bf16.mxu0 0
        %1698 = vmatpush2.bf16.msra.mxu0 %v1518
        %1699 = vmatprep.subr.bf16.mxu0 0
        %1700 = vmatpush2.bf16.msra.mxu0 %v1517
        %1701 = vmatprep.mubr.bf16.mxu0 %v950
        %1702 = vmatmul.mubr.bf16.gmra.mxu0 %v949
        %v1703 = vpop.f32.mrf.mxu0
        %v1704 = vadd.f32 0.0, %v1703
        %v1705 = vpop.f32.mrf.mxu0
        %v1706 = vpop.f32.mrf.mxu0
        %v1707 = vadd.f32 0.0, %v1706
        %v1708 = vpop.f32.mrf.mxu0
        %1709 = vmatprep.mubr.bf16.mxu0 %v960
        %1710 = vmatmul.mubr.bf16.gmra.mxu0 %v959
        %v1711 = vpop.f32.mrf.mxu0
        %v1712 = vadd.f32 0.0, %v1711
        %v1713 = vpop.f32.mrf.mxu0
        %v1714 = vpop.f32.mrf.mxu0
        %v1715 = vadd.f32 0.0, %v1714
        %v1716 = vpop.f32.mrf.mxu0
        %1717 = vmatprep.mubr.bf16.mxu0 %v970
        %1718 = vmatmul.mubr.bf16.gmra.mxu0 %v969
        %v1719 = vpop.f32.mrf.mxu0
        %v1720 = vadd.f32 0.0, %v1719
        %v1721 = vpop.f32.mrf.mxu0
        %v1722 = vpop.f32.mrf.mxu0
        %v1723 = vadd.f32 0.0, %v1722
        %v1724 = vpop.f32.mrf.mxu0
        %1725 = vmatprep.mubr.bf16.mxu0 %v980
        %1726 = vmatmul.mubr.bf16.gmra.mxu0 %v979
        %v1727 = vpop.f32.mrf.mxu0
        %v1728 = vadd.f32 0.0, %v1727
        %v1729 = vpop.f32.mrf.mxu0
        %v1730 = vpop.f32.mrf.mxu0
        %v1731 = vadd.f32 0.0, %v1730
        %v1732 = vpop.f32.mrf.mxu0
        %1733 = vmatprep.mubr.bf16.mxu0 %v990
        %1734 = vmatmul.mubr.bf16.gmra.mxu0 %v989
        %v1735 = vpop.f32.mrf.mxu0
        %v1736 = vadd.f32 0.0, %v1735
        %v1737 = vpop.f32.mrf.mxu0
        %v1738 = vpop.f32.mrf.mxu0
        %v1739 = vadd.f32 0.0, %v1738
        %v1740 = vpop.f32.mrf.mxu0
        %1741 = vmatprep.mubr.bf16.mxu0 %v1000
        %1742 = vmatmul.mubr.bf16.gmra.mxu0 %v999
        %v1743 = vpop.f32.mrf.mxu0
        %v1744 = vadd.f32 0.0, %v1743
        %v1745 = vpop.f32.mrf.mxu0
        %v1746 = vpop.f32.mrf.mxu0
        %v1747 = vadd.f32 0.0, %v1746
        %v1748 = vpop.f32.mrf.mxu0
        %1749 = vmatprep.mubr.bf16.mxu0 %v1010
        %1750 = vmatmul.mubr.bf16.gmra.mxu0 %v1009
        %v1751 = vpop.f32.mrf.mxu0
        %v1752 = vadd.f32 0.0, %v1751
        %v1753 = vpop.f32.mrf.mxu0
        %v1754 = vpop.f32.mrf.mxu0
        %v1755 = vadd.f32 0.0, %v1754
        %v1756 = vpop.f32.mrf.mxu0
        %1757 = vmatprep.mubr.bf16.mxu0 %v1020
        %1758 = vmatmul.mubr.bf16.gmra.mxu0 %v1019
        %v1759 = vpop.f32.mrf.mxu0
        %v1760 = vadd.f32 0.0, %v1759
        %v1761 = vpop.f32.mrf.mxu0
        %v1762 = vpop.f32.mrf.mxu0
        %v1763 = vadd.f32 0.0, %v1762
        %v1764 = vpop.f32.mrf.mxu0
        %1765 = vmatprep.mubr.bf16.mxu0 %v1030
        %1766 = vmatmul.mubr.bf16.gmra.mxu0 %v1029
        %v1767 = vpop.f32.mrf.mxu0
        %v1768 = vadd.f32 0.0, %v1767
        %v1769 = vpop.f32.mrf.mxu0
        %v1770 = vpop.f32.mrf.mxu0
        %v1771 = vadd.f32 0.0, %v1770
        %v1772 = vpop.f32.mrf.mxu0
        %1773 = vmatprep.mubr.bf16.mxu0 %v1040
        %1774 = vmatmul.mubr.bf16.gmra.mxu0 %v1039
        %v1775 = vpop.f32.mrf.mxu0
        %v1776 = vadd.f32 0.0, %v1775
        %v1777 = vpop.f32.mrf.mxu0
        %v1778 = vpop.f32.mrf.mxu0
        %v1779 = vadd.f32 0.0, %v1778
        %v1780 = vpop.f32.mrf.mxu0
        %1781 = vmatprep.mubr.bf16.mxu0 %v1050
        %1782 = vmatmul.mubr.bf16.gmra.mxu0 %v1049
        %v1783 = vpop.f32.mrf.mxu0
        %v1784 = vadd.f32 0.0, %v1783
        %v1785 = vpop.f32.mrf.mxu0
        %v1786 = vpop.f32.mrf.mxu0
        %v1787 = vadd.f32 0.0, %v1786
        %v1788 = vpop.f32.mrf.mxu0
        %1789 = vmatprep.mubr.bf16.mxu0 %v1060
        %1790 = vmatmul.mubr.bf16.gmra.mxu0 %v1059
        %v1791 = vpop.f32.mrf.mxu0
        %v1792 = vadd.f32 0.0, %v1791
        %v1793 = vpop.f32.mrf.mxu0
        %v1794 = vpop.f32.mrf.mxu0
        %v1795 = vpop.f32.mrf.mxu0
        %1796 = vdwg.mxu0
        %1797 = vmatprep.subr.bf16.mxu0 0
        %1798 = vmatpush1.bf16.msra.mxu0 %v1532
        %1799 = vmatprep.subr.bf16.mxu0 0
        %1800 = vmatpush1.bf16.msra.mxu0 %v1531
        %1801 = vmatprep.subr.bf16.mxu0 0
        %1802 = vmatpush1.bf16.msra.mxu0 %v1530
        %1803 = vmatprep.subr.bf16.mxu0 0
        %1804 = vmatpush1.bf16.msra.mxu0 %v1529
        %1805 = vmatprep.subr.bf16.mxu0 0
        %1806 = vmatpush1.bf16.msra.mxu0 %v1528
        %1807 = vmatprep.subr.bf16.mxu0 0
        %1808 = vmatpush1.bf16.msra.mxu0 %v1527
        %1809 = vmatprep.subr.bf16.mxu0 0
        %1810 = vmatpush1.bf16.msra.mxu0 %v1526
        %1811 = vmatprep.subr.bf16.mxu0 0
        %1812 = vmatpush1.bf16.msra.mxu0 %v1525
        %1813 = vmatprep.subr.bf16.mxu0 0
        %1814 = vmatpush2.bf16.msra.mxu0 %v1540
        %1815 = vmatprep.subr.bf16.mxu0 0
        %1816 = vmatpush2.bf16.msra.mxu0 %v1539
        %1817 = vmatprep.subr.bf16.mxu0 0
        %1818 = vmatpush2.bf16.msra.mxu0 %v1538
        %1819 = vmatprep.subr.bf16.mxu0 0
        %1820 = vmatpush2.bf16.msra.mxu0 %v1537
        %1821 = vmatprep.subr.bf16.mxu0 0
        %1822 = vmatpush2.bf16.msra.mxu0 %v1536
        %1823 = vmatprep.subr.bf16.mxu0 0
        %1824 = vmatpush2.bf16.msra.mxu0 %v1535
        %1825 = vmatprep.subr.bf16.mxu0 0
        %1826 = vmatpush2.bf16.msra.mxu0 %v1534
        %1827 = vmatprep.subr.bf16.mxu0 0
        %1828 = vmatpush2.bf16.msra.mxu0 %v1533
        %1829 = vmatprep.mubr.bf16.mxu0 %v952
        %1830 = vmatmul.mubr.bf16.gmra.mxu0 %v951
        %v1831 = vpop.f32.mrf.mxu0
        %v1832 = vadd.f32 %v1704, %v1831
        %v1833 = vpop.f32.mrf.mxu0
        %v1834 = vpop.f32.mrf.mxu0
        %v1835 = vadd.f32 %v1707, %v1834
        %v1836 = vpop.f32.mrf.mxu0
        %1837 = vmatprep.mubr.bf16.mxu0 %v962
        %1838 = vmatmul.mubr.bf16.gmra.mxu0 %v961
        %v1839 = vpop.f32.mrf.mxu0
        %v1840 = vadd.f32 %v1712, %v1839
        %v1841 = vpop.f32.mrf.mxu0
        %v1842 = vpop.f32.mrf.mxu0
        %v1843 = vadd.f32 %v1715, %v1842
        %v1844 = vpop.f32.mrf.mxu0
        %1845 = vmatprep.mubr.bf16.mxu0 %v972
        %1846 = vmatmul.mubr.bf16.gmra.mxu0 %v971
        %v1847 = vpop.f32.mrf.mxu0
        %v1848 = vadd.f32 %v1720, %v1847
        %v1849 = vpop.f32.mrf.mxu0
        %v1850 = vpop.f32.mrf.mxu0
        %v1851 = vadd.f32 %v1723, %v1850
        %v1852 = vpop.f32.mrf.mxu0
        %1853 = vmatprep.mubr.bf16.mxu0 %v982
        %1854 = vmatmul.mubr.bf16.gmra.mxu0 %v981
        %v1855 = vpop.f32.mrf.mxu0
        %v1856 = vadd.f32 %v1728, %v1855
        %v1857 = vpop.f32.mrf.mxu0
        %v1858 = vpop.f32.mrf.mxu0
        %v1859 = vadd.f32 %v1731, %v1858
        %v1860 = vpop.f32.mrf.mxu0
        %1861 = vmatprep.mubr.bf16.mxu0 %v992
        %1862 = vmatmul.mubr.bf16.gmra.mxu0 %v991
        %v1863 = vpop.f32.mrf.mxu0
        %v1864 = vadd.f32 %v1736, %v1863
        %v1865 = vpop.f32.mrf.mxu0
        %v1866 = vpop.f32.mrf.mxu0
        %v1867 = vadd.f32 %v1739, %v1866
        %v1868 = vpop.f32.mrf.mxu0
        %1869 = vmatprep.mubr.bf16.mxu0 %v1002
        %1870 = vmatmul.mubr.bf16.gmra.mxu0 %v1001
        %v1871 = vpop.f32.mrf.mxu0
        %v1872 = vadd.f32 %v1744, %v1871
        %v1873 = vpop.f32.mrf.mxu0
        %v1874 = vpop.f32.mrf.mxu0
        %v1875 = vadd.f32 %v1747, %v1874
        %v1876 = vpop.f32.mrf.mxu0
        %1877 = vmatprep.mubr.bf16.mxu0 %v1012
        %1878 = vmatmul.mubr.bf16.gmra.mxu0 %v1011
        %v1879 = vpop.f32.mrf.mxu0
        %v1880 = vadd.f32 %v1752, %v1879
        %v1881 = vpop.f32.mrf.mxu0
        %v1882 = vpop.f32.mrf.mxu0
        %v1883 = vadd.f32 %v1755, %v1882
        %v1884 = vpop.f32.mrf.mxu0
        %1885 = vmatprep.mubr.bf16.mxu0 %v1022
        %1886 = vmatmul.mubr.bf16.gmra.mxu0 %v1021
        %v1887 = vpop.f32.mrf.mxu0
        %v1888 = vadd.f32 %v1760, %v1887
        %v1889 = vpop.f32.mrf.mxu0
        %v1890 = vpop.f32.mrf.mxu0
        %v1891 = vadd.f32 %v1763, %v1890
        %v1892 = vpop.f32.mrf.mxu0
        %1893 = vmatprep.mubr.bf16.mxu0 %v1032
        %1894 = vmatmul.mubr.bf16.gmra.mxu0 %v1031
        %v1895 = vpop.f32.mrf.mxu0
        %v1896 = vadd.f32 %v1768, %v1895
        %v1897 = vpop.f32.mrf.mxu0
        %v1898 = vpop.f32.mrf.mxu0
        %v1899 = vadd.f32 %v1771, %v1898
        %v1900 = vpop.f32.mrf.mxu0
        %1901 = vmatprep.mubr.bf16.mxu0 %v1042
        %1902 = vmatmul.mubr.bf16.gmra.mxu0 %v1041
        %v1903 = vpop.f32.mrf.mxu0
        %v1904 = vadd.f32 %v1776, %v1903
        %v1905 = vpop.f32.mrf.mxu0
        %v1906 = vpop.f32.mrf.mxu0
        %v1907 = vadd.f32 %v1779, %v1906
        %v1908 = vpop.f32.mrf.mxu0
        %1909 = vmatprep.mubr.bf16.mxu0 %v1052
        %1910 = vmatmul.mubr.bf16.gmra.mxu0 %v1051
        %v1911 = vpop.f32.mrf.mxu0
        %v1912 = vadd.f32 %v1784, %v1911
        %v1913 = vpop.f32.mrf.mxu0
        %v1914 = vpop.f32.mrf.mxu0
        %v1915 = vadd.f32 %v1787, %v1914
        %v1916 = vpop.f32.mrf.mxu0
        %1917 = vmatprep.mubr.bf16.mxu0 %v1062
        %1918 = vmatmul.mubr.bf16.gmra.mxu0 %v1061
        %v1919 = vpop.f32.mrf.mxu0
        %v1920 = vadd.f32 %v1792, %v1919
        %v1921 = vpop.f32.mrf.mxu0
        %v1922 = vpop.f32.mrf.mxu0
        %v1923 = vpop.f32.mrf.mxu0
        %1924 = vdwg.mxu0
        %1925 = vmatprep.subr.bf16.mxu0 0
        %1926 = vmatpush1.bf16.msra.mxu0 %v1548
        %1927 = vmatprep.subr.bf16.mxu0 0
        %1928 = vmatpush1.bf16.msra.mxu0 %v1547
        %1929 = vmatprep.subr.bf16.mxu0 0
        %1930 = vmatpush1.bf16.msra.mxu0 %v1546
        %1931 = vmatprep.subr.bf16.mxu0 0
        %1932 = vmatpush1.bf16.msra.mxu0 %v1545
        %1933 = vmatprep.subr.bf16.mxu0 0
        %1934 = vmatpush1.bf16.msra.mxu0 %v1544
        %1935 = vmatprep.subr.bf16.mxu0 0
        %1936 = vmatpush1.bf16.msra.mxu0 %v1543
        %1937 = vmatprep.subr.bf16.mxu0 0
        %1938 = vmatpush1.bf16.msra.mxu0 %v1542
        %1939 = vmatprep.subr.bf16.mxu0 0
        %1940 = vmatpush1.bf16.msra.mxu0 %v1541
        %1941 = vmatprep.subr.bf16.mxu0 0
        %1942 = vmatpush2.bf16.msra.mxu0 %v1556
        %1943 = vmatprep.subr.bf16.mxu0 0
        %1944 = vmatpush2.bf16.msra.mxu0 %v1555
        %1945 = vmatprep.subr.bf16.mxu0 0
        %1946 = vmatpush2.bf16.msra.mxu0 %v1554
        %1947 = vmatprep.subr.bf16.mxu0 0
        %1948 = vmatpush2.bf16.msra.mxu0 %v1553
        %1949 = vmatprep.subr.bf16.mxu0 0
        %1950 = vmatpush2.bf16.msra.mxu0 %v1552
        %1951 = vmatprep.subr.bf16.mxu0 0
        %1952 = vmatpush2.bf16.msra.mxu0 %v1551
        %1953 = vmatprep.subr.bf16.mxu0 0
        %1954 = vmatpush2.bf16.msra.mxu0 %v1550
        %1955 = vmatprep.subr.bf16.mxu0 0
        %1956 = vmatpush2.bf16.msra.mxu0 %v1549
        %1957 = vmatprep.mubr.bf16.mxu0 %v954
        %1958 = vmatmul.mubr.bf16.gmra.mxu0 %v953
        %v1959 = vpop.f32.mrf.mxu0
        %v1960 = vadd.f32 %v1832, %v1959
        %v1961 = vpop.f32.mrf.mxu0
        %v1962 = vpop.f32.mrf.mxu0
        %v1963 = vadd.f32 %v1835, %v1962
        %v1964 = vpop.f32.mrf.mxu0
        %1965 = vmatprep.mubr.bf16.mxu0 %v964
        %1966 = vmatmul.mubr.bf16.gmra.mxu0 %v963
        %v1967 = vpop.f32.mrf.mxu0
        %v1968 = vadd.f32 %v1840, %v1967
        %v1969 = vpop.f32.mrf.mxu0
        %v1970 = vpop.f32.mrf.mxu0
        %v1971 = vadd.f32 %v1843, %v1970
        %v1972 = vpop.f32.mrf.mxu0
        %1973 = vmatprep.mubr.bf16.mxu0 %v974
        %1974 = vmatmul.mubr.bf16.gmra.mxu0 %v973
        %v1975 = vpop.f32.mrf.mxu0
        %v1976 = vadd.f32 %v1848, %v1975
        %v1977 = vpop.f32.mrf.mxu0
        %v1978 = vpop.f32.mrf.mxu0
        %v1979 = vadd.f32 %v1851, %v1978
        %v1980 = vpop.f32.mrf.mxu0
        %1981 = vmatprep.mubr.bf16.mxu0 %v984
        %1982 = vmatmul.mubr.bf16.gmra.mxu0 %v983
        %v1983 = vpop.f32.mrf.mxu0
        %v1984 = vadd.f32 %v1856, %v1983
        %v1985 = vpop.f32.mrf.mxu0
        %v1986 = vpop.f32.mrf.mxu0
        %v1987 = vadd.f32 %v1859, %v1986
        %v1988 = vpop.f32.mrf.mxu0
        %1989 = vmatprep.mubr.bf16.mxu0 %v994
        %1990 = vmatmul.mubr.bf16.gmra.mxu0 %v993
        %v1991 = vpop.f32.mrf.mxu0
        %v1992 = vadd.f32 %v1864, %v1991
        %v1993 = vpop.f32.mrf.mxu0
        %v1994 = vpop.f32.mrf.mxu0
        %v1995 = vadd.f32 %v1867, %v1994
        %v1996 = vpop.f32.mrf.mxu0
        %1997 = vmatprep.mubr.bf16.mxu0 %v1004
        %1998 = vmatmul.mubr.bf16.gmra.mxu0 %v1003
        %v1999 = vpop.f32.mrf.mxu0
        %v2000 = vadd.f32 %v1872, %v1999
        %v2001 = vpop.f32.mrf.mxu0
        %v2002 = vpop.f32.mrf.mxu0
        %v2003 = vadd.f32 %v1875, %v2002
        %v2004 = vpop.f32.mrf.mxu0
        %2005 = vmatprep.mubr.bf16.mxu0 %v1014
        %2006 = vmatmul.mubr.bf16.gmra.mxu0 %v1013
        %v2007 = vpop.f32.mrf.mxu0
        %v2008 = vadd.f32 %v1880, %v2007
        %v2009 = vpop.f32.mrf.mxu0
        %v2010 = vpop.f32.mrf.mxu0
        %v2011 = vadd.f32 %v1883, %v2010
        %v2012 = vpop.f32.mrf.mxu0
        %2013 = vmatprep.mubr.bf16.mxu0 %v1024
        %2014 = vmatmul.mubr.bf16.gmra.mxu0 %v1023
        %v2015 = vpop.f32.mrf.mxu0
        %v2016 = vadd.f32 %v1888, %v2015
        %v2017 = vpop.f32.mrf.mxu0
        %v2018 = vpop.f32.mrf.mxu0
        %v2019 = vadd.f32 %v1891, %v2018
        %v2020 = vpop.f32.mrf.mxu0
        %2021 = vmatprep.mubr.bf16.mxu0 %v1034
        %2022 = vmatmul.mubr.bf16.gmra.mxu0 %v1033
        %v2023 = vpop.f32.mrf.mxu0
        %v2024 = vadd.f32 %v1896, %v2023
        %v2025 = vpop.f32.mrf.mxu0
        %v2026 = vpop.f32.mrf.mxu0
        %v2027 = vadd.f32 %v1899, %v2026
        %v2028 = vpop.f32.mrf.mxu0
        %2029 = vmatprep.mubr.bf16.mxu0 %v1044
        %2030 = vmatmul.mubr.bf16.gmra.mxu0 %v1043
        %v2031 = vpop.f32.mrf.mxu0
        %v2032 = vadd.f32 %v1904, %v2031
        %v2033 = vpop.f32.mrf.mxu0
        %v2034 = vpop.f32.mrf.mxu0
        %v2035 = vadd.f32 %v1907, %v2034
        %v2036 = vpop.f32.mrf.mxu0
        %2037 = vmatprep.mubr.bf16.mxu0 %v1054
        %2038 = vmatmul.mubr.bf16.gmra.mxu0 %v1053
        %v2039 = vpop.f32.mrf.mxu0
        %v2040 = vadd.f32 %v1912, %v2039
        %v2041 = vpop.f32.mrf.mxu0
        %v2042 = vpop.f32.mrf.mxu0
        %v2043 = vadd.f32 %v1915, %v2042
        %v2044 = vpop.f32.mrf.mxu0
        %2045 = vmatprep.mubr.bf16.mxu0 %v1064
        %2046 = vmatmul.mubr.bf16.gmra.mxu0 %v1063
        %v2047 = vpop.f32.mrf.mxu0
        %v2048 = vadd.f32 %v1920, %v2047
        %v2049 = vpop.f32.mrf.mxu0
        %v2050 = vpop.f32.mrf.mxu0
        %v2051 = vpop.f32.mrf.mxu0
        %2052 = vdwg.mxu0
        %2053 = vmatprep.subr.bf16.mxu0 0
        %2054 = vmatpush1.bf16.msra.mxu0 %v1564
        %2055 = vmatprep.subr.bf16.mxu0 0
        %2056 = vmatpush1.bf16.msra.mxu0 %v1563
        %2057 = vmatprep.subr.bf16.mxu0 0
        %2058 = vmatpush1.bf16.msra.mxu0 %v1562
        %2059 = vmatprep.subr.bf16.mxu0 0
        %2060 = vmatpush1.bf16.msra.mxu0 %v1561
        %2061 = vmatprep.subr.bf16.mxu0 0
        %2062 = vmatpush1.bf16.msra.mxu0 %v1560
        %2063 = vmatprep.subr.bf16.mxu0 0
        %2064 = vmatpush1.bf16.msra.mxu0 %v1559
        %2065 = vmatprep.subr.bf16.mxu0 0
        %2066 = vmatpush1.bf16.msra.mxu0 %v1558
        %2067 = vmatprep.subr.bf16.mxu0 0
        %2068 = vmatpush1.bf16.msra.mxu0 %v1557
        %2069 = vmatprep.subr.bf16.mxu0 0
        %2070 = vmatpush2.bf16.msra.mxu0 %v1572
        %2071 = vmatprep.subr.bf16.mxu0 0
        %2072 = vmatpush2.bf16.msra.mxu0 %v1571
        %2073 = vmatprep.subr.bf16.mxu0 0
        %2074 = vmatpush2.bf16.msra.mxu0 %v1570
        %2075 = vmatprep.subr.bf16.mxu0 0
        %2076 = vmatpush2.bf16.msra.mxu0 %v1569
        %2077 = vmatprep.subr.bf16.mxu0 0
        %2078 = vmatpush2.bf16.msra.mxu0 %v1568
        %2079 = vmatprep.subr.bf16.mxu0 0
        %2080 = vmatpush2.bf16.msra.mxu0 %v1567
        %2081 = vmatprep.subr.bf16.mxu0 0
        %2082 = vmatpush2.bf16.msra.mxu0 %v1566
        %2083 = vmatprep.subr.bf16.mxu0 0
        %2084 = vmatpush2.bf16.msra.mxu0 %v1565
        %2085 = vmatprep.mubr.bf16.mxu0 %v956
        %2086 = vmatmul.mubr.bf16.gmra.mxu0 %v955
        %v2087 = vpop.f32.mrf.mxu0
        %v2088 = vadd.f32 %v1960, %v2087
        %v2089 = vpop.f32.mrf.mxu0
        %v2090 = vpop.f32.mrf.mxu0
        %v2091 = vadd.f32 %v1963, %v2090
        %v2092 = vpop.f32.mrf.mxu0
        %2093 = vmatprep.mubr.bf16.mxu0 %v966
        %2094 = vmatmul.mubr.bf16.gmra.mxu0 %v965
        %v2095 = vpop.f32.mrf.mxu0
        %v2096 = vadd.f32 %v1968, %v2095
        %v2097 = vpop.f32.mrf.mxu0
        %v2098 = vpop.f32.mrf.mxu0
        %v2099 = vadd.f32 %v1971, %v2098
        %v2100 = vpop.f32.mrf.mxu0
        %2101 = vmatprep.mubr.bf16.mxu0 %v976
        %2102 = vmatmul.mubr.bf16.gmra.mxu0 %v975
        %v2103 = vpop.f32.mrf.mxu0
        %v2104 = vadd.f32 %v1976, %v2103
        %v2105 = vpop.f32.mrf.mxu0
        %v2106 = vpop.f32.mrf.mxu0
        %v2107 = vadd.f32 %v1979, %v2106
        %v2108 = vpop.f32.mrf.mxu0
        %2109 = vmatprep.mubr.bf16.mxu0 %v986
        %2110 = vmatmul.mubr.bf16.gmra.mxu0 %v985
        %v2111 = vpop.f32.mrf.mxu0
        %v2112 = vadd.f32 %v1984, %v2111
        %v2113 = vpop.f32.mrf.mxu0
        %v2114 = vpop.f32.mrf.mxu0
        %v2115 = vadd.f32 %v1987, %v2114
        %v2116 = vpop.f32.mrf.mxu0
        %2117 = vmatprep.mubr.bf16.mxu0 %v996
        %2118 = vmatmul.mubr.bf16.gmra.mxu0 %v995
        %v2119 = vpop.f32.mrf.mxu0
        %v2120 = vadd.f32 %v1992, %v2119
        %v2121 = vpop.f32.mrf.mxu0
        %v2122 = vpop.f32.mrf.mxu0
        %v2123 = vadd.f32 %v1995, %v2122
        %v2124 = vpop.f32.mrf.mxu0
        %2125 = vmatprep.mubr.bf16.mxu0 %v1006
        %2126 = vmatmul.mubr.bf16.gmra.mxu0 %v1005
        %v2127 = vpop.f32.mrf.mxu0
        %v2128 = vadd.f32 %v2000, %v2127
        %v2129 = vpop.f32.mrf.mxu0
        %v2130 = vpop.f32.mrf.mxu0
        %v2131 = vadd.f32 %v2003, %v2130
        %v2132 = vpop.f32.mrf.mxu0
        %2133 = vmatprep.mubr.bf16.mxu0 %v1016
        %2134 = vmatmul.mubr.bf16.gmra.mxu0 %v1015
        %v2135 = vpop.f32.mrf.mxu0
        %v2136 = vadd.f32 %v2008, %v2135
        %v2137 = vpop.f32.mrf.mxu0
        %v2138 = vpop.f32.mrf.mxu0
        %v2139 = vadd.f32 %v2011, %v2138
        %v2140 = vpop.f32.mrf.mxu0
        %2141 = vmatprep.mubr.bf16.mxu0 %v1026
        %2142 = vmatmul.mubr.bf16.gmra.mxu0 %v1025
        %v2143 = vpop.f32.mrf.mxu0
        %v2144 = vadd.f32 %v2016, %v2143
        %v2145 = vpop.f32.mrf.mxu0
        %v2146 = vpop.f32.mrf.mxu0
        %v2147 = vadd.f32 %v2019, %v2146
        %v2148 = vpop.f32.mrf.mxu0
        %2149 = vmatprep.mubr.bf16.mxu0 %v1036
        %2150 = vmatmul.mubr.bf16.gmra.mxu0 %v1035
        %v2151 = vpop.f32.mrf.mxu0
        %v2152 = vadd.f32 %v2024, %v2151
        %v2153 = vpop.f32.mrf.mxu0
        %v2154 = vpop.f32.mrf.mxu0
        %v2155 = vadd.f32 %v2027, %v2154
        %v2156 = vpop.f32.mrf.mxu0
        %2157 = vmatprep.mubr.bf16.mxu0 %v1046
        %2158 = vmatmul.mubr.bf16.gmra.mxu0 %v1045
        %v2159 = vpop.f32.mrf.mxu0
        %v2160 = vadd.f32 %v2032, %v2159
        %v2161 = vpop.f32.mrf.mxu0
        %v2162 = vpop.f32.mrf.mxu0
        %v2163 = vadd.f32 %v2035, %v2162
        %v2164 = vpop.f32.mrf.mxu0
        %2165 = vmatprep.mubr.bf16.mxu0 %v1056
        %2166 = vmatmul.mubr.bf16.gmra.mxu0 %v1055
        %v2167 = vpop.f32.mrf.mxu0
        %v2168 = vadd.f32 %v2040, %v2167
        %v2169 = vpop.f32.mrf.mxu0
        %v2170 = vpop.f32.mrf.mxu0
        %v2171 = vadd.f32 %v2043, %v2170
        %v2172 = vpop.f32.mrf.mxu0
        %2173 = vmatprep.mubr.bf16.mxu0 %v1066
        %2174 = vmatmul.mubr.bf16.gmra.mxu0 %v1065
        %v2175 = vpop.f32.mrf.mxu0
        %v2176 = vadd.f32 %v2048, %v2175
        %v2177 = vpop.f32.mrf.mxu0
        %v2178 = vpop.f32.mrf.mxu0
        %v2179 = vpop.f32.mrf.mxu0
        %2180 = vdwg.mxu0
        %2181 = vmatprep.subr.bf16.mxu0 0
        %2182 = vmatpush1.bf16.msra.mxu0 %v1580
        %2183 = vmatprep.subr.bf16.mxu0 0
        %2184 = vmatpush1.bf16.msra.mxu0 %v1579
        %2185 = vmatprep.subr.bf16.mxu0 0
        %2186 = vmatpush1.bf16.msra.mxu0 %v1578
        %2187 = vmatprep.subr.bf16.mxu0 0
        %2188 = vmatpush1.bf16.msra.mxu0 %v1577
        %2189 = vmatprep.subr.bf16.mxu0 0
        %2190 = vmatpush1.bf16.msra.mxu0 %v1576
        %2191 = vmatprep.subr.bf16.mxu0 0
        %2192 = vmatpush1.bf16.msra.mxu0 %v1575
        %2193 = vmatprep.subr.bf16.mxu0 0
        %2194 = vmatpush1.bf16.msra.mxu0 %v1574
        %2195 = vmatprep.subr.bf16.mxu0 0
        %2196 = vmatpush1.bf16.msra.mxu0 %v1573
        %2197 = vmatprep.subr.bf16.mxu0 0
        %2198 = vmatpush2.bf16.msra.mxu0 %v1588
        %2199 = vmatprep.subr.bf16.mxu0 0
        %2200 = vmatpush2.bf16.msra.mxu0 %v1587
        %2201 = vmatprep.subr.bf16.mxu0 0
        %2202 = vmatpush2.bf16.msra.mxu0 %v1586
        %2203 = vmatprep.subr.bf16.mxu0 0
        %2204 = vmatpush2.bf16.msra.mxu0 %v1585
        %2205 = vmatprep.subr.bf16.mxu0 0
        %2206 = vmatpush2.bf16.msra.mxu0 %v1584
        %2207 = vmatprep.subr.bf16.mxu0 0
        %2208 = vmatpush2.bf16.msra.mxu0 %v1583
        %2209 = vmatprep.subr.bf16.mxu0 0
        %2210 = vmatpush2.bf16.msra.mxu0 %v1582
        %2211 = vmatprep.subr.bf16.mxu0 0
        %2212 = vmatpush2.bf16.msra.mxu0 %v1581
        %2213 = vmatprep.mubr.bf16.mxu0 %v958
        %2214 = vmatmul.mubr.bf16.gmra.mxu0 %v957
        %v2215 = vpop.f32.mrf.mxu0
        %v2216 = vadd.f32 %v2088, %v2215
        %v2217 = vpop.f32.mrf.mxu0
        %v2218 = vpop.f32.mrf.mxu0
        %v2219 = vadd.f32 %v2091, %v2218
        %v2220 = vpop.f32.mrf.mxu0
        %2221 = vmatprep.mubr.bf16.mxu0 %v968
        %2222 = vmatmul.mubr.bf16.gmra.mxu0 %v967
        %v2223 = vpop.f32.mrf.mxu0
        %v2224 = vadd.f32 %v2096, %v2223
        %v2225 = vpop.f32.mrf.mxu0
        %v2226 = vpop.f32.mrf.mxu0
        %v2227 = vadd.f32 %v2099, %v2226
        %v2228 = vpop.f32.mrf.mxu0
        %2229 = vmatprep.mubr.bf16.mxu0 %v978
        %2230 = vmatmul.mubr.bf16.gmra.mxu0 %v977
        %v2231 = vpop.f32.mrf.mxu0
        %v2232 = vadd.f32 %v2104, %v2231
        %v2233 = vpop.f32.mrf.mxu0
        %v2234 = vpop.f32.mrf.mxu0
        %v2235 = vadd.f32 %v2107, %v2234
        %v2236 = vpop.f32.mrf.mxu0
        %2237 = vmatprep.mubr.bf16.mxu0 %v988
        %2238 = vmatmul.mubr.bf16.gmra.mxu0 %v987
        %v2239 = vpop.f32.mrf.mxu0
        %v2240 = vadd.f32 %v2112, %v2239
        %v2241 = vpop.f32.mrf.mxu0
        %v2242 = vpop.f32.mrf.mxu0
        %v2243 = vadd.f32 %v2115, %v2242
        %v2244 = vpop.f32.mrf.mxu0
        %2245 = vmatprep.mubr.bf16.mxu0 %v998
        %2246 = vmatmul.mubr.bf16.gmra.mxu0 %v997
        %v2247 = vpop.f32.mrf.mxu0
        %v2248 = vadd.f32 %v2120, %v2247
        %v2249 = vpop.f32.mrf.mxu0
        %v2250 = vpop.f32.mrf.mxu0
        %v2251 = vadd.f32 %v2123, %v2250
        %v2252 = vpop.f32.mrf.mxu0
        %2253 = vmatprep.mubr.bf16.mxu0 %v1008
        %2254 = vmatmul.mubr.bf16.gmra.mxu0 %v1007
        %v2255 = vpop.f32.mrf.mxu0
        %v2256 = vadd.f32 %v2128, %v2255
        %v2257 = vpop.f32.mrf.mxu0
        %v2258 = vpop.f32.mrf.mxu0
        %v2259 = vadd.f32 %v2131, %v2258
        %v2260 = vpop.f32.mrf.mxu0
        %2261 = vmatprep.mubr.bf16.mxu0 %v1018
        %2262 = vmatmul.mubr.bf16.gmra.mxu0 %v1017
        %v2263 = vpop.f32.mrf.mxu0
        %v2264 = vadd.f32 %v2136, %v2263
        %v2265 = vpop.f32.mrf.mxu0
        %v2266 = vpop.f32.mrf.mxu0
        %v2267 = vadd.f32 %v2139, %v2266
        %v2268 = vpop.f32.mrf.mxu0
        %2269 = vmatprep.mubr.bf16.mxu0 %v1028
        %2270 = vmatmul.mubr.bf16.gmra.mxu0 %v1027
        %v2271 = vpop.f32.mrf.mxu0
        %v2272 = vadd.f32 %v2144, %v2271
        %v2273 = vpop.f32.mrf.mxu0
        %v2274 = vpop.f32.mrf.mxu0
        %v2275 = vadd.f32 %v2147, %v2274
        %v2276 = vpop.f32.mrf.mxu0
        %2277 = vmatprep.mubr.bf16.mxu0 %v1038
        %2278 = vmatmul.mubr.bf16.gmra.mxu0 %v1037
        %v2279 = vpop.f32.mrf.mxu0
        %v2280 = vadd.f32 %v2152, %v2279
        %v2281 = vpop.f32.mrf.mxu0
        %v2282 = vpop.f32.mrf.mxu0
        %v2283 = vadd.f32 %v2155, %v2282
        %v2284 = vpop.f32.mrf.mxu0
        %2285 = vmatprep.mubr.bf16.mxu0 %v1048
        %2286 = vmatmul.mubr.bf16.gmra.mxu0 %v1047
        %v2287 = vpop.f32.mrf.mxu0
        %v2288 = vadd.f32 %v2160, %v2287
        %v2289 = vpop.f32.mrf.mxu0
        %v2290 = vpop.f32.mrf.mxu0
        %v2291 = vadd.f32 %v2163, %v2290
        %v2292 = vpop.f32.mrf.mxu0
        %2293 = vmatprep.mubr.bf16.mxu0 %v1058
        %2294 = vmatmul.mubr.bf16.gmra.mxu0 %v1057
        %v2295 = vpop.f32.mrf.mxu0
        %v2296 = vadd.f32 %v2168, %v2295
        %v2297 = vpop.f32.mrf.mxu0
        %v2298 = vpop.f32.mrf.mxu0
        %v2299 = vadd.f32 %v2171, %v2298
        %v2300 = vpop.f32.mrf.mxu0
        %2301 = vmatprep.mubr.bf16.mxu0 %v1068
        %2302 = vmatmul.mubr.bf16.gmra.mxu0 %v1067
        %v2303 = vpop.f32.mrf.mxu0
        %v2304 = vadd.f32 %v2176, %v2303
        %v2305 = vpop.f32.mrf.mxu0
        %v2306 = vpop.f32.mrf.mxu0
        %v2307 = vpop.f32.mrf.mxu0
        %2308 = vdwg.mxu0
        %v2309 = vadd.f32 %v2216, 0.0
        %v2310 = vadd.f32 %v2219, 0.0
        %v2311 = vadd.f32 %v2224, 0.0
        %v2312 = vadd.f32 %v2227, 0.0
        %v2313 = vadd.f32 %v2232, 0.0
        %v2314 = vadd.f32 %v2235, 0.0
        %v2315 = vadd.f32 %v2240, 0.0
        %v2316 = vadd.f32 %v2243, 0.0
        %v2317 = vadd.f32 %v2248, 0.0
        %v2318 = vadd.f32 %v2251, 0.0
        %v2319 = vadd.f32 %v2256, 0.0
        %v2320 = vadd.f32 %v2259, 0.0
        %v2321 = vadd.f32 %v2264, 0.0
        %v2322 = vadd.f32 %v2267, 0.0
        %v2323 = vadd.f32 %v2272, 0.0
        %v2324 = vadd.f32 %v2275, 0.0
        %v2325 = vadd.f32 %v2280, 0.0
        %vm2343 = vcmask 1046528
        %v2344 = vrot.slane %v2216, 1
        %v2345 = vrot.slane %v2219, 1
        %v2346 = vsel %vm2343, %v2344, %v2345
        %v2347 = vrot.slane %v2224, 1
        %v2348 = vsel %vm2343, %v2345, %v2347
        %v2349 = vrot.slane %v2227, 1
        %v2350 = vsel %vm2343, %v2347, %v2349
        %v2351 = vrot.slane %v2232, 1
        %v2352 = vsel %vm2343, %v2349, %v2351
        %v2353 = vrot.slane %v2235, 1
        %v2354 = vsel %vm2343, %v2351, %v2353
        %v2355 = vrot.slane %v2240, 1
        %v2356 = vsel %vm2343, %v2353, %v2355
        %v2357 = vrot.slane %v2243, 1
        %v2358 = vsel %vm2343, %v2355, %v2357
        %v2359 = vrot.slane %v2248, 1
        %v2360 = vsel %vm2343, %v2357, %v2359
        %v2361 = vrot.slane %v2251, 1
        %v2362 = vsel %vm2343, %v2359, %v2361
        %v2363 = vrot.slane %v2256, 1
        %v2364 = vsel %vm2343, %v2361, %v2363
        %v2365 = vrot.slane %v2259, 1
        %v2366 = vsel %vm2343, %v2363, %v2365
        %v2367 = vrot.slane %v2264, 1
        %v2368 = vsel %vm2343, %v2365, %v2367
        %v2369 = vrot.slane %v2267, 1
        %v2370 = vsel %vm2343, %v2367, %v2369
        %v2371 = vrot.slane %v2272, 1
        %v2372 = vsel %vm2343, %v2369, %v2371
        %v2373 = vrot.slane %v2275, 1
        %v2374 = vsel %vm2343, %v2371, %v2373
        %v2375 = vrot.slane %v2280, 1
        %v2376 = vsel %vm2343, %v2373, %v2375
        %2377 = vrot.lane.b32.xlu0 %v2346, 116
        %v2378 = vpop.permute.xlu0 %2377
        %2379 = vrot.lane.b32.xlu0 %v2348, 116
        %v2380 = vpop.permute.xlu0 %2379
        %2381 = vrot.lane.b32.xlu0 %v2350, 116
        %v2382 = vpop.permute.xlu0 %2381
        %2383 = vrot.lane.b32.xlu0 %v2352, 116
        %v2384 = vpop.permute.xlu0 %2383
        %2385 = vrot.lane.b32.xlu0 %v2354, 116
        %v2386 = vpop.permute.xlu0 %2385
        %2387 = vrot.lane.b32.xlu0 %v2356, 116
        %v2388 = vpop.permute.xlu0 %2387
        %2389 = vrot.lane.b32.xlu0 %v2358, 116
        %v2390 = vpop.permute.xlu0 %2389
        %2391 = vrot.lane.b32.xlu0 %v2360, 116
        %v2392 = vpop.permute.xlu0 %2391
        %2393 = vrot.lane.b32.xlu0 %v2362, 116
        %v2394 = vpop.permute.xlu0 %2393
        %2395 = vrot.lane.b32.xlu0 %v2364, 116
        %v2396 = vpop.permute.xlu0 %2395
        %2397 = vrot.lane.b32.xlu0 %v2366, 116
        %v2398 = vpop.permute.xlu0 %2397
        %2399 = vrot.lane.b32.xlu0 %v2368, 116
        %v2400 = vpop.permute.xlu0 %2399
        %2401 = vrot.lane.b32.xlu0 %v2370, 116
        %v2402 = vpop.permute.xlu0 %2401
        %2403 = vrot.lane.b32.xlu0 %v2372, 116
        %v2404 = vpop.permute.xlu0 %2403
        %2405 = vrot.lane.b32.xlu0 %v2374, 116
        %v2406 = vpop.permute.xlu0 %2405
        %2407 = vrot.lane.b32.xlu0 %v2376, 116
        %v2408 = vpop.permute.xlu0 %2407
        %2409 = vrot.lane.b32.xlu0 %v2375, 116
        %v2410 = vpop.permute.xlu0 %2409
        %v2428 = vadd.f32 %v2309, %v2378
        %v2429 = vadd.f32 %v2310, %v2380
        %v2430 = vadd.f32 %v2311, %v2382
        %v2431 = vadd.f32 %v2312, %v2384
        %v2432 = vadd.f32 %v2313, %v2386
        %v2433 = vadd.f32 %v2314, %v2388
        %v2434 = vadd.f32 %v2315, %v2390
        %v2435 = vadd.f32 %v2316, %v2392
        %v2436 = vadd.f32 %v2317, %v2394
        %v2437 = vadd.f32 %v2318, %v2396
        %v2438 = vadd.f32 %v2319, %v2398
        %v2439 = vadd.f32 %v2320, %v2400
        %v2440 = vadd.f32 %v2321, %v2402
        %v2441 = vadd.f32 %v2322, %v2404
        %v2442 = vadd.f32 %v2323, %v2406
        %v2443 = vadd.f32 %v2324, %v2408
        %v2444 = vadd.f32 %v2325, %v2410
        %vm2445 = vcmask 1045504
        %v2446 = vrot.slane %v2216, 2
        %v2447 = vrot.slane %v2219, 2
        %v2448 = vsel %vm2445, %v2446, %v2447
        %v2449 = vrot.slane %v2224, 2
        %v2450 = vsel %vm2445, %v2447, %v2449
        %v2451 = vrot.slane %v2227, 2
        %v2452 = vsel %vm2445, %v2449, %v2451
        %v2453 = vrot.slane %v2232, 2
        %v2454 = vsel %vm2445, %v2451, %v2453
        %v2455 = vrot.slane %v2235, 2
        %v2456 = vsel %vm2445, %v2453, %v2455
        %v2457 = vrot.slane %v2240, 2
        %v2458 = vsel %vm2445, %v2455, %v2457
        %v2459 = vrot.slane %v2243, 2
        %v2460 = vsel %vm2445, %v2457, %v2459
        %v2461 = vrot.slane %v2248, 2
        %v2462 = vsel %vm2445, %v2459, %v2461
        %v2463 = vrot.slane %v2251, 2
        %v2464 = vsel %vm2445, %v2461, %v2463
        %v2465 = vrot.slane %v2256, 2
        %v2466 = vsel %vm2445, %v2463, %v2465
        %v2467 = vrot.slane %v2259, 2
        %v2468 = vsel %vm2445, %v2465, %v2467
        %v2469 = vrot.slane %v2264, 2
        %v2470 = vsel %vm2445, %v2467, %v2469
        %v2471 = vrot.slane %v2267, 2
        %v2472 = vsel %vm2445, %v2469, %v2471
        %v2473 = vrot.slane %v2272, 2
        %v2474 = vsel %vm2445, %v2471, %v2473
        %v2475 = vrot.slane %v2275, 2
        %v2476 = vsel %vm2445, %v2473, %v2475
        %v2477 = vrot.slane %v2280, 2
        %v2478 = vsel %vm2445, %v2475, %v2477
        %2479 = vrot.lane.b32.xlu0 %v2448, 104
        %v2480 = vpop.permute.xlu0 %2479
        %2481 = vrot.lane.b32.xlu0 %v2450, 104
        %v2482 = vpop.permute.xlu0 %2481
        %2483 = vrot.lane.b32.xlu0 %v2452, 104
        %v2484 = vpop.permute.xlu0 %2483
        %2485 = vrot.lane.b32.xlu0 %v2454, 104
        %v2486 = vpop.permute.xlu0 %2485
        %2487 = vrot.lane.b32.xlu0 %v2456, 104
        %v2488 = vpop.permute.xlu0 %2487
        %2489 = vrot.lane.b32.xlu0 %v2458, 104
        %v2490 = vpop.permute.xlu0 %2489
        %2491 = vrot.lane.b32.xlu0 %v2460, 104
        %v2492 = vpop.permute.xlu0 %2491
        %2493 = vrot.lane.b32.xlu0 %v2462, 104
        %v2494 = vpop.permute.xlu0 %2493
        %2495 = vrot.lane.b32.xlu0 %v2464, 104
        %v2496 = vpop.permute.xlu0 %2495
        %2497 = vrot.lane.b32.xlu0 %v2466, 104
        %v2498 = vpop.permute.xlu0 %2497
        %2499 = vrot.lane.b32.xlu0 %v2468, 104
        %v2500 = vpop.permute.xlu0 %2499
        %2501 = vrot.lane.b32.xlu0 %v2470, 104
        %v2502 = vpop.permute.xlu0 %2501
        %2503 = vrot.lane.b32.xlu0 %v2472, 104
        %v2504 = vpop.permute.xlu0 %2503
        %2505 = vrot.lane.b32.xlu0 %v2474, 104
        %v2506 = vpop.permute.xlu0 %2505
        %2507 = vrot.lane.b32.xlu0 %v2476, 104
        %v2508 = vpop.permute.xlu0 %2507
        %2509 = vrot.lane.b32.xlu0 %v2478, 104
        %v2510 = vpop.permute.xlu0 %2509
        %2511 = vrot.lane.b32.xlu0 %v2477, 104
        %v2512 = vpop.permute.xlu0 %2511
        %v2530 = vadd.f32 %v2428, %v2480
        %v2531 = vadd.f32 %v2429, %v2482
        %v2532 = vadd.f32 %v2430, %v2484
        %v2533 = vadd.f32 %v2431, %v2486
        %v2534 = vadd.f32 %v2432, %v2488
        %v2535 = vadd.f32 %v2433, %v2490
        %v2536 = vadd.f32 %v2434, %v2492
        %v2537 = vadd.f32 %v2435, %v2494
        %v2538 = vadd.f32 %v2436, %v2496
        %v2539 = vadd.f32 %v2437, %v2498
        %v2540 = vadd.f32 %v2438, %v2500
        %v2541 = vadd.f32 %v2439, %v2502
        %v2542 = vadd.f32 %v2440, %v2504
        %v2543 = vadd.f32 %v2441, %v2506
        %v2544 = vadd.f32 %v2442, %v2508
        %v2545 = vadd.f32 %v2443, %v2510
        %v2546 = vadd.f32 %v2444, %v2512
        %vm2550 = vcmask 1041408
        %v2551 = vrot.slane %v2224, 6
        %v2552 = vrot.slane %v2227, 6
        %v2553 = vsel %vm2550, %v2551, %v2552
        %v2554 = vrot.slane %v2232, 6
        %v2555 = vsel %vm2550, %v2552, %v2554
        %v2556 = vrot.slane %v2235, 6
        %v2557 = vsel %vm2550, %v2554, %v2556
        %v2558 = vrot.slane %v2240, 6
        %v2559 = vsel %vm2550, %v2556, %v2558
        %v2560 = vrot.slane %v2243, 6
        %v2561 = vsel %vm2550, %v2558, %v2560
        %v2562 = vrot.slane %v2248, 6
        %v2563 = vsel %vm2550, %v2560, %v2562
        %v2564 = vrot.slane %v2251, 6
        %v2565 = vsel %vm2550, %v2562, %v2564
        %v2566 = vrot.slane %v2256, 6
        %v2567 = vsel %vm2550, %v2564, %v2566
        %v2568 = vrot.slane %v2259, 6
        %v2569 = vsel %vm2550, %v2566, %v2568
        %v2570 = vrot.slane %v2264, 6
        %v2571 = vsel %vm2550, %v2568, %v2570
        %v2572 = vrot.slane %v2267, 6
        %v2573 = vsel %vm2550, %v2570, %v2572
        %v2574 = vrot.slane %v2272, 6
        %v2575 = vsel %vm2550, %v2572, %v2574
        %v2576 = vrot.slane %v2275, 6
        %v2577 = vsel %vm2550, %v2574, %v2576
        %v2578 = vrot.slane %v2280, 6
        %v2579 = vsel %vm2550, %v2576, %v2578
        %v2580 = vrot.slane %v2283, 6
        %v2581 = vsel %vm2550, %v2578, %v2580
        %v2582 = vrot.slane %v2288, 6
        %v2583 = vsel %vm2550, %v2580, %v2582
        %v2584 = vrot.slane %v2291, 6
        %v2585 = vsel %vm2550, %v2582, %v2584
        %2586 = vrot.lane.b32.xlu0 %v2553, 92
        %v2587 = vpop.permute.xlu0 %2586
        %2588 = vrot.lane.b32.xlu0 %v2555, 92
        %v2589 = vpop.permute.xlu0 %2588
        %2590 = vrot.lane.b32.xlu0 %v2557, 92
        %v2591 = vpop.permute.xlu0 %2590
        %2592 = vrot.lane.b32.xlu0 %v2559, 92
        %v2593 = vpop.permute.xlu0 %2592
        %2594 = vrot.lane.b32.xlu0 %v2561, 92
        %v2595 = vpop.permute.xlu0 %2594
        %2596 = vrot.lane.b32.xlu0 %v2563, 92
        %v2597 = vpop.permute.xlu0 %2596
        %2598 = vrot.lane.b32.xlu0 %v2565, 92
        %v2599 = vpop.permute.xlu0 %2598
        %2600 = vrot.lane.b32.xlu0 %v2567, 92
        %v2601 = vpop.permute.xlu0 %2600
        %2602 = vrot.lane.b32.xlu0 %v2569, 92
        %v2603 = vpop.permute.xlu0 %2602
        %2604 = vrot.lane.b32.xlu0 %v2571, 92
        %v2605 = vpop.permute.xlu0 %2604
        %2606 = vrot.lane.b32.xlu0 %v2573, 92
        %v2607 = vpop.permute.xlu0 %2606
        %2608 = vrot.lane.b32.xlu0 %v2575, 92
        %v2609 = vpop.permute.xlu0 %2608
        %2610 = vrot.lane.b32.xlu0 %v2577, 92
        %v2611 = vpop.permute.xlu0 %2610
        %2612 = vrot.lane.b32.xlu0 %v2579, 92
        %v2613 = vpop.permute.xlu0 %2612
        %2614 = vrot.lane.b32.xlu0 %v2581, 92
        %v2615 = vpop.permute.xlu0 %2614
        %2616 = vrot.lane.b32.xlu0 %v2583, 92
        %v2617 = vpop.permute.xlu0 %2616
        %2618 = vrot.lane.b32.xlu0 %v2585, 92
        %v2619 = vpop.permute.xlu0 %2618
        %v2637 = vadd.f32 %v2530, %v2587
        %v2638 = vadd.f32 %v2531, %v2589
        %v2639 = vadd.f32 %v2532, %v2591
        %v2640 = vadd.f32 %v2533, %v2593
        %v2641 = vadd.f32 %v2534, %v2595
        %v2642 = vadd.f32 %v2535, %v2597
        %v2643 = vadd.f32 %v2536, %v2599
        %v2644 = vadd.f32 %v2537, %v2601
        %v2645 = vadd.f32 %v2538, %v2603
        %v2646 = vadd.f32 %v2539, %v2605
        %v2647 = vadd.f32 %v2540, %v2607
        %v2648 = vadd.f32 %v2541, %v2609
        %v2649 = vadd.f32 %v2542, %v2611
        %v2650 = vadd.f32 %v2543, %v2613
        %v2651 = vadd.f32 %v2544, %v2615
        %v2652 = vadd.f32 %v2545, %v2617
        %v2653 = vadd.f32 %v2546, %v2619
        %vm2654 = vcmask 1040384
        %v2655 = vrot.slane %v2224, 7
        %v2656 = vrot.slane %v2227, 7
        %v2657 = vsel %vm2654, %v2655, %v2656
        %v2658 = vrot.slane %v2232, 7
        %v2659 = vsel %vm2654, %v2656, %v2658
        %v2660 = vrot.slane %v2235, 7
        %v2661 = vsel %vm2654, %v2658, %v2660
        %v2662 = vrot.slane %v2240, 7
        %v2663 = vsel %vm2654, %v2660, %v2662
        %v2664 = vrot.slane %v2243, 7
        %v2665 = vsel %vm2654, %v2662, %v2664
        %v2666 = vrot.slane %v2248, 7
        %v2667 = vsel %vm2654, %v2664, %v2666
        %v2668 = vrot.slane %v2251, 7
        %v2669 = vsel %vm2654, %v2666, %v2668
        %v2670 = vrot.slane %v2256, 7
        %v2671 = vsel %vm2654, %v2668, %v2670
        %v2672 = vrot.slane %v2259, 7
        %v2673 = vsel %vm2654, %v2670, %v2672
        %v2674 = vrot.slane %v2264, 7
        %v2675 = vsel %vm2654, %v2672, %v2674
        %v2676 = vrot.slane %v2267, 7
        %v2677 = vsel %vm2654, %v2674, %v2676
        %v2678 = vrot.slane %v2272, 7
        %v2679 = vsel %vm2654, %v2676, %v2678
        %v2680 = vrot.slane %v2275, 7
        %v2681 = vsel %vm2654, %v2678, %v2680
        %v2682 = vrot.slane %v2280, 7
        %v2683 = vsel %vm2654, %v2680, %v2682
        %v2684 = vrot.slane %v2283, 7
        %v2685 = vsel %vm2654, %v2682, %v2684
        %v2686 = vrot.slane %v2288, 7
        %v2687 = vsel %vm2654, %v2684, %v2686
        %v2688 = vrot.slane %v2291, 7
        %v2689 = vsel %vm2654, %v2686, %v2688
        %2690 = vrot.lane.b32.xlu0 %v2657, 80
        %v2691 = vpop.permute.xlu0 %2690
        %2692 = vrot.lane.b32.xlu0 %v2659, 80
        %v2693 = vpop.permute.xlu0 %2692
        %2694 = vrot.lane.b32.xlu0 %v2661, 80
        %v2695 = vpop.permute.xlu0 %2694
        %2696 = vrot.lane.b32.xlu0 %v2663, 80
        %v2697 = vpop.permute.xlu0 %2696
        %2698 = vrot.lane.b32.xlu0 %v2665, 80
        %v2699 = vpop.permute.xlu0 %2698
        %2700 = vrot.lane.b32.xlu0 %v2667, 80
        %v2701 = vpop.permute.xlu0 %2700
        %2702 = vrot.lane.b32.xlu0 %v2669, 80
        %v2703 = vpop.permute.xlu0 %2702
        %2704 = vrot.lane.b32.xlu0 %v2671, 80
        %v2705 = vpop.permute.xlu0 %2704
        %2706 = vrot.lane.b32.xlu0 %v2673, 80
        %v2707 = vpop.permute.xlu0 %2706
        %2708 = vrot.lane.b32.xlu0 %v2675, 80
        %v2709 = vpop.permute.xlu0 %2708
        %2710 = vrot.lane.b32.xlu0 %v2677, 80
        %v2711 = vpop.permute.xlu0 %2710
        %2712 = vrot.lane.b32.xlu0 %v2679, 80
        %v2713 = vpop.permute.xlu0 %2712
        %2714 = vrot.lane.b32.xlu0 %v2681, 80
        %v2715 = vpop.permute.xlu0 %2714
        %2716 = vrot.lane.b32.xlu0 %v2683, 80
        %v2717 = vpop.permute.xlu0 %2716
        %2718 = vrot.lane.b32.xlu0 %v2685, 80
        %v2719 = vpop.permute.xlu0 %2718
        %2720 = vrot.lane.b32.xlu0 %v2687, 80
        %v2721 = vpop.permute.xlu0 %2720
        %2722 = vrot.lane.b32.xlu0 %v2689, 80
        %v2723 = vpop.permute.xlu0 %2722
        %v2741 = vadd.f32 %v2637, %v2691
        %v2742 = vadd.f32 %v2638, %v2693
        %v2743 = vadd.f32 %v2639, %v2695
        %v2744 = vadd.f32 %v2640, %v2697
        %v2745 = vadd.f32 %v2641, %v2699
        %v2746 = vadd.f32 %v2642, %v2701
        %v2747 = vadd.f32 %v2643, %v2703
        %v2748 = vadd.f32 %v2644, %v2705
        %v2749 = vadd.f32 %v2645, %v2707
        %v2750 = vadd.f32 %v2646, %v2709
        %v2751 = vadd.f32 %v2647, %v2711
        %v2752 = vadd.f32 %v2648, %v2713
        %v2753 = vadd.f32 %v2649, %v2715
        %v2754 = vadd.f32 %v2650, %v2717
        %v2755 = vadd.f32 %v2651, %v2719
        %v2756 = vadd.f32 %v2652, %v2721
        %v2757 = vadd.f32 %v2653, %v2723
        %2758 = vrot.lane.b32.xlu0 %v2227, 68
        %v2759 = vpop.permute.xlu0 %2758
        %2760 = vrot.lane.b32.xlu0 %v2232, 68
        %v2761 = vpop.permute.xlu0 %2760
        %2762 = vrot.lane.b32.xlu0 %v2235, 68
        %v2763 = vpop.permute.xlu0 %2762
        %2764 = vrot.lane.b32.xlu0 %v2240, 68
        %v2765 = vpop.permute.xlu0 %2764
        %2766 = vrot.lane.b32.xlu0 %v2243, 68
        %v2767 = vpop.permute.xlu0 %2766
        %2768 = vrot.lane.b32.xlu0 %v2248, 68
        %v2769 = vpop.permute.xlu0 %2768
        %2770 = vrot.lane.b32.xlu0 %v2251, 68
        %v2771 = vpop.permute.xlu0 %2770
        %2772 = vrot.lane.b32.xlu0 %v2256, 68
        %v2773 = vpop.permute.xlu0 %2772
        %2774 = vrot.lane.b32.xlu0 %v2259, 68
        %v2775 = vpop.permute.xlu0 %2774
        %2776 = vrot.lane.b32.xlu0 %v2264, 68
        %v2777 = vpop.permute.xlu0 %2776
        %2778 = vrot.lane.b32.xlu0 %v2267, 68
        %v2779 = vpop.permute.xlu0 %2778
        %2780 = vrot.lane.b32.xlu0 %v2272, 68
        %v2781 = vpop.permute.xlu0 %2780
        %2782 = vrot.lane.b32.xlu0 %v2275, 68
        %v2783 = vpop.permute.xlu0 %2782
        %2784 = vrot.lane.b32.xlu0 %v2280, 68
        %v2785 = vpop.permute.xlu0 %2784
        %2786 = vrot.lane.b32.xlu0 %v2283, 68
        %v2787 = vpop.permute.xlu0 %2786
        %2788 = vrot.lane.b32.xlu0 %v2288, 68
        %v2789 = vpop.permute.xlu0 %2788
        %2790 = vrot.lane.b32.xlu0 %v2291, 68
        %v2791 = vpop.permute.xlu0 %2790
        %v2809 = vadd.f32 %v2741, %v2759
        %v2810 = vadd.f32 %v2742, %v2761
        %v2811 = vadd.f32 %v2743, %v2763
        %v2812 = vadd.f32 %v2744, %v2765
        %v2813 = vadd.f32 %v2745, %v2767
        %v2814 = vadd.f32 %v2746, %v2769
        %v2815 = vadd.f32 %v2747, %v2771
        %v2816 = vadd.f32 %v2748, %v2773
        %v2817 = vadd.f32 %v2749, %v2775
        %v2818 = vadd.f32 %v2750, %v2777
        %v2819 = vadd.f32 %v2751, %v2779
        %v2820 = vadd.f32 %v2752, %v2781
        %v2821 = vadd.f32 %v2753, %v2783
        %v2822 = vadd.f32 %v2754, %v2785
        %v2823 = vadd.f32 %v2755, %v2787
        %v2824 = vadd.f32 %v2756, %v2789
        %v2825 = vadd.f32 %v2757, %v2791
        %vm2828 = vcmask 1043456
        %v2829 = vrot.slane %v2235, 4
        %v2830 = vrot.slane %v2240, 4
        %v2831 = vsel %vm2828, %v2829, %v2830
        %v2832 = vrot.slane %v2243, 4
        %v2833 = vsel %vm2828, %v2830, %v2832
        %v2834 = vrot.slane %v2248, 4
        %v2835 = vsel %vm2828, %v2832, %v2834
        %v2836 = vrot.slane %v2251, 4
        %v2837 = vsel %vm2828, %v2834, %v2836
        %v2838 = vrot.slane %v2256, 4
        %v2839 = vsel %vm2828, %v2836, %v2838
        %v2840 = vrot.slane %v2259, 4
        %v2841 = vsel %vm2828, %v2838, %v2840
        %v2842 = vrot.slane %v2264, 4
        %v2843 = vsel %vm2828, %v2840, %v2842
        %v2844 = vrot.slane %v2267, 4
        %v2845 = vsel %vm2828, %v2842, %v2844
        %v2846 = vrot.slane %v2272, 4
        %v2847 = vsel %vm2828, %v2844, %v2846
        %v2848 = vrot.slane %v2275, 4
        %v2849 = vsel %vm2828, %v2846, %v2848
        %v2850 = vrot.slane %v2280, 4
        %v2851 = vsel %vm2828, %v2848, %v2850
        %v2852 = vrot.slane %v2283, 4
        %v2853 = vsel %vm2828, %v2850, %v2852
        %v2854 = vrot.slane %v2288, 4
        %v2855 = vsel %vm2828, %v2852, %v2854
        %v2856 = vrot.slane %v2291, 4
        %v2857 = vsel %vm2828, %v2854, %v2856
        %v2858 = vrot.slane %v2296, 4
        %v2859 = vsel %vm2828, %v2856, %v2858
        %v2860 = vrot.slane %v2299, 4
        %v2861 = vsel %vm2828, %v2858, %v2860
        %2862 = vrot.lane.b32.xlu0 %v2831, 56
        %v2863 = vpop.permute.xlu0 %2862
        %2864 = vrot.lane.b32.xlu0 %v2833, 56
        %v2865 = vpop.permute.xlu0 %2864
        %2866 = vrot.lane.b32.xlu0 %v2835, 56
        %v2867 = vpop.permute.xlu0 %2866
        %2868 = vrot.lane.b32.xlu0 %v2837, 56
        %v2869 = vpop.permute.xlu0 %2868
        %2870 = vrot.lane.b32.xlu0 %v2839, 56
        %v2871 = vpop.permute.xlu0 %2870
        %2872 = vrot.lane.b32.xlu0 %v2841, 56
        %v2873 = vpop.permute.xlu0 %2872
        %2874 = vrot.lane.b32.xlu0 %v2843, 56
        %v2875 = vpop.permute.xlu0 %2874
        %2876 = vrot.lane.b32.xlu0 %v2845, 56
        %v2877 = vpop.permute.xlu0 %2876
        %2878 = vrot.lane.b32.xlu0 %v2847, 56
        %v2879 = vpop.permute.xlu0 %2878
        %2880 = vrot.lane.b32.xlu0 %v2849, 56
        %v2881 = vpop.permute.xlu0 %2880
        %2882 = vrot.lane.b32.xlu0 %v2851, 56
        %v2883 = vpop.permute.xlu0 %2882
        %2884 = vrot.lane.b32.xlu0 %v2853, 56
        %v2885 = vpop.permute.xlu0 %2884
        %2886 = vrot.lane.b32.xlu0 %v2855, 56
        %v2887 = vpop.permute.xlu0 %2886
        %2888 = vrot.lane.b32.xlu0 %v2857, 56
        %v2889 = vpop.permute.xlu0 %2888
        %2890 = vrot.lane.b32.xlu0 %v2859, 56
        %v2891 = vpop.permute.xlu0 %2890
        %2892 = vrot.lane.b32.xlu0 %v2861, 56
        %v2893 = vpop.permute.xlu0 %2892
        %2894 = vrot.lane.b32.xlu0 %v2860, 56
        %v2895 = vpop.permute.xlu0 %2894
        %v2913 = vadd.f32 %v2809, %v2863
        %v2914 = vadd.f32 %v2810, %v2865
        %v2915 = vadd.f32 %v2811, %v2867
        %v2916 = vadd.f32 %v2812, %v2869
        %v2917 = vadd.f32 %v2813, %v2871
        %v2918 = vadd.f32 %v2814, %v2873
        %v2919 = vadd.f32 %v2815, %v2875
        %v2920 = vadd.f32 %v2816, %v2877
        %v2921 = vadd.f32 %v2817, %v2879
        %v2922 = vadd.f32 %v2818, %v2881
        %v2923 = vadd.f32 %v2819, %v2883
        %v2924 = vadd.f32 %v2820, %v2885
        %v2925 = vadd.f32 %v2821, %v2887
        %v2926 = vadd.f32 %v2822, %v2889
        %v2927 = vadd.f32 %v2823, %v2891
        %v2928 = vadd.f32 %v2824, %v2893
        %v2929 = vadd.f32 %v2825, %v2895
        %vm2931 = vcmask 1042432
        %v2932 = vrot.slane %v2235, 5
        %v2933 = vrot.slane %v2240, 5
        %v2934 = vsel %vm2931, %v2932, %v2933
        %v2935 = vrot.slane %v2243, 5
        %v2936 = vsel %vm2931, %v2933, %v2935
        %v2937 = vrot.slane %v2248, 5
        %v2938 = vsel %vm2931, %v2935, %v2937
        %v2939 = vrot.slane %v2251, 5
        %v2940 = vsel %vm2931, %v2937, %v2939
        %v2941 = vrot.slane %v2256, 5
        %v2942 = vsel %vm2931, %v2939, %v2941
        %v2943 = vrot.slane %v2259, 5
        %v2944 = vsel %vm2931, %v2941, %v2943
        %v2945 = vrot.slane %v2264, 5
        %v2946 = vsel %vm2931, %v2943, %v2945
        %v2947 = vrot.slane %v2267, 5
        %v2948 = vsel %vm2931, %v2945, %v2947
        %v2949 = vrot.slane %v2272, 5
        %v2950 = vsel %vm2931, %v2947, %v2949
        %v2951 = vrot.slane %v2275, 5
        %v2952 = vsel %vm2931, %v2949, %v2951
        %v2953 = vrot.slane %v2280, 5
        %v2954 = vsel %vm2931, %v2951, %v2953
        %v2955 = vrot.slane %v2283, 5
        %v2956 = vsel %vm2931, %v2953, %v2955
        %v2957 = vrot.slane %v2288, 5
        %v2958 = vsel %vm2931, %v2955, %v2957
        %v2959 = vrot.slane %v2291, 5
        %v2960 = vsel %vm2931, %v2957, %v2959
        %v2961 = vrot.slane %v2296, 5
        %v2962 = vsel %vm2931, %v2959, %v2961
        %v2963 = vrot.slane %v2299, 5
        %v2964 = vsel %vm2931, %v2961, %v2963
        %v2965 = vrot.slane %v2304, 5
        %v2966 = vsel %vm2931, %v2963, %v2965
        %2967 = vrot.lane.b32.xlu0 %v2934, 44
        %v2968 = vpop.permute.xlu0 %2967
        %2969 = vrot.lane.b32.xlu0 %v2936, 44
        %v2970 = vpop.permute.xlu0 %2969
        %2971 = vrot.lane.b32.xlu0 %v2938, 44
        %v2972 = vpop.permute.xlu0 %2971
        %2973 = vrot.lane.b32.xlu0 %v2940, 44
        %v2974 = vpop.permute.xlu0 %2973
        %2975 = vrot.lane.b32.xlu0 %v2942, 44
        %v2976 = vpop.permute.xlu0 %2975
        %2977 = vrot.lane.b32.xlu0 %v2944, 44
        %v2978 = vpop.permute.xlu0 %2977
        %2979 = vrot.lane.b32.xlu0 %v2946, 44
        %v2980 = vpop.permute.xlu0 %2979
        %2981 = vrot.lane.b32.xlu0 %v2948, 44
        %v2982 = vpop.permute.xlu0 %2981
        %2983 = vrot.lane.b32.xlu0 %v2950, 44
        %v2984 = vpop.permute.xlu0 %2983
        %2985 = vrot.lane.b32.xlu0 %v2952, 44
        %v2986 = vpop.permute.xlu0 %2985
        %2987 = vrot.lane.b32.xlu0 %v2954, 44
        %v2988 = vpop.permute.xlu0 %2987
        %2989 = vrot.lane.b32.xlu0 %v2956, 44
        %v2990 = vpop.permute.xlu0 %2989
        %2991 = vrot.lane.b32.xlu0 %v2958, 44
        %v2992 = vpop.permute.xlu0 %2991
        %2993 = vrot.lane.b32.xlu0 %v2960, 44
        %v2994 = vpop.permute.xlu0 %2993
        %2995 = vrot.lane.b32.xlu0 %v2962, 44
        %v2996 = vpop.permute.xlu0 %2995
        %2997 = vrot.lane.b32.xlu0 %v2964, 44
        %v2998 = vpop.permute.xlu0 %2997
        %2999 = vrot.lane.b32.xlu0 %v2966, 44
        %v3000 = vpop.permute.xlu0 %2999
        %v3018 = vadd.f32 %v2913, %v2968
        %v3019 = vadd.f32 %v2914, %v2970
        %v3020 = vadd.f32 %v2915, %v2972
        %v3021 = vadd.f32 %v2916, %v2974
        %v3022 = vadd.f32 %v2917, %v2976
        %v3023 = vadd.f32 %v2918, %v2978
        %v3024 = vadd.f32 %v2919, %v2980
        %v3025 = vadd.f32 %v2920, %v2982
        %v3026 = vadd.f32 %v2921, %v2984
        %v3027 = vadd.f32 %v2922, %v2986
        %v3028 = vadd.f32 %v2923, %v2988
        %v3029 = vadd.f32 %v2924, %v2990
        %v3030 = vadd.f32 %v2925, %v2992
        %v3031 = vadd.f32 %v2926, %v2994
        %v3032 = vadd.f32 %v2927, %v2996
        %v3033 = vadd.f32 %v2928, %v2998
        %v3034 = vadd.f32 %v2929, %v3000
        %v3035 = vrot.slane %v2296, 6
        %v3036 = vsel %vm2550, %v2584, %v3035
        %v3037 = vrot.slane %v2299, 6
        %v3038 = vsel %vm2550, %v3035, %v3037
        %v3039 = vrot.slane %v2304, 6
        %v3040 = vsel %vm2550, %v3037, %v3039
        %3041 = vrot.lane.b32.xlu0 %v2559, 32
        %v3042 = vpop.permute.xlu0 %3041
        %3043 = vrot.lane.b32.xlu0 %v2561, 32
        %v3044 = vpop.permute.xlu0 %3043
        %3045 = vrot.lane.b32.xlu0 %v2563, 32
        %v3046 = vpop.permute.xlu0 %3045
        %3047 = vrot.lane.b32.xlu0 %v2565, 32
        %v3048 = vpop.permute.xlu0 %3047
        %3049 = vrot.lane.b32.xlu0 %v2567, 32
        %v3050 = vpop.permute.xlu0 %3049
        %3051 = vrot.lane.b32.xlu0 %v2569, 32
        %v3052 = vpop.permute.xlu0 %3051
        %3053 = vrot.lane.b32.xlu0 %v2571, 32
        %v3054 = vpop.permute.xlu0 %3053
        %3055 = vrot.lane.b32.xlu0 %v2573, 32
        %v3056 = vpop.permute.xlu0 %3055
        %3057 = vrot.lane.b32.xlu0 %v2575, 32
        %v3058 = vpop.permute.xlu0 %3057
        %3059 = vrot.lane.b32.xlu0 %v2577, 32
        %v3060 = vpop.permute.xlu0 %3059
        %3061 = vrot.lane.b32.xlu0 %v2579, 32
        %v3062 = vpop.permute.xlu0 %3061
        %3063 = vrot.lane.b32.xlu0 %v2581, 32
        %v3064 = vpop.permute.xlu0 %3063
        %3065 = vrot.lane.b32.xlu0 %v2583, 32
        %v3066 = vpop.permute.xlu0 %3065
        %3067 = vrot.lane.b32.xlu0 %v2585, 32
        %v3068 = vpop.permute.xlu0 %3067
        %3069 = vrot.lane.b32.xlu0 %v3036, 32
        %v3070 = vpop.permute.xlu0 %3069
        %3071 = vrot.lane.b32.xlu0 %v3038, 32
        %v3072 = vpop.permute.xlu0 %3071
        %3073 = vrot.lane.b32.xlu0 %v3040, 32
        %v3074 = vpop.permute.xlu0 %3073
        %v3092 = vadd.f32 %v3018, %v3042
        %v3093 = vadd.f32 %v3019, %v3044
        %v3094 = vadd.f32 %v3020, %v3046
        %v3095 = vadd.f32 %v3021, %v3048
        %v3096 = vadd.f32 %v3022, %v3050
        %v3097 = vadd.f32 %v3023, %v3052
        %v3098 = vadd.f32 %v3024, %v3054
        %v3099 = vadd.f32 %v3025, %v3056
        %v3100 = vadd.f32 %v3026, %v3058
        %v3101 = vadd.f32 %v3027, %v3060
        %v3102 = vadd.f32 %v3028, %v3062
        %v3103 = vadd.f32 %v3029, %v3064
        %v3104 = vadd.f32 %v3030, %v3066
        %v3105 = vadd.f32 %v3031, %v3068
        %v3106 = vadd.f32 %v3032, %v3070
        %v3107 = vadd.f32 %v3033, %v3072
        %v3108 = vadd.f32 %v3034, %v3074
        %v3109 = vld [vmem:[%s2] sm:$0x1]
        %v3111 = vlaneseq
        %v3112 = vshrl.u32 %v3111, 7
        %v3113 = vsub.s32 0, %v3112
        %v3114 = vrot.slane %v3109, %v3113
        %v3116 = vadd.f32 %v3092, %v3114
        %v3117 = vadd.f32 %v3093, %v3114
        %v3118 = vadd.f32 %v3094, %v3114
        %v3119 = vadd.f32 %v3095, %v3114
        %v3120 = vadd.f32 %v3096, %v3114
        %v3121 = vadd.f32 %v3097, %v3114
        %v3122 = vadd.f32 %v3098, %v3114
        %v3123 = vadd.f32 %v3099, %v3114
        %v3124 = vadd.f32 %v3100, %v3114
        %v3125 = vadd.f32 %v3101, %v3114
        %v3126 = vadd.f32 %v3102, %v3114
        %v3127 = vadd.f32 %v3103, %v3114
        %v3128 = vadd.f32 %v3104, %v3114
        %v3129 = vadd.f32 %v3105, %v3114
        %v3130 = vadd.f32 %v3106, %v3114
        %v3131 = vadd.f32 %v3107, %v3114
        %v3132 = vadd.f32 %v3108, %v3114
        %vm3133 = vcmask 64512
        %v3134 = vsel %vm3133, %v3116, -inf
        %3135 = vmax.xlane.f32.xlu0 %v3134
        %v3136 = vpop.xlane.xlu0 %3135
        %v3137 = vsel %vm3133, %v3117, -inf
        %3138 = vmax.xlane.f32.xlu0 %v3137
        %v3139 = vpop.xlane.xlu0 %3138
        %v3140 = vsel %vm3133, %v3118, -inf
        %3141 = vmax.xlane.f32.xlu0 %v3140
        %v3142 = vpop.xlane.xlu0 %3141
        %v3143 = vsel %vm3133, %v3119, -inf
        %3144 = vmax.xlane.f32.xlu0 %v3143
        %v3145 = vpop.xlane.xlu0 %3144
        %v3146 = vsel %vm3133, %v3120, -inf
        %3147 = vmax.xlane.f32.xlu0 %v3146
        %v3148 = vpop.xlane.xlu0 %3147
        %v3149 = vsel %vm3133, %v3121, -inf
        %3150 = vmax.xlane.f32.xlu0 %v3149
        %v3151 = vpop.xlane.xlu0 %3150
        %v3152 = vsel %vm3133, %v3122, -inf
        %3153 = vmax.xlane.f32.xlu0 %v3152
        %v3154 = vpop.xlane.xlu0 %3153
        %v3155 = vsel %vm3133, %v3123, -inf
        %3156 = vmax.xlane.f32.xlu0 %v3155
        %v3157 = vpop.xlane.xlu0 %3156
        %v3158 = vsel %vm3133, %v3124, -inf
        %3159 = vmax.xlane.f32.xlu0 %v3158
        %v3160 = vpop.xlane.xlu0 %3159
        %v3161 = vsel %vm3133, %v3125, -inf
        %3162 = vmax.xlane.f32.xlu0 %v3161
        %v3163 = vpop.xlane.xlu0 %3162
        %v3164 = vsel %vm3133, %v3126, -inf
        %3165 = vmax.xlane.f32.xlu0 %v3164
        %v3166 = vpop.xlane.xlu0 %3165
        %v3167 = vsel %vm3133, %v3127, -inf
        %3168 = vmax.xlane.f32.xlu0 %v3167
        %v3169 = vpop.xlane.xlu0 %3168
        %v3170 = vsel %vm3133, %v3128, -inf
        %3171 = vmax.xlane.f32.xlu0 %v3170
        %v3172 = vpop.xlane.xlu0 %3171
        %v3173 = vsel %vm3133, %v3129, -inf
        %3174 = vmax.xlane.f32.xlu0 %v3173
        %v3175 = vpop.xlane.xlu0 %3174
        %v3176 = vsel %vm3133, %v3130, -inf
        %3177 = vmax.xlane.f32.xlu0 %v3176
        %v3178 = vpop.xlane.xlu0 %3177
        %v3179 = vsel %vm3133, %v3131, -inf
        %3180 = vmax.xlane.f32.xlu0 %v3179
        %v3181 = vpop.xlane.xlu0 %3180
        %vm3182 = vcmask 60416
        %v3183 = vsel %vm3182, %v3132, -inf
        %3184 = vmax.xlane.f32.xlu0 %v3183
        %v3185 = vpop.xlane.xlu0 %3184
        %v3186 = vsub.f32 %v3116, %v3136
        %v3187 = vsub.f32 %v3117, %v3139
        %v3188 = vsub.f32 %v3118, %v3142
        %v3189 = vsub.f32 %v3119, %v3145
        %v3190 = vsub.f32 %v3120, %v3148
        %v3191 = vsub.f32 %v3121, %v3151
        %v3192 = vsub.f32 %v3122, %v3154
        %v3193 = vsub.f32 %v3123, %v3157
        %v3194 = vsub.f32 %v3124, %v3160
        %v3195 = vsub.f32 %v3125, %v3163
        %v3196 = vsub.f32 %v3126, %v3166
        %v3197 = vsub.f32 %v3127, %v3169
        %v3198 = vsub.f32 %v3128, %v3172
        %v3199 = vsub.f32 %v3129, %v3175
        %v3200 = vsub.f32 %v3130, %v3178
        %v3201 = vsub.f32 %v3131, %v3181
        %v3202 = vsub.f32 %v3132, %v3185
        %v3203 = vmul.f32 %v3186, 1.442695
        %v3204 = vpow.pop %v3203
        %v3205 = vmul.f32 %v3187, 1.442695
        %v3206 = vpow.pop %v3205
        %v3207 = vmul.f32 %v3188, 1.442695
        %v3208 = vpow.pop %v3207
        %v3209 = vmul.f32 %v3189, 1.442695
        %v3210 = vpow.pop %v3209
        %v3211 = vmul.f32 %v3190, 1.442695
        %v3212 = vpow.pop %v3211
        %v3213 = vmul.f32 %v3191, 1.442695
        %v3214 = vpow.pop %v3213
        %v3215 = vmul.f32 %v3192, 1.442695
        %v3216 = vpow.pop %v3215
        %v3217 = vmul.f32 %v3193, 1.442695
        %v3218 = vpow.pop %v3217
        %v3219 = vmul.f32 %v3194, 1.442695
        %v3220 = vpow.pop %v3219
        %v3221 = vmul.f32 %v3195, 1.442695
        %v3222 = vpow.pop %v3221
        %v3223 = vmul.f32 %v3196, 1.442695
        %v3224 = vpow.pop %v3223
        %v3225 = vmul.f32 %v3197, 1.442695
        %v3226 = vpow.pop %v3225
        %v3227 = vmul.f32 %v3198, 1.442695
        %v3228 = vpow.pop %v3227
        %v3229 = vmul.f32 %v3199, 1.442695
        %v3230 = vpow.pop %v3229
        %v3231 = vmul.f32 %v3200, 1.442695
        %v3232 = vpow.pop %v3231
        %v3233 = vmul.f32 %v3201, 1.442695
        %v3234 = vpow.pop %v3233
        %v3235 = vmul.f32 %v3202, 1.442695
        %v3236 = vpow.pop %v3235
        %v3237 = vsel %vm3133, %v3204, 0.0
        %3238 = vadd.xlane.f32.xlu0 %v3237
        %v3239 = vpop.xlane.xlu0 %3238
        %v3240 = vsel %vm3133, %v3206, 0.0
        %3241 = vadd.xlane.f32.xlu0 %v3240
        %v3242 = vpop.xlane.xlu0 %3241
        %v3243 = vsel %vm3133, %v3208, 0.0
        %3244 = vadd.xlane.f32.xlu0 %v3243
        %v3245 = vpop.xlane.xlu0 %3244
        %v3246 = vsel %vm3133, %v3210, 0.0
        %3247 = vadd.xlane.f32.xlu0 %v3246
        %v3248 = vpop.xlane.xlu0 %3247
        %v3249 = vsel %vm3133, %v3212, 0.0
        %3250 = vadd.xlane.f32.xlu0 %v3249
        %v3251 = vpop.xlane.xlu0 %3250
        %v3252 = vsel %vm3133, %v3214, 0.0
        %3253 = vadd.xlane.f32.xlu0 %v3252
        %v3254 = vpop.xlane.xlu0 %3253
        %v3255 = vsel %vm3133, %v3216, 0.0
        %3256 = vadd.xlane.f32.xlu0 %v3255
        %v3257 = vpop.xlane.xlu0 %3256
        %v3258 = vsel %vm3133, %v3218, 0.0
        %3259 = vadd.xlane.f32.xlu0 %v3258
        %v3260 = vpop.xlane.xlu0 %3259
        %v3261 = vsel %vm3133, %v3220, 0.0
        %3262 = vadd.xlane.f32.xlu0 %v3261
        %v3263 = vpop.xlane.xlu0 %3262
        %v3264 = vsel %vm3133, %v3222, 0.0
        %3265 = vadd.xlane.f32.xlu0 %v3264
        %v3266 = vpop.xlane.xlu0 %3265
        %v3267 = vsel %vm3133, %v3224, 0.0
        %3268 = vadd.xlane.f32.xlu0 %v3267
        %v3269 = vpop.xlane.xlu0 %3268
        %v3270 = vsel %vm3133, %v3226, 0.0
        %3271 = vadd.xlane.f32.xlu0 %v3270
        %v3272 = vpop.xlane.xlu0 %3271
        %v3273 = vsel %vm3133, %v3228, 0.0
        %3274 = vadd.xlane.f32.xlu0 %v3273
        %v3275 = vpop.xlane.xlu0 %3274
        %v3276 = vsel %vm3133, %v3230, 0.0
        %3277 = vadd.xlane.f32.xlu0 %v3276
        %v3278 = vpop.xlane.xlu0 %3277
        %v3279 = vsel %vm3133, %v3232, 0.0
        %3280 = vadd.xlane.f32.xlu0 %v3279
        %v3281 = vpop.xlane.xlu0 %3280
        %v3282 = vsel %vm3133, %v3234, 0.0
        %3283 = vadd.xlane.f32.xlu0 %v3282
        %v3284 = vpop.xlane.xlu0 %3283
        %v3285 = vsel %vm3182, %v3236, 0.0
        %3286 = vadd.xlane.f32.xlu0 %v3285
        %v3287 = vpop.xlane.xlu0 %3286
        %v3288 = vlog2.pop %v3239
        %v3289 = vmul.f32 %v3288, 0.6931472
        %v3290 = vlog2.pop %v3242
        %v3291 = vmul.f32 %v3290, 0.6931472
        %v3292 = vlog2.pop %v3245
        %v3293 = vmul.f32 %v3292, 0.6931472
        %v3294 = vlog2.pop %v3248
        %v3295 = vmul.f32 %v3294, 0.6931472
        %v3296 = vlog2.pop %v3251
        %v3297 = vmul.f32 %v3296, 0.6931472
        %v3298 = vlog2.pop %v3254
        %v3299 = vmul.f32 %v3298, 0.6931472
        %v3300 = vlog2.pop %v3257
        %v3301 = vmul.f32 %v3300, 0.6931472
        %v3302 = vlog2.pop %v3260
        %v3303 = vmul.f32 %v3302, 0.6931472
        %v3304 = vlog2.pop %v3263
        %v3305 = vmul.f32 %v3304, 0.6931472
        %v3306 = vlog2.pop %v3266
        %v3307 = vmul.f32 %v3306, 0.6931472
        %v3308 = vlog2.pop %v3269
        %v3309 = vmul.f32 %v3308, 0.6931472
        %v3310 = vlog2.pop %v3272
        %v3311 = vmul.f32 %v3310, 0.6931472
        %v3312 = vlog2.pop %v3275
        %v3313 = vmul.f32 %v3312, 0.6931472
        %v3314 = vlog2.pop %v3278
        %v3315 = vmul.f32 %v3314, 0.6931472
        %v3316 = vlog2.pop %v3281
        %v3317 = vmul.f32 %v3316, 0.6931472
        %v3318 = vlog2.pop %v3284
        %v3319 = vmul.f32 %v3318, 0.6931472
        %v3320 = vlog2.pop %v3287
        %v3321 = vmul.f32 %v3320, 0.6931472
        %v3322 = vadd.f32 %v3136, %v3289
        %v3323 = vadd.f32 %v3139, %v3291
        %v3324 = vadd.f32 %v3142, %v3293
        %v3325 = vadd.f32 %v3145, %v3295
        %v3326 = vadd.f32 %v3148, %v3297
        %v3327 = vadd.f32 %v3151, %v3299
        %v3328 = vadd.f32 %v3154, %v3301
        %v3329 = vadd.f32 %v3157, %v3303
        %v3330 = vadd.f32 %v3160, %v3305
        %v3331 = vadd.f32 %v3163, %v3307
        %v3332 = vadd.f32 %v3166, %v3309
        %v3333 = vadd.f32 %v3169, %v3311
        %v3334 = vadd.f32 %v3172, %v3313
        %v3335 = vadd.f32 %v3175, %v3315
        %v3336 = vadd.f32 %v3178, %v3317
        %v3337 = vadd.f32 %v3181, %v3319
        %v3338 = vadd.f32 %v3185, %v3321
        %v3339 = vsub.f32 %v3116, %v3322
        %v3340 = vsub.f32 %v3117, %v3323
        %v3341 = vsub.f32 %v3118, %v3324
        %v3342 = vsub.f32 %v3119, %v3325
        %v3343 = vsub.f32 %v3120, %v3326
        %v3344 = vsub.f32 %v3121, %v3327
        %v3345 = vsub.f32 %v3122, %v3328
        %v3346 = vsub.f32 %v3123, %v3329
        %v3347 = vsub.f32 %v3124, %v3330
        %v3348 = vsub.f32 %v3125, %v3331
        %v3349 = vsub.f32 %v3126, %v3332
        %v3350 = vsub.f32 %v3127, %v3333
        %v3351 = vsub.f32 %v3128, %v3334
        %v3352 = vsub.f32 %v3129, %v3335
        %v3353 = vsub.f32 %v3130, %v3336
        %v3354 = vsub.f32 %v3131, %v3337
        %v3355 = vsub.f32 %v3132, %v3338
        %v3356 = vld [vmem:[%s322] sm:$0xff]
        %v3357 = vld [vmem:[%s322 + $0x8] sm:$0xff]
        %v3358 = vld [vmem:[%s322 + $0x10] sm:$0xff]
        %v3359 = vld [vmem:[%s322 + $0x18] sm:$0xff]
        %v3360 = vld [vmem:[%s322 + $0x20] sm:$0xff]
        %v3361 = vld [vmem:[%s322 + $0x28] sm:$0xff]
        %v3362 = vld [vmem:[%s322 + $0x30] sm:$0xff]
        %v3363 = vld [vmem:[%s322 + $0x38] sm:$0xff]
        %v3364 = vld [vmem:[%s322 + $0x40] sm:$0xff]
        %v3365 = vld [vmem:[%s322 + $0x48] sm:$0xff]
        %v3366 = vld [vmem:[%s322 + $0x50] sm:$0xff]
        %v3367 = vld [vmem:[%s322 + $0x58] sm:$0xff]
        %v3368 = vld [vmem:[%s322 + $0x60] sm:$0xff]
        %v3369 = vld [vmem:[%s322 + $0x68] sm:$0xff]
        %v3370 = vld [vmem:[%s322 + $0x70] sm:$0xff]
        %v3371 = vld [vmem:[%s322 + $0x78] sm:$0xff]
        %v3372 = vld [vmem:[%s322 + $0x80] sm:$0xf]
        %v3373 = vmul.f32 %v3356, %v3339
        %v3374 = vmul.f32 %v3357, %v3340
        %v3375 = vmul.f32 %v3358, %v3341
        %v3376 = vmul.f32 %v3359, %v3342
        %v3377 = vmul.f32 %v3360, %v3343
        %v3378 = vmul.f32 %v3361, %v3344
        %v3379 = vmul.f32 %v3362, %v3345
        %v3380 = vmul.f32 %v3363, %v3346
        %v3381 = vmul.f32 %v3364, %v3347
        %v3382 = vmul.f32 %v3365, %v3348
        %v3383 = vmul.f32 %v3366, %v3349
        %v3384 = vmul.f32 %v3367, %v3350
        %v3385 = vmul.f32 %v3368, %v3351
        %v3386 = vmul.f32 %v3369, %v3352
        %v3387 = vmul.f32 %v3370, %v3353
        %v3388 = vmul.f32 %v3371, %v3354
        %v3389 = vmul.f32 %v3372, %v3355
        %v3390 = vsel %vm3133, %v3373, 0.0
        %3391 = vadd.xlane.f32.xlu0 %v3390
        %v3392 = vpop.xlane.xlu0 %3391
        %v3393 = vsel %vm3133, %v3374, 0.0
        %3394 = vadd.xlane.f32.xlu0 %v3393
        %v3395 = vpop.xlane.xlu0 %3394
        %v3396 = vsel %vm3133, %v3375, 0.0
        %3397 = vadd.xlane.f32.xlu0 %v3396
        %v3398 = vpop.xlane.xlu0 %3397
        %v3399 = vsel %vm3133, %v3376, 0.0
        %3400 = vadd.xlane.f32.xlu0 %v3399
        %v3401 = vpop.xlane.xlu0 %3400
        %v3402 = vsel %vm3133, %v3377, 0.0
        %3403 = vadd.xlane.f32.xlu0 %v3402
        %v3404 = vpop.xlane.xlu0 %3403
        %v3405 = vsel %vm3133, %v3378, 0.0
        %3406 = vadd.xlane.f32.xlu0 %v3405
        %v3407 = vpop.xlane.xlu0 %3406
        %v3408 = vsel %vm3133, %v3379, 0.0
        %3409 = vadd.xlane.f32.xlu0 %v3408
        %v3410 = vpop.xlane.xlu0 %3409
        %v3411 = vsel %vm3133, %v3380, 0.0
        %3412 = vadd.xlane.f32.xlu0 %v3411
        %v3413 = vpop.xlane.xlu0 %3412
        %v3414 = vsel %vm3133, %v3381, 0.0
        %3415 = vadd.xlane.f32.xlu0 %v3414
        %v3416 = vpop.xlane.xlu0 %3415
        %v3417 = vsel %vm3133, %v3382, 0.0
        %3418 = vadd.xlane.f32.xlu0 %v3417
        %v3419 = vpop.xlane.xlu0 %3418
        %v3420 = vsel %vm3133, %v3383, 0.0
        %3421 = vadd.xlane.f32.xlu0 %v3420
        %v3422 = vpop.xlane.xlu0 %3421
        %v3423 = vsel %vm3133, %v3384, 0.0
        %3424 = vadd.xlane.f32.xlu0 %v3423
        %v3425 = vpop.xlane.xlu0 %3424
        %v3426 = vsel %vm3133, %v3385, 0.0
        %3427 = vadd.xlane.f32.xlu0 %v3426
        %v3428 = vpop.xlane.xlu0 %3427
        %v3429 = vsel %vm3133, %v3386, 0.0
        %3430 = vadd.xlane.f32.xlu0 %v3429
        %v3431 = vpop.xlane.xlu0 %3430
        %v3432 = vsel %vm3133, %v3387, 0.0
        %3433 = vadd.xlane.f32.xlu0 %v3432
        %v3434 = vpop.xlane.xlu0 %3433
        %v3435 = vsel %vm3133, %v3388, 0.0
        %3436 = vadd.xlane.f32.xlu0 %v3435
        %v3437 = vpop.xlane.xlu0 %3436
        %v3438 = vsel %vm3182, %v3389, 0.0
        %3439 = vadd.xlane.f32.xlu0 %v3438
        %v3440 = vpop.xlane.xlu0 %3439
        %v3441 = vsub.f32 0.0, %v3392
        %v3442 = vsub.f32 0.0, %v3395
        %v3443 = vsub.f32 0.0, %v3398
        %v3444 = vsub.f32 0.0, %v3401
        %v3445 = vsub.f32 0.0, %v3404
        %v3446 = vsub.f32 0.0, %v3407
        %v3447 = vsub.f32 0.0, %v3410
        %v3448 = vsub.f32 0.0, %v3413
        %v3449 = vsub.f32 0.0, %v3416
        %v3450 = vsub.f32 0.0, %v3419
        %v3451 = vsub.f32 0.0, %v3422
        %v3452 = vsub.f32 0.0, %v3425
        %v3453 = vsub.f32 0.0, %v3428
        %v3454 = vsub.f32 0.0, %v3431
        %v3455 = vsub.f32 0.0, %v3434
        %v3456 = vsub.f32 0.0, %v3437
        %v3457 = vsub.f32 0.0, %v3440
        %vm3458 = vcmask 7168
        %v3459 = vsel %vm3458, %v3441, 0.0
        %v3460 = vsel %vm3458, %v3442, 0.0
        %v3461 = vadd.f32 %v3459, %v3460
        %v3462 = vsel %vm3458, %v3443, 0.0
        %v3463 = vadd.f32 %v3461, %v3462
        %v3464 = vsel %vm3458, %v3444, 0.0
        %v3465 = vadd.f32 %v3463, %v3464
        %v3466 = vsel %vm3458, %v3445, 0.0
        %v3467 = vadd.f32 %v3465, %v3466
        %v3468 = vsel %vm3458, %v3446, 0.0
        %v3469 = vadd.f32 %v3467, %v3468
        %v3470 = vsel %vm3458, %v3447, 0.0
        %v3471 = vadd.f32 %v3469, %v3470
        %v3472 = vsel %vm3458, %v3448, 0.0
        %v3473 = vadd.f32 %v3471, %v3472
        %v3474 = vsel %vm3458, %v3449, 0.0
        %v3475 = vadd.f32 %v3473, %v3474
        %v3476 = vsel %vm3458, %v3450, 0.0
        %v3477 = vadd.f32 %v3475, %v3476
        %v3478 = vsel %vm3458, %v3451, 0.0
        %v3479 = vadd.f32 %v3477, %v3478
        %v3480 = vsel %vm3458, %v3452, 0.0
        %v3481 = vadd.f32 %v3479, %v3480
        %v3482 = vsel %vm3458, %v3453, 0.0
        %v3483 = vadd.f32 %v3481, %v3482
        %v3484 = vsel %vm3458, %v3454, 0.0
        %v3485 = vadd.f32 %v3483, %v3484
        %v3486 = vsel %vm3458, %v3455, 0.0
        %v3487 = vadd.f32 %v3485, %v3486
        %v3488 = vsel %vm3458, %v3456, 0.0
        %v3489 = vadd.f32 %v3487, %v3488
        %vm3490 = vcmask 3072
        %v3491 = vsel %vm3490, %v3457, 0.0
        %v3492 = vadd.f32 %v3489, %v3491
        %3493 = vadd.xlane.f32.xlu0 %v3492
        %v3494 = vpop.xlane.xlu0 %3493
        %v3495 = vrot.slane %v3494, 4
        %v3496 = vadd.f32 %v3494, %v3495
        %v3497 = vrot.slane %v3496, 2
        %v3498 = vadd.f32 %v3496, %v3497
        %v3499 = vrot.slane %v3498, 1
        %v3500 = vadd.f32 %v3498, %v3499
        %s3501 = vtos %v3500
        %v3502 = vld [vmem:[%s327] sm:$0xff]
        %v3503 = vld [vmem:[%s327 + $0x8] sm:$0xff]
        %v3504 = vld [vmem:[%s327 + $0x10] sm:$0xff]
        %v3505 = vld [vmem:[%s327 + $0x18] sm:$0xff]
        %v3506 = vld [vmem:[%s327 + $0x20] sm:$0xff]
        %v3507 = vld [vmem:[%s327 + $0x28] sm:$0xff]
        %v3508 = vld [vmem:[%s327 + $0x30] sm:$0xff]
        %v3509 = vld [vmem:[%s327 + $0x38] sm:$0xff]
        %v3510 = vld [vmem:[%s327 + $0x40] sm:$0xff]
        %v3511 = vld [vmem:[%s327 + $0x48] sm:$0xff]
        %v3512 = vld [vmem:[%s327 + $0x50] sm:$0xff]
        %v3513 = vld [vmem:[%s327 + $0x58] sm:$0xff]
        %v3514 = vld [vmem:[%s327 + $0x60] sm:$0xff]
        %v3515 = vld [vmem:[%s327 + $0x68] sm:$0xff]
        %v3516 = vld [vmem:[%s327 + $0x70] sm:$0xff]
        %v3517 = vld [vmem:[%s327 + $0x78] sm:$0xff]
        %v3518 = vld [vmem:[%s327 + $0x80] sm:$0xf]
        %3536 = vrot.lane.b32.xlu0 %v3502, 8
        %v3537 = vpop.permute.xlu0 %3536
        %3538 = vrot.lane.b32.xlu0 %v3503, 8
        %v3539 = vpop.permute.xlu0 %3538
        %3540 = vrot.lane.b32.xlu0 %v3504, 8
        %v3541 = vpop.permute.xlu0 %3540
        %3542 = vrot.lane.b32.xlu0 %v3505, 8
        %v3543 = vpop.permute.xlu0 %3542
        %3544 = vrot.lane.b32.xlu0 %v3506, 8
        %v3545 = vpop.permute.xlu0 %3544
        %3546 = vrot.lane.b32.xlu0 %v3507, 8
        %v3547 = vpop.permute.xlu0 %3546
        %3548 = vrot.lane.b32.xlu0 %v3508, 8
        %v3549 = vpop.permute.xlu0 %3548
        %3550 = vrot.lane.b32.xlu0 %v3509, 8
        %v3551 = vpop.permute.xlu0 %3550
        %3552 = vrot.lane.b32.xlu0 %v3510, 8
        %v3553 = vpop.permute.xlu0 %3552
        %3554 = vrot.lane.b32.xlu0 %v3511, 8
        %v3555 = vpop.permute.xlu0 %3554
        %3556 = vrot.lane.b32.xlu0 %v3512, 8
        %v3557 = vpop.permute.xlu0 %3556
        %3558 = vrot.lane.b32.xlu0 %v3513, 8
        %v3559 = vpop.permute.xlu0 %3558
        %3560 = vrot.lane.b32.xlu0 %v3514, 8
        %v3561 = vpop.permute.xlu0 %3560
        %3562 = vrot.lane.b32.xlu0 %v3515, 8
        %v3563 = vpop.permute.xlu0 %3562
        %3564 = vrot.lane.b32.xlu0 %v3516, 8
        %v3565 = vpop.permute.xlu0 %3564
        %3566 = vrot.lane.b32.xlu0 %v3517, 8
        %v3567 = vpop.permute.xlu0 %3566
        %3568 = vrot.lane.b32.xlu0 %v3518, 8
        %v3569 = vpop.permute.xlu0 %3568
        %v3587 = vsub.f32 %v3116, %v3537
        %v3588 = vsub.f32 %v3117, %v3539
        %v3589 = vsub.f32 %v3118, %v3541
        %v3590 = vsub.f32 %v3119, %v3543
        %v3591 = vsub.f32 %v3120, %v3545
        %v3592 = vsub.f32 %v3121, %v3547
        %v3593 = vsub.f32 %v3122, %v3549
        %v3594 = vsub.f32 %v3123, %v3551
        %v3595 = vsub.f32 %v3124, %v3553
        %v3596 = vsub.f32 %v3125, %v3555
        %v3597 = vsub.f32 %v3126, %v3557
        %v3598 = vsub.f32 %v3127, %v3559
        %v3599 = vsub.f32 %v3128, %v3561
        %v3600 = vsub.f32 %v3129, %v3563
        %v3601 = vsub.f32 %v3130, %v3565
        %v3602 = vsub.f32 %v3131, %v3567
        %v3603 = vsub.f32 %v3132, %v3569
        %v3604 = vld [vmem:[%s5] sm:$0xff]
        %v3605 = vld [vmem:[%s5 + $0x8] sm:$0xff]
        %v3606 = vld [vmem:[%s5 + $0x10] sm:$0xff]
        %v3607 = vld [vmem:[%s5 + $0x18] sm:$0xff]
        %v3608 = vld [vmem:[%s5 + $0x20] sm:$0xff]
        %v3609 = vld [vmem:[%s5 + $0x28] sm:$0xff]
        %v3610 = vld [vmem:[%s5 + $0x30] sm:$0xff]
        %v3611 = vld [vmem:[%s5 + $0x38] sm:$0xff]
        %v3612 = vld [vmem:[%s5 + $0x40] sm:$0xff]
        %v3613 = vld [vmem:[%s5 + $0x48] sm:$0xff]
        %v3614 = vld [vmem:[%s5 + $0x50] sm:$0xff]
        %v3615 = vld [vmem:[%s5 + $0x58] sm:$0xff]
        %v3616 = vld [vmem:[%s5 + $0x60] sm:$0xff]
        %v3617 = vld [vmem:[%s5 + $0x68] sm:$0xff]
        %v3618 = vld [vmem:[%s5 + $0x70] sm:$0xff]
        %v3619 = vld [vmem:[%s5 + $0x78] sm:$0xff]
        %v3620 = vld [vmem:[%s5 + $0x80] sm:$0xf]
        %3622 = vset.pattern.permute.xlu0 0
        %3623 = vperm.xlu0 %3622, %v3604
        %v3624 = vpop.permute.xlu0 %3623
        %3627 = vset.pattern.permute.xlu0 0
        %3628 = vperm.xlu0 %3627, %v3605
        %v3629 = vpop.permute.xlu0 %3628
        %3632 = vset.pattern.permute.xlu0 0
        %3633 = vperm.xlu0 %3632, %v3606
        %v3634 = vpop.permute.xlu0 %3633
        %3637 = vset.pattern.permute.xlu0 0
        %3638 = vperm.xlu0 %3637, %v3607
        %v3639 = vpop.permute.xlu0 %3638
        %3642 = vset.pattern.permute.xlu0 0
        %3643 = vperm.xlu0 %3642, %v3608
        %v3644 = vpop.permute.xlu0 %3643
        %3647 = vset.pattern.permute.xlu0 0
        %3648 = vperm.xlu0 %3647, %v3609
        %v3649 = vpop.permute.xlu0 %3648
        %3652 = vset.pattern.permute.xlu0 0
        %3653 = vperm.xlu0 %3652, %v3610
        %v3654 = vpop.permute.xlu0 %3653
        %3657 = vset.pattern.permute.xlu0 0
        %3658 = vperm.xlu0 %3657, %v3611
        %v3659 = vpop.permute.xlu0 %3658
        %3662 = vset.pattern.permute.xlu0 0
        %3663 = vperm.xlu0 %3662, %v3612
        %v3664 = vpop.permute.xlu0 %3663
        %3667 = vset.pattern.permute.xlu0 0
        %3668 = vperm.xlu0 %3667, %v3613
        %v3669 = vpop.permute.xlu0 %3668
        %3672 = vset.pattern.permute.xlu0 0
        %3673 = vperm.xlu0 %3672, %v3614
        %v3674 = vpop.permute.xlu0 %3673
        %3677 = vset.pattern.permute.xlu0 0
        %3678 = vperm.xlu0 %3677, %v3615
        %v3679 = vpop.permute.xlu0 %3678
        %3682 = vset.pattern.permute.xlu0 0
        %3683 = vperm.xlu0 %3682, %v3616
        %v3684 = vpop.permute.xlu0 %3683
        %3687 = vset.pattern.permute.xlu0 0
        %3688 = vperm.xlu0 %3687, %v3617
        %v3689 = vpop.permute.xlu0 %3688
        %3692 = vset.pattern.permute.xlu0 0
        %3693 = vperm.xlu0 %3692, %v3618
        %v3694 = vpop.permute.xlu0 %3693
        %3697 = vset.pattern.permute.xlu0 0
        %3698 = vperm.xlu0 %3697, %v3619
        %v3699 = vpop.permute.xlu0 %3698
        %3702 = vset.pattern.permute.xlu0 0
        %3703 = vperm.xlu0 %3702, %v3620
        %v3704 = vpop.permute.xlu0 %3703
        %v3706 = vmul.f32 %v3587, %v3624
        %v3707 = vmul.f32 %v3588, %v3629
        %v3708 = vmul.f32 %v3589, %v3634
        %v3709 = vmul.f32 %v3590, %v3639
        %v3710 = vmul.f32 %v3591, %v3644
        %v3711 = vmul.f32 %v3592, %v3649
        %v3712 = vmul.f32 %v3593, %v3654
        %v3713 = vmul.f32 %v3594, %v3659
        %v3714 = vmul.f32 %v3595, %v3664
        %v3715 = vmul.f32 %v3596, %v3669
        %v3716 = vmul.f32 %v3597, %v3674
        %v3717 = vmul.f32 %v3598, %v3679
        %v3718 = vmul.f32 %v3599, %v3684
        %v3719 = vmul.f32 %v3600, %v3689
        %v3720 = vmul.f32 %v3601, %v3694
        %v3721 = vmul.f32 %v3602, %v3699
        %v3722 = vmul.f32 %v3603, %v3704
        %v3723 = vmul.f32 %v3706, %v3706
        %v3724 = vmul.f32 %v3707, %v3707
        %v3725 = vmul.f32 %v3708, %v3708
        %v3726 = vmul.f32 %v3709, %v3709
        %v3727 = vmul.f32 %v3710, %v3710
        %v3728 = vmul.f32 %v3711, %v3711
        %v3729 = vmul.f32 %v3712, %v3712
        %v3730 = vmul.f32 %v3713, %v3713
        %v3731 = vmul.f32 %v3714, %v3714
        %v3732 = vmul.f32 %v3715, %v3715
        %v3733 = vmul.f32 %v3716, %v3716
        %v3734 = vmul.f32 %v3717, %v3717
        %v3735 = vmul.f32 %v3718, %v3718
        %v3736 = vmul.f32 %v3719, %v3719
        %v3737 = vmul.f32 %v3720, %v3720
        %v3738 = vmul.f32 %v3721, %v3721
        %v3739 = vmul.f32 %v3722, %v3722
        %3757 = vrot.lane.b32.xlu0 %v3723, 120
        %v3758 = vpop.permute.xlu0 %3757
        %3759 = vrot.lane.b32.xlu0 %v3724, 120
        %v3760 = vpop.permute.xlu0 %3759
        %3761 = vrot.lane.b32.xlu0 %v3725, 120
        %v3762 = vpop.permute.xlu0 %3761
        %3763 = vrot.lane.b32.xlu0 %v3726, 120
        %v3764 = vpop.permute.xlu0 %3763
        %3765 = vrot.lane.b32.xlu0 %v3727, 120
        %v3766 = vpop.permute.xlu0 %3765
        %3767 = vrot.lane.b32.xlu0 %v3728, 120
        %v3768 = vpop.permute.xlu0 %3767
        %3769 = vrot.lane.b32.xlu0 %v3729, 120
        %v3770 = vpop.permute.xlu0 %3769
        %3771 = vrot.lane.b32.xlu0 %v3730, 120
        %v3772 = vpop.permute.xlu0 %3771
        %3773 = vrot.lane.b32.xlu0 %v3731, 120
        %v3774 = vpop.permute.xlu0 %3773
        %3775 = vrot.lane.b32.xlu0 %v3732, 120
        %v3776 = vpop.permute.xlu0 %3775
        %3777 = vrot.lane.b32.xlu0 %v3733, 120
        %v3778 = vpop.permute.xlu0 %3777
        %3779 = vrot.lane.b32.xlu0 %v3734, 120
        %v3780 = vpop.permute.xlu0 %3779
        %3781 = vrot.lane.b32.xlu0 %v3735, 120
        %v3782 = vpop.permute.xlu0 %3781
        %3783 = vrot.lane.b32.xlu0 %v3736, 120
        %v3784 = vpop.permute.xlu0 %3783
        %3785 = vrot.lane.b32.xlu0 %v3737, 120
        %v3786 = vpop.permute.xlu0 %3785
        %3787 = vrot.lane.b32.xlu0 %v3738, 120
        %v3788 = vpop.permute.xlu0 %3787
        %3789 = vrot.lane.b32.xlu0 %v3739, 120
        %v3790 = vpop.permute.xlu0 %3789
        %vm3808 = vcmask 31744
        %v3809 = vsel %vm3808, %v3758, 0.0
        %v3810 = vsel %vm3808, %v3760, 0.0
        %v3811 = vadd.f32 %v3809, %v3810
        %v3812 = vsel %vm3808, %v3762, 0.0
        %v3813 = vadd.f32 %v3811, %v3812
        %v3814 = vsel %vm3808, %v3764, 0.0
        %v3815 = vadd.f32 %v3813, %v3814
        %v3816 = vsel %vm3808, %v3766, 0.0
        %v3817 = vadd.f32 %v3815, %v3816
        %v3818 = vsel %vm3808, %v3768, 0.0
        %v3819 = vadd.f32 %v3817, %v3818
        %v3820 = vsel %vm3808, %v3770, 0.0
        %v3821 = vadd.f32 %v3819, %v3820
        %v3822 = vsel %vm3808, %v3772, 0.0
        %v3823 = vadd.f32 %v3821, %v3822
        %v3824 = vsel %vm3808, %v3774, 0.0
        %v3825 = vadd.f32 %v3823, %v3824
        %v3826 = vsel %vm3808, %v3776, 0.0
        %v3827 = vadd.f32 %v3825, %v3826
        %v3828 = vsel %vm3808, %v3778, 0.0
        %v3829 = vadd.f32 %v3827, %v3828
        %v3830 = vsel %vm3808, %v3780, 0.0
        %v3831 = vadd.f32 %v3829, %v3830
        %v3832 = vsel %vm3808, %v3782, 0.0
        %v3833 = vadd.f32 %v3831, %v3832
        %v3834 = vsel %vm3808, %v3784, 0.0
        %v3835 = vadd.f32 %v3833, %v3834
        %v3836 = vsel %vm3808, %v3786, 0.0
        %v3837 = vadd.f32 %v3835, %v3836
        %v3838 = vsel %vm3808, %v3788, 0.0
        %v3839 = vadd.f32 %v3837, %v3838
        %vm3840 = vcmask 27648
        %v3841 = vsel %vm3840, %v3790, 0.0
        %v3842 = vadd.f32 %v3839, %v3841
        %3843 = vadd.xlane.f32.xlu0 %v3842
        %v3844 = vpop.xlane.xlu0 %3843
        %v3845 = vrot.slane %v3844, 4
        %v3846 = vadd.f32 %v3844, %v3845
        %v3847 = vrot.slane %v3846, 2
        %v3848 = vadd.f32 %v3846, %v3847
        %v3849 = vrot.slane %v3848, 1
        %v3850 = vadd.f32 %v3848, %v3849
        %s3851 = vtos %v3850
        %v3852 = vstv %s3501
        %3853 = vst [vmem:[%s305] sm:$0xff] %v3852
        %v3854 = vstv %s3851
        %3855 = vst [vmem:[%s312] sm:$0xff] %v3854
        %s3856 = sand.u32 %s174, 1
        %s3857 = scalar_lea.sflag [#allocation3], %s3856
        %s3858 = sand.u32 %s174, 1
        %s3859 = smul.addr %s3858, 8
        %s3860 = scalar_lea.vmem [#allocation2], %s3859
        %s3861 = sand.u32 %s200, 1
        %s3862 = scalar_lea.sflag [#allocation5], %s3861
        %s3863 = sand.u32 %s200, 1
        %s3864 = smul.addr %s3863, 8
        %s3865 = scalar_lea.vmem [#allocation4], %s3864
        // Predicated region
        $region45: #{tpu_custom_call.1} parent=43 // pred_check
          %p3866 = pneg %p184
        $region46: #{tpu_custom_call.1} parent=43 // pred_check_branch
          %3868 = sbr.rel (%p3866) target = $region48
        $region47: #{tpu_custom_call.1} parent=43 // pred_region
          %s3870 = ssub.s32 128, 128
          %3871 = vsyncadd %s3857, %s3870
          %s3872 = smul.addr %s25, 128
          %s3873 = scalar_lea.hbm %s6, %s3872
          %s3875 = sshll.u32 %s3860, 4
          %s3876 = int_to_ptr.vmem [resolvable:$true] %s3875
          %3878 = dma.vmem_to_hbm [thread:$0]  %s3876, 128, %s3873, %s3857
        $region48: #{tpu_custom_call.1} parent=43 // pred_fallthru
          _
        // Predicated region
        $region49: #{tpu_custom_call.1} parent=43 // pred_check
          %p3879 = pneg %p210
        $region50: #{tpu_custom_call.1} parent=43 // pred_check_branch
          %3881 = sbr.rel (%p3879) target = $region52
        $region51: #{tpu_custom_call.1} parent=43 // pred_region
          %s3883 = ssub.s32 128, 128
          %3884 = vsyncadd %s3862, %s3883
          %s3885 = smul.addr %s25, 128
          %s3886 = scalar_lea.hbm %s7, %s3885
          %s3888 = sshll.u32 %s3865, 4
          %s3889 = int_to_ptr.vmem [resolvable:$true] %s3888
          %3891 = dma.vmem_to_hbm [thread:$0]  %s3889, 128, %s3886, %s3862
        $region52: #{tpu_custom_call.1} parent=43 // pred_fallthru
          _
      $region44: #{tpu_custom_call.1} parent=5 // pred_fallthru
        _
      %p3892 = scmp.le.s32.totalorder 2, %s20
      // Predicated region
      $region53: #{tpu_custom_call.1} parent=5 // pred_check
        %p3893 = pneg %p3892
      $region54: #{tpu_custom_call.1} parent=5 // pred_check_branch
        %3895 = sbr.rel (%p3893) target = $region56
      $region55: #{tpu_custom_call.1} parent=5 // pred_region
        %s3896 = ssub.s32 %s20, 2
        // Predicated region
        $region57: #{tpu_custom_call.1} parent=55 // pred_check
          %p3897 = pneg %p190
        $region58: #{tpu_custom_call.1} parent=55 // pred_check_branch
          %3899 = sbr.rel (%p3897) target = $region60
        $region59: #{tpu_custom_call.1} parent=55 // pred_region
          %s3900 = sand.u32 %s175, 1
          %s3901 = scalar_lea.sflag [#allocation3], %s3900
          %s3902 = sand.u32 %s175, 1
          %s3903 = smul.addr %s3902, 8
          %s3904 = scalar_lea.vmem [#allocation2], %s3903
          %3905 = dma.done %s3901, 128
        $region60: #{tpu_custom_call.1} parent=55 // pred_fallthru
          _
        // Predicated region
        $region61: #{tpu_custom_call.1} parent=55 // pred_check
          %p3906 = pneg %p216
        $region62: #{tpu_custom_call.1} parent=55 // pred_check_branch
          %3908 = sbr.rel (%p3906) target = $region64
        $region63: #{tpu_custom_call.1} parent=55 // pred_region
          %s3909 = sand.u32 %s201, 1
          %s3910 = scalar_lea.sflag [#allocation5], %s3909
          %s3911 = sand.u32 %s201, 1
          %s3912 = smul.addr %s3911, 8
          %s3913 = scalar_lea.vmem [#allocation4], %s3912
          %3914 = dma.done %s3910, 128
        $region64: #{tpu_custom_call.1} parent=55 // pred_fallthru
          _
      $region56: #{tpu_custom_call.1} parent=5 // pred_fallthru
        _
    $region6: #{tpu_custom_call.1} parent=1 // loop_footer
      %s24 = sadd.s32 1, %s20
    $region7: #{tpu_custom_call.1} parent=1 // loop_footer_branch
      %19 = sbr.rel target = $region3
    $region8: #{tpu_custom_call.1} parent=1 // loop_exit
      _
    %3915 = vsyncpa [#allocation3], 1
    %s3916 = scalar_lea.sflag [#allocation3], 1
    %3917 = vsyncpa %s3916, 1
    %3918 = vsyncpa [#allocation5], 1
    %s3919 = scalar_lea.sflag [#allocation5], 1
    %3920 = vsyncpa %s3919, 1

</llo_original>
